<compile_context>
chip_gen: v7x
topology: tpu7x:2x2x1
jax: 0.10.0
libtpu: 0.0.40
codegen_flags: <defaults>
</compile_context>

<pallas_src>
import functools

import jax
import jax.numpy as jnp
from jax import lax
from jax.experimental import pallas as pl
from jax.experimental.pallas import tpu as pltpu

# ---- model hyperparameters (from the PyTorch source) -------------------------
N_EMBED = 32
BLOCK_SIZE = 8
N_LAYER = 4
N_HEADS = 4
HEAD_SIZE = N_EMBED // N_HEADS
FF_HIDDEN = 4 * N_EMBED
LN_EPS = 1e-5
LANE = 128


# ---- in-kernel helpers --------------------------------------------------------
def _layernorm(x, gamma, beta):
    # x: (T, E), gamma/beta: (1, E)
    mu = jnp.mean(x, axis=-1, keepdims=True)
    var = jnp.mean((x - mu) ** 2, axis=-1, keepdims=True)
    return (x - mu) * lax.rsqrt(var + LN_EPS) * gamma + beta


# ---- fused forward kernel (one sequence per grid step) ------------------------
def gpt_kernel(ids_ref, tok_ref, pos_ref, cmask_ref, hmask_ref,
               ln1g_ref, ln1b_ref, wqkv_ref, ln2g_ref, ln2b_ref,
               w1_ref, b1_ref, w2_ref, b2_ref,
               lnfg_ref, lnfb_ref, hwt_ref, hb_ref,
               o_ref):
    T = pos_ref.shape[0]
    V = tok_ref.shape[0]
    E = N_EMBED

    # ---- in-kernel token-embedding gather (one-hot MXU matmul) + pos add ----
    ids = ids_ref[0]                                            # (T, 1) int32
    one_hot = (lax.broadcasted_iota(jnp.int32, (T, V), 1) == ids).astype(jnp.float32)
    x = jnp.dot(one_hot, tok_ref[...],
                preferred_element_type=jnp.float32) + pos_ref[...]     # (T, E)

    cmask = cmask_ref[...]                                      # (T, T) additive causal mask

    # ---- N_LAYER transformer blocks, fully unrolled (weights VMEM-resident) ----
    for l in range(N_LAYER):
        # -- multi-head causal self-attention over layer_norm1(x) --
        h = _layernorm(x, ln1g_ref[l], ln1b_ref[l])
        # packed q/k/v projection: one wide MXU push (scale folded into Wq)
        qkv = jnp.dot(h, wqkv_ref[l], preferred_element_type=jnp.float32)  # (T, 3E)
        q_all = qkv[:, 0:E]
        k_all = qkv[:, E:2 * E]
        v_all = qkv[:, 2 * E:3 * E]

        attn = jnp.zeros((T, E), jnp.float32)
        for hd in range(N_HEADS):
            m = hmask_ref[hd]                                   # (1, E) 0/1 head-column mask
            # masked full-width contraction == q_h @ k_h^T (no lane slicing)
            s = lax.dot_general(q_all * m, k_all,
                                dimension_numbers=(((1,), (1,)), ((), ())),
                                preferred_element_type=jnp.float32)        # (T, T)
            s = s + cmask
            s = s - jnp.max(s, axis=-1, keepdims=True)
            p = jnp.exp(s)
            p = p * pl.reciprocal(jnp.sum(p, axis=-1, keepdims=True), approx=True)
            # masked value matmul lands head h's output in its own columns,
            # so summing heads reproduces the concat with no lane relayout.
            attn = attn + jnp.dot(p, v_all * m, preferred_element_type=jnp.float32)
        x = x + attn

        # -- feed-forward over layer_norm2(x) (dropout = identity, eval mode) --
        y = _layernorm(x, ln2g_ref[l], ln2b_ref[l])
        hid = jnp.maximum(
            jnp.dot(y, w1_ref[l], preferred_element_type=jnp.float32) + b1_ref[l], 0.0)
        x = x + jnp.dot(hid, w2_ref[l], preferred_element_type=jnp.float32) + b2_ref[l]

    # ---- final layernorm + lm_head (lane-dense: vocab padded to 128) ----
    yf = _layernorm(x, lnfg_ref[...], lnfb_ref[...])
    o_ref[0] = jnp.dot(yf, hwt_ref[...], preferred_element_type=jnp.float32) + hb_ref[...]


# ---- wrapper -------------------------------------------------------------------
@functools.partial(jax.jit, static_argnames=("vocab",))
def small_gpt_forward(kparams, inputs, vocab):
    B, T = inputs.shape
    v_pad = kparams["hwt"].shape[1]
    ids = inputs.reshape(B, T, 1).astype(jnp.int32)

    def full(a):
        return pl.BlockSpec(a.shape, lambda b, _nd=a.ndim: (0,) * _nd)

    logits_padded = pl.pallas_call(
        gpt_kernel,
        out_shape=jax.ShapeDtypeStruct((B, T, v_pad), jnp.float32),
        grid=(B,),
        in_specs=[
            pl.BlockSpec((1, T, 1), lambda b: (b, 0, 0)),        # token ids
            full(kparams["tok"]), full(kparams["pos"]),
            full(kparams["cmask"]), full(kparams["hmask"]),
            full(kparams["ln1g"]), full(kparams["ln1b"]), full(kparams["wqkv"]),
            full(kparams["ln2g"]), full(kparams["ln2b"]),
            full(kparams["w1"]), full(kparams["b1"]),
            full(kparams["w2"]), full(kparams["b2"]),
            full(kparams["lnfg"]), full(kparams["lnfb"]),
            full(kparams["hwt"]), full(kparams["hb"]),
        ],
        out_specs=pl.BlockSpec((1, T, v_pad), lambda b: (b, 0, 0)),
        compiler_params=pltpu.CompilerParams(
            dimension_semantics=("parallel",)),
    )(ids, kparams["tok"], kparams["pos"], kparams["cmask"], kparams["hmask"],
      kparams["ln1g"], kparams["ln1b"], kparams["wqkv"],
      kparams["ln2g"], kparams["ln2b"],
      kparams["w1"], kparams["b1"], kparams["w2"], kparams["b2"],
      kparams["lnfg"], kparams["lnfb"], kparams["hwt"], kparams["hb"])
    return logits_padded[..., :vocab]


# ---- parameter init (deterministic, synthetic) ---------------------------------
def init_params(key, vocab):
    def nrm(k, shape, scale=0.02):
        return scale * jax.random.normal(k, shape, dtype=jnp.float32)

    keys = jax.random.split(key, 3 + N_LAYER)
    params = {
        "tok": nrm(keys[0], (vocab, N_EMBED)),
        "pos": nrm(keys[1], (BLOCK_SIZE, N_EMBED)),
        "blocks": [],
        "lnfg": jnp.ones((1, N_EMBED), jnp.float32),
        "lnfb": jnp.zeros((1, N_EMBED), jnp.float32),
        "headwt": nrm(keys[2], (N_EMBED, vocab)),
        "headb": jnp.zeros((1, vocab), jnp.float32),
    }
    for l in range(N_LAYER):
        bk = jax.random.split(keys[3 + l], 5)
        params["blocks"].append({
            "ln1g": jnp.ones((1, N_EMBED), jnp.float32),
            "ln1b": jnp.zeros((1, N_EMBED), jnp.float32),
            # heads packed column-wise: head h occupies cols [h*hs, (h+1)*hs)
            "wq": nrm(bk[0], (N_EMBED, N_EMBED)),
            "wk": nrm(bk[1], (N_EMBED, N_EMBED)),
            "wv": nrm(bk[2], (N_EMBED, N_EMBED)),
            "ln2g": jnp.ones((1, N_EMBED), jnp.float32),
            "ln2b": jnp.zeros((1, N_EMBED), jnp.float32),
            "w1t": nrm(bk[3], (N_EMBED, FF_HIDDEN)),
            "b1": jnp.zeros((1, FF_HIDDEN), jnp.float32),
            "w2t": nrm(bk[4], (FF_HIDDEN, N_EMBED)),
            "b2": jnp.zeros((1, N_EMBED), jnp.float32),
        })
    return params


def prepare_kernel_params(params, seq_len):
    """One-time packing/padding of raw params into the fused-kernel layout."""
    vocab = params["tok"].shape[0]
    v_pad = max(LANE, ((vocab + LANE - 1) // LANE) * LANE)
    scale = N_EMBED ** (-0.5)  # PyTorch code scales by embedding_dim**-0.5

    blocks = params["blocks"]
    stack = lambda name: jnp.stack([b[name] for b in blocks], axis=0)

    # packed QKV, column order [q_h0..q_h3 | k_h0..k_h3 | v_h0..v_h3]; scale folded into Wq
    wqkv = jnp.stack(
        [jnp.concatenate([b["wq"] * scale, b["wk"], b["wv"]], axis=1) for b in blocks],
        axis=0)                                                   # (L, E, 3E)

    # additive causal mask (0 on/below diagonal, big-negative above)
    cmask = jnp.where(jnp.tril(jnp.ones((seq_len, seq_len), dtype=bool)),
                      0.0, -1e30).astype(jnp.float32)             # (T, T)

    # 0/1 per-head column selector masks
    hmask = (jnp.arange(N_EMBED)[None, None, :] // HEAD_SIZE
             == jnp.arange(N_HEADS)[:, None, None]).astype(jnp.float32)   # (H, 1, E)

    # lane-dense (128-padded) lm_head
    hwt = jnp.zeros((N_EMBED, v_pad), jnp.float32).at[:, :vocab].set(params["headwt"])
    hb = jnp.zeros((1, v_pad), jnp.float32).at[:, :vocab].set(params["headb"])

    return {
        "tok": params["tok"],
        "pos": params["pos"][:seq_len],
        "cmask": cmask,
        "hmask": hmask,
        "ln1g": stack("ln1g"), "ln1b": stack("ln1b"),
        "wqkv": wqkv,
        "ln2g": stack("ln2g"), "ln2b": stack("ln2b"),
        "w1": stack("w1t"), "b1": stack("b1"),
        "w2": stack("w2t"), "b2": stack("b2"),
        "lnfg": params["lnfg"], "lnfb": params["lnfb"],
        "hwt": hwt, "hb": hb,
    }


# ---- pure-JAX reference for correctness check -----------------------------------
def ref_forward(params, inputs):
    def ln(x, g, b):
        mu = jnp.mean(x, -1, keepdims=True)
        var = jnp.mean((x - mu) ** 2, -1, keepdims=True)
        return (x - mu) / jnp.sqrt(var + LN_EPS) * g + b

    B, T = inputs.shape
    x = params["tok"][inputs] + params["pos"][:T][None]
    tril = jnp.tril(jnp.ones((T, T), bool))
    for p in params["blocks"]:
        h = ln(x, p["ln1g"][0], p["ln1b"][0])
        q, k, v = h @ p["wq"], h @ p["wk"], h @ p["wv"]
        outs = []
        for hd in range(N_HEADS):
            sl = slice(hd * HEAD_SIZE, (hd + 1) * HEAD_SIZE)
            s = jnp.einsum("btd,bsd->bts", q[..., sl], k[..., sl]) * (N_EMBED ** -0.5)
            s = jnp.where(tril, s, -jnp.inf)
            w = jax.nn.softmax(s, axis=-1)
            outs.append(jnp.einsum("bts,bsd->btd", w, v[..., sl]))
        x = x + jnp.concatenate(outs, -1)
        y = ln(x, p["ln2g"][0], p["ln2b"][0])
        ff = jax.nn.relu(y @ p["w1t"] + p["b1"][0]) @ p["w2t"] + p["b2"][0]
        x = x + ff
    y = ln(x, params["lnfg"][0], params["lnfb"][0])
    return y @ params["headwt"] + params["headb"][0]


if __name__ == "__main__":
    VOCAB = 64
    BATCH = 2
    SEQ = BLOCK_SIZE  # 8

    key = jax.random.PRNGKey(0)
    pkey, ikey = jax.random.split(key)
    params = init_params(pkey, VOCAB)
    kparams = prepare_kernel_params(params, SEQ)
    inputs = jax.random.randint(ikey, (BATCH, SEQ), 0, VOCAB, dtype=jnp.int32)

    logits = small_gpt_forward(kparams, inputs, vocab=VOCAB)
    logits = jax.block_until_ready(logits)

    ref = ref_forward(params, inputs)
    assert logits.shape == (BATCH, SEQ, VOCAB)
    # tolerance is slightly looser than exact math because the softmax
    # denominator uses the EUP approximate reciprocal (pl.reciprocal(approx=True))
    assert jnp.allclose(logits, ref, atol=2e-3, rtol=2e-3), "mismatch vs reference"

    print("KERNEL_OK")
</pallas_src>

<mosaic_0001>
module attributes {stable_mosaic.version = 11 : i64} {
  func.func @gpt_kernel(%arg0: i32, %arg1: memref<1x8x1xi32, #tpu.memory_space<vmem>>, %arg2: memref<64x32xf32, #tpu.memory_space<vmem>>, %arg3: memref<8x32xf32, #tpu.memory_space<vmem>>, %arg4: memref<8x8xf32, #tpu.memory_space<vmem>>, %arg5: memref<4x1x32xf32, #tpu.memory_space<vmem>>, %arg6: memref<4x1x32xf32, #tpu.memory_space<vmem>>, %arg7: memref<4x1x32xf32, #tpu.memory_space<vmem>>, %arg8: memref<4x32x96xf32, #tpu.memory_space<vmem>>, %arg9: memref<4x1x32xf32, #tpu.memory_space<vmem>>, %arg10: memref<4x1x32xf32, #tpu.memory_space<vmem>>, %arg11: memref<4x32x128xf32, #tpu.memory_space<vmem>>, %arg12: memref<4x1x128xf32, #tpu.memory_space<vmem>>, %arg13: memref<4x128x32xf32, #tpu.memory_space<vmem>>, %arg14: memref<4x1x32xf32, #tpu.memory_space<vmem>>, %arg15: memref<1x32xf32, #tpu.memory_space<vmem>>, %arg16: memref<1x32xf32, #tpu.memory_space<vmem>>, %arg17: memref<32x128xf32, #tpu.memory_space<vmem>>, %arg18: memref<1x128xf32, #tpu.memory_space<vmem>>, %arg19: memref<1x8x128xf32, #tpu.memory_space<vmem>>) attributes {dimension_semantics = [#tpu.dimension_semantics<parallel>], iteration_bounds = array<i64: 2>, scalar_prefetch = 0 : i64, scratch_operands = 0 : i64, tpu.core_type = #tpu.core_type<tc>, window_params = [{transform_indices = @transform_0, window_bounds = array<i64: 1, 8, 1>}, {pipeline_mode = #tpu.pipeline_mode<synchronous>, transform_indices = @transform_1, window_bounds = array<i64: 64, 32>}, {pipeline_mode = #tpu.pipeline_mode<synchronous>, transform_indices = @transform_2, window_bounds = array<i64: 8, 32>}, {pipeline_mode = #tpu.pipeline_mode<synchronous>, transform_indices = @transform_3, window_bounds = array<i64: 8, 8>}, {pipeline_mode = #tpu.pipeline_mode<synchronous>, transform_indices = @transform_4, window_bounds = array<i64: 4, 1, 32>}, {pipeline_mode = #tpu.pipeline_mode<synchronous>, transform_indices = @transform_5, window_bounds = array<i64: 4, 1, 32>}, {pipeline_mode = #tpu.pipeline_mode<synchronous>, transform_indices = @transform_6, window_bounds = array<i64: 4, 1, 32>}, {pipeline_mode = #tpu.pipeline_mode<synchronous>, transform_indices = @transform_7, window_bounds = array<i64: 4, 32, 96>}, {pipeline_mode = #tpu.pipeline_mode<synchronous>, transform_indices = @transform_8, window_bounds = array<i64: 4, 1, 32>}, {pipeline_mode = #tpu.pipeline_mode<synchronous>, transform_indices = @transform_9, window_bounds = array<i64: 4, 1, 32>}, {pipeline_mode = #tpu.pipeline_mode<synchronous>, transform_indices = @transform_10, window_bounds = array<i64: 4, 32, 128>}, {pipeline_mode = #tpu.pipeline_mode<synchronous>, transform_indices = @transform_11, window_bounds = array<i64: 4, 1, 128>}, {pipeline_mode = #tpu.pipeline_mode<synchronous>, transform_indices = @transform_12, window_bounds = array<i64: 4, 128, 32>}, {pipeline_mode = #tpu.pipeline_mode<synchronous>, transform_indices = @transform_13, window_bounds = array<i64: 4, 1, 32>}, {pipeline_mode = #tpu.pipeline_mode<synchronous>, transform_indices = @transform_14, window_bounds = array<i64: 1, 32>}, {pipeline_mode = #tpu.pipeline_mode<synchronous>, transform_indices = @transform_15, window_bounds = array<i64: 1, 32>}, {pipeline_mode = #tpu.pipeline_mode<synchronous>, transform_indices = @transform_16, window_bounds = array<i64: 32, 128>}, {pipeline_mode = #tpu.pipeline_mode<synchronous>, transform_indices = @transform_17, window_bounds = array<i64: 1, 128>}, {transform_indices = @transform_18, window_bounds = array<i64: 1, 8, 128>}]} {
    %c0 = arith.constant 0 : index
    %c0_0 = arith.constant 0 : index
    %c0_1 = arith.constant 0 : index
    %0 = vector.load %arg1[%c0, %c0_0, %c0_1] : memref<1x8x1xi32, #tpu.memory_space<vmem>>, vector<1x8x1xi32>
    %1 = vector.shape_cast %0 : vector<1x8x1xi32> to vector<8x1xi32>
    %2 = tpu.iota {dimensions = array<i32: 1>} : vector<8x64xi32>
    %3 = vector.broadcast %1 : vector<8x1xi32> to vector<8x64xi32>
    %4 = arith.cmpi eq, %2, %3 : vector<8x64xi32>
    %5 = arith.extui %4 : vector<8x64xi1> to vector<8x64xi32>
    %6 = arith.sitofp %5 : vector<8x64xi32> to vector<8x64xf32>
    %c0_2 = arith.constant 0 : index
    %c0_3 = arith.constant 0 : index
    %7 = vector.load %arg2[%c0_2, %c0_3] : memref<64x32xf32, #tpu.memory_space<vmem>>, vector<64x32xf32>
    %cst = arith.constant dense<0.000000e+00> : vector<8x32xf32>
    %8 = tpu.matmul %6, %7, %cst {dimension_numbers = #tpu.dot_dimension_numbers<[1], [0], [0], [1], [0, 0, 1, 1], [], []>} : vector<8x64xf32>, vector<64x32xf32>, vector<8x32xf32> -> vector<8x32xf32>
    %c0_4 = arith.constant 0 : index
    %c0_5 = arith.constant 0 : index
    %9 = vector.load %arg3[%c0_4, %c0_5] : memref<8x32xf32, #tpu.memory_space<vmem>>, vector<8x32xf32>
    %10 = arith.addf %8, %9 : vector<8x32xf32>
    %c0_6 = arith.constant 0 : index
    %c0_7 = arith.constant 0 : index
    %11 = vector.load %arg4[%c0_6, %c0_7] : memref<8x8xf32, #tpu.memory_space<vmem>>, vector<8x8xf32>
    %c0_8 = arith.constant 0 : index
    %c0_9 = arith.constant 0 : index
    %c0_10 = arith.constant 0 : index
    %12 = vector.load %arg6[%c0_8, %c0_9, %c0_10] : memref<4x1x32xf32, #tpu.memory_space<vmem>>, vector<1x1x32xf32>
    %13 = vector.shape_cast %12 : vector<1x1x32xf32> to vector<1x32xf32>
    %c0_11 = arith.constant 0 : index
    %c0_12 = arith.constant 0 : index
    %c0_13 = arith.constant 0 : index
    %14 = vector.load %arg7[%c0_11, %c0_12, %c0_13] : memref<4x1x32xf32, #tpu.memory_space<vmem>>, vector<1x1x32xf32>
    %15 = vector.shape_cast %14 : vector<1x1x32xf32> to vector<1x32xf32>
    %cst_14 = arith.constant dense<0.000000e+00> : vector<8xf32>
    %16 = vector.multi_reduction <add>, %10, %cst_14 [1] : vector<8x32xf32> to vector<8xf32>
    %17 = vector.shape_cast %16 : vector<8xf32> to vector<8x1xf32>
    %cst_15 = arith.constant 3.200000e+01 : f32
    %18 = vector.broadcast %cst_15 : f32 to vector<8x1xf32>
    %19 = arith.divf %17, %18 : vector<8x1xf32>
    %20 = vector.broadcast %19 : vector<8x1xf32> to vector<8x32xf32>
    %21 = arith.subf %10, %20 : vector<8x32xf32>
    %22 = arith.mulf %21, %21 : vector<8x32xf32>
    %cst_16 = arith.constant dense<0.000000e+00> : vector<8xf32>
    %23 = vector.multi_reduction <add>, %22, %cst_16 [1] : vector<8x32xf32> to vector<8xf32>
    %24 = vector.shape_cast %23 : vector<8xf32> to vector<8x1xf32>
    %cst_17 = arith.constant 3.200000e+01 : f32
    %25 = vector.broadcast %cst_17 : f32 to vector<8x1xf32>
    %26 = arith.divf %24, %25 : vector<8x1xf32>
    %27 = vector.broadcast %19 : vector<8x1xf32> to vector<8x32xf32>
    %28 = arith.subf %10, %27 : vector<8x32xf32>
    %cst_18 = arith.constant 9.99999974E-6 : f32
    %29 = vector.broadcast %cst_18 : f32 to vector<8x1xf32>
    %30 = arith.addf %26, %29 : vector<8x1xf32>
    %31 = math.rsqrt %30 : vector<8x1xf32>
    %32 = vector.broadcast %31 : vector<8x1xf32> to vector<8x32xf32>
    %33 = arith.mulf %28, %32 : vector<8x32xf32>
    %34 = vector.broadcast %13 : vector<1x32xf32> to vector<8x32xf32>
    %35 = arith.mulf %33, %34 : vector<8x32xf32>
    %36 = vector.broadcast %15 : vector<1x32xf32> to vector<8x32xf32>
    %37 = arith.addf %35, %36 : vector<8x32xf32>
    %c0_19 = arith.constant 0 : index
    %c0_20 = arith.constant 0 : index
    %c0_21 = arith.constant 0 : index
    %38 = vector.load %arg8[%c0_19, %c0_20, %c0_21] : memref<4x32x96xf32, #tpu.memory_space<vmem>>, vector<1x32x96xf32>
    %39 = vector.shape_cast %38 : vector<1x32x96xf32> to vector<32x96xf32>
    %cst_22 = arith.constant dense<0.000000e+00> : vector<8x96xf32>
    %40 = tpu.matmul %37, %39, %cst_22 {dimension_numbers = #tpu.dot_dimension_numbers<[1], [0], [0], [1], [0, 0, 1, 1], [], []>} : vector<8x32xf32>, vector<32x96xf32>, vector<8x96xf32> -> vector<8x96xf32>
    %41 = vector.extract_strided_slice %40 {offsets = [0, 0], sizes = [8, 32], strides = [1, 1]} : vector<8x96xf32> to vector<8x32xf32>
    %42 = vector.extract_strided_slice %40 {offsets = [0, 32], sizes = [8, 32], strides = [1, 1]} : vector<8x96xf32> to vector<8x32xf32>
    %43 = vector.extract_strided_slice %40 {offsets = [0, 64], sizes = [8, 32], strides = [1, 1]} : vector<8x96xf32> to vector<8x32xf32>
    %cst_23 = arith.constant 0.000000e+00 : f32
    %44 = vector.broadcast %cst_23 : f32 to vector<8x32xf32>
    %c0_24 = arith.constant 0 : index
    %c0_25 = arith.constant 0 : index
    %c0_26 = arith.constant 0 : index
    %45 = vector.load %arg5[%c0_24, %c0_25, %c0_26] : memref<4x1x32xf32, #tpu.memory_space<vmem>>, vector<1x1x32xf32>
    %46 = vector.shape_cast %45 : vector<1x1x32xf32> to vector<1x32xf32>
    %47 = vector.broadcast %46 : vector<1x32xf32> to vector<8x32xf32>
    %48 = arith.mulf %41, %47 : vector<8x32xf32>
    %cst_27 = arith.constant dense<0.000000e+00> : vector<8x8xf32>
    %49 = tpu.matmul %48, %42, %cst_27 {dimension_numbers = #tpu.dot_dimension_numbers<[1], [1], [0], [0], [0, 0, 1, 0], [], []>} : vector<8x32xf32>, vector<8x32xf32>, vector<8x8xf32> -> vector<8x8xf32>
    %50 = arith.addf %49, %11 : vector<8x8xf32>
    %cst_28 = arith.constant dense<0xFF800000> : vector<8xf32>
    %51 = vector.multi_reduction <maximumf>, %50, %cst_28 [1] : vector<8x8xf32> to vector<8xf32>
    %52 = vector.shape_cast %51 : vector<8xf32> to vector<8x1xf32>
    %53 = vector.broadcast %52 : vector<8x1xf32> to vector<8x8xf32>
    %54 = arith.subf %50, %53 : vector<8x8xf32>
    %55 = math.exp %54 : vector<8x8xf32>
    %cst_29 = arith.constant dense<0.000000e+00> : vector<8xf32>
    %56 = vector.multi_reduction <add>, %55, %cst_29 [1] : vector<8x8xf32> to vector<8xf32>
    %57 = vector.shape_cast %56 : vector<8xf32> to vector<8x1xf32>
    %58 = tpu.reciprocal %57 {approx = true} : vector<8x1xf32> -> vector<8x1xf32>
    %59 = vector.broadcast %58 : vector<8x1xf32> to vector<8x8xf32>
    %60 = arith.mulf %55, %59 : vector<8x8xf32>
    %61 = vector.broadcast %46 : vector<1x32xf32> to vector<8x32xf32>
    %62 = arith.mulf %43, %61 : vector<8x32xf32>
    %cst_30 = arith.constant dense<0.000000e+00> : vector<8x32xf32>
    %63 = tpu.matmul %60, %62, %cst_30 {dimension_numbers = #tpu.dot_dimension_numbers<[1], [0], [0], [1], [0, 0, 1, 1], [], []>} : vector<8x8xf32>, vector<8x32xf32>, vector<8x32xf32> -> vector<8x32xf32>
    %64 = arith.addf %44, %63 : vector<8x32xf32>
    %c1 = arith.constant 1 : index
    %c0_31 = arith.constant 0 : index
    %c0_32 = arith.constant 0 : index
    %65 = vector.load %arg5[%c1, %c0_31, %c0_32] : memref<4x1x32xf32, #tpu.memory_space<vmem>>, vector<1x1x32xf32>
    %66 = vector.shape_cast %65 : vector<1x1x32xf32> to vector<1x32xf32>
    %67 = vector.broadcast %66 : vector<1x32xf32> to vector<8x32xf32>
    %68 = arith.mulf %41, %67 : vector<8x32xf32>
    %cst_33 = arith.constant dense<0.000000e+00> : vector<8x8xf32>
    %69 = tpu.matmul %68, %42, %cst_33 {dimension_numbers = #tpu.dot_dimension_numbers<[1], [1], [0], [0], [0, 0, 1, 0], [], []>} : vector<8x32xf32>, vector<8x32xf32>, vector<8x8xf32> -> vector<8x8xf32>
    %70 = arith.addf %69, %11 : vector<8x8xf32>
    %cst_34 = arith.constant dense<0xFF800000> : vector<8xf32>
    %71 = vector.multi_reduction <maximumf>, %70, %cst_34 [1] : vector<8x8xf32> to vector<8xf32>
    %72 = vector.shape_cast %71 : vector<8xf32> to vector<8x1xf32>
    %73 = vector.broadcast %72 : vector<8x1xf32> to vector<8x8xf32>
    %74 = arith.subf %70, %73 : vector<8x8xf32>
    %75 = math.exp %74 : vector<8x8xf32>
    %cst_35 = arith.constant dense<0.000000e+00> : vector<8xf32>
    %76 = vector.multi_reduction <add>, %75, %cst_35 [1] : vector<8x8xf32> to vector<8xf32>
    %77 = vector.shape_cast %76 : vector<8xf32> to vector<8x1xf32>
    %78 = tpu.reciprocal %77 {approx = true} : vector<8x1xf32> -> vector<8x1xf32>
    %79 = vector.broadcast %78 : vector<8x1xf32> to vector<8x8xf32>
    %80 = arith.mulf %75, %79 : vector<8x8xf32>
    %81 = vector.broadcast %66 : vector<1x32xf32> to vector<8x32xf32>
    %82 = arith.mulf %43, %81 : vector<8x32xf32>
    %cst_36 = arith.constant dense<0.000000e+00> : vector<8x32xf32>
    %83 = tpu.matmul %80, %82, %cst_36 {dimension_numbers = #tpu.dot_dimension_numbers<[1], [0], [0], [1], [0, 0, 1, 1], [], []>} : vector<8x8xf32>, vector<8x32xf32>, vector<8x32xf32> -> vector<8x32xf32>
    %84 = arith.addf %64, %83 : vector<8x32xf32>
    %c2 = arith.constant 2 : index
    %c0_37 = arith.constant 0 : index
    %c0_38 = arith.constant 0 : index
    %85 = vector.load %arg5[%c2, %c0_37, %c0_38] : memref<4x1x32xf32, #tpu.memory_space<vmem>>, vector<1x1x32xf32>
    %86 = vector.shape_cast %85 : vector<1x1x32xf32> to vector<1x32xf32>
    %87 = vector.broadcast %86 : vector<1x32xf32> to vector<8x32xf32>
    %88 = arith.mulf %41, %87 : vector<8x32xf32>
    %cst_39 = arith.constant dense<0.000000e+00> : vector<8x8xf32>
    %89 = tpu.matmul %88, %42, %cst_39 {dimension_numbers = #tpu.dot_dimension_numbers<[1], [1], [0], [0], [0, 0, 1, 0], [], []>} : vector<8x32xf32>, vector<8x32xf32>, vector<8x8xf32> -> vector<8x8xf32>
    %90 = arith.addf %89, %11 : vector<8x8xf32>
    %cst_40 = arith.constant dense<0xFF800000> : vector<8xf32>
    %91 = vector.multi_reduction <maximumf>, %90, %cst_40 [1] : vector<8x8xf32> to vector<8xf32>
    %92 = vector.shape_cast %91 : vector<8xf32> to vector<8x1xf32>
    %93 = vector.broadcast %92 : vector<8x1xf32> to vector<8x8xf32>
    %94 = arith.subf %90, %93 : vector<8x8xf32>
    %95 = math.exp %94 : vector<8x8xf32>
    %cst_41 = arith.constant dense<0.000000e+00> : vector<8xf32>
    %96 = vector.multi_reduction <add>, %95, %cst_41 [1] : vector<8x8xf32> to vector<8xf32>
    %97 = vector.shape_cast %96 : vector<8xf32> to vector<8x1xf32>
    %98 = tpu.reciprocal %97 {approx = true} : vector<8x1xf32> -> vector<8x1xf32>
    %99 = vector.broadcast %98 : vector<8x1xf32> to vector<8x8xf32>
    %100 = arith.mulf %95, %99 : vector<8x8xf32>
    %101 = vector.broadcast %86 : vector<1x32xf32> to vector<8x32xf32>
    %102 = arith.mulf %43, %101 : vector<8x32xf32>
    %cst_42 = arith.constant dense<0.000000e+00> : vector<8x32xf32>
    %103 = tpu.matmul %100, %102, %cst_42 {dimension_numbers = #tpu.dot_dimension_numbers<[1], [0], [0], [1], [0, 0, 1, 1], [], []>} : vector<8x8xf32>, vector<8x32xf32>, vector<8x32xf32> -> vector<8x32xf32>
    %104 = arith.addf %84, %103 : vector<8x32xf32>
    %c3 = arith.constant 3 : index
    %c0_43 = arith.constant 0 : index
    %c0_44 = arith.constant 0 : index
    %105 = vector.load %arg5[%c3, %c0_43, %c0_44] : memref<4x1x32xf32, #tpu.memory_space<vmem>>, vector<1x1x32xf32>
    %106 = vector.shape_cast %105 : vector<1x1x32xf32> to vector<1x32xf32>
    %107 = vector.broadcast %106 : vector<1x32xf32> to vector<8x32xf32>
    %108 = arith.mulf %41, %107 : vector<8x32xf32>
    %cst_45 = arith.constant dense<0.000000e+00> : vector<8x8xf32>
    %109 = tpu.matmul %108, %42, %cst_45 {dimension_numbers = #tpu.dot_dimension_numbers<[1], [1], [0], [0], [0, 0, 1, 0], [], []>} : vector<8x32xf32>, vector<8x32xf32>, vector<8x8xf32> -> vector<8x8xf32>
    %110 = arith.addf %109, %11 : vector<8x8xf32>
    %cst_46 = arith.constant dense<0xFF800000> : vector<8xf32>
    %111 = vector.multi_reduction <maximumf>, %110, %cst_46 [1] : vector<8x8xf32> to vector<8xf32>
    %112 = vector.shape_cast %111 : vector<8xf32> to vector<8x1xf32>
    %113 = vector.broadcast %112 : vector<8x1xf32> to vector<8x8xf32>
    %114 = arith.subf %110, %113 : vector<8x8xf32>
    %115 = math.exp %114 : vector<8x8xf32>
    %cst_47 = arith.constant dense<0.000000e+00> : vector<8xf32>
    %116 = vector.multi_reduction <add>, %115, %cst_47 [1] : vector<8x8xf32> to vector<8xf32>
    %117 = vector.shape_cast %116 : vector<8xf32> to vector<8x1xf32>
    %118 = tpu.reciprocal %117 {approx = true} : vector<8x1xf32> -> vector<8x1xf32>
    %119 = vector.broadcast %118 : vector<8x1xf32> to vector<8x8xf32>
    %120 = arith.mulf %115, %119 : vector<8x8xf32>
    %121 = vector.broadcast %106 : vector<1x32xf32> to vector<8x32xf32>
    %122 = arith.mulf %43, %121 : vector<8x32xf32>
    %cst_48 = arith.constant dense<0.000000e+00> : vector<8x32xf32>
    %123 = tpu.matmul %120, %122, %cst_48 {dimension_numbers = #tpu.dot_dimension_numbers<[1], [0], [0], [1], [0, 0, 1, 1], [], []>} : vector<8x8xf32>, vector<8x32xf32>, vector<8x32xf32> -> vector<8x32xf32>
    %124 = arith.addf %104, %123 : vector<8x32xf32>
    %125 = arith.addf %10, %124 : vector<8x32xf32>
    %c0_49 = arith.constant 0 : index
    %c0_50 = arith.constant 0 : index
    %c0_51 = arith.constant 0 : index
    %126 = vector.load %arg9[%c0_49, %c0_50, %c0_51] : memref<4x1x32xf32, #tpu.memory_space<vmem>>, vector<1x1x32xf32>
    %127 = vector.shape_cast %126 : vector<1x1x32xf32> to vector<1x32xf32>
    %c0_52 = arith.constant 0 : index
    %c0_53 = arith.constant 0 : index
    %c0_54 = arith.constant 0 : index
    %128 = vector.load %arg10[%c0_52, %c0_53, %c0_54] : memref<4x1x32xf32, #tpu.memory_space<vmem>>, vector<1x1x32xf32>
    %129 = vector.shape_cast %128 : vector<1x1x32xf32> to vector<1x32xf32>
    %cst_55 = arith.constant dense<0.000000e+00> : vector<8xf32>
    %130 = vector.multi_reduction <add>, %125, %cst_55 [1] : vector<8x32xf32> to vector<8xf32>
    %131 = vector.shape_cast %130 : vector<8xf32> to vector<8x1xf32>
    %cst_56 = arith.constant 3.200000e+01 : f32
    %132 = vector.broadcast %cst_56 : f32 to vector<8x1xf32>
    %133 = arith.divf %131, %132 : vector<8x1xf32>
    %134 = vector.broadcast %133 : vector<8x1xf32> to vector<8x32xf32>
    %135 = arith.subf %125, %134 : vector<8x32xf32>
    %136 = arith.mulf %135, %135 : vector<8x32xf32>
    %cst_57 = arith.constant dense<0.000000e+00> : vector<8xf32>
    %137 = vector.multi_reduction <add>, %136, %cst_57 [1] : vector<8x32xf32> to vector<8xf32>
    %138 = vector.shape_cast %137 : vector<8xf32> to vector<8x1xf32>
    %cst_58 = arith.constant 3.200000e+01 : f32
    %139 = vector.broadcast %cst_58 : f32 to vector<8x1xf32>
    %140 = arith.divf %138, %139 : vector<8x1xf32>
    %141 = vector.broadcast %133 : vector<8x1xf32> to vector<8x32xf32>
    %142 = arith.subf %125, %141 : vector<8x32xf32>
    %cst_59 = arith.constant 9.99999974E-6 : f32
    %143 = vector.broadcast %cst_59 : f32 to vector<8x1xf32>
    %144 = arith.addf %140, %143 : vector<8x1xf32>
    %145 = math.rsqrt %144 : vector<8x1xf32>
    %146 = vector.broadcast %145 : vector<8x1xf32> to vector<8x32xf32>
    %147 = arith.mulf %142, %146 : vector<8x32xf32>
    %148 = vector.broadcast %127 : vector<1x32xf32> to vector<8x32xf32>
    %149 = arith.mulf %147, %148 : vector<8x32xf32>
    %150 = vector.broadcast %129 : vector<1x32xf32> to vector<8x32xf32>
    %151 = arith.addf %149, %150 : vector<8x32xf32>
    %c0_60 = arith.constant 0 : index
    %c0_61 = arith.constant 0 : index
    %c0_62 = arith.constant 0 : index
    %152 = vector.load %arg11[%c0_60, %c0_61, %c0_62] : memref<4x32x128xf32, #tpu.memory_space<vmem>>, vector<1x32x128xf32>
    %153 = vector.shape_cast %152 : vector<1x32x128xf32> to vector<32x128xf32>
    %cst_63 = arith.constant dense<0.000000e+00> : vector<8x128xf32>
    %154 = tpu.matmul %151, %153, %cst_63 {dimension_numbers = #tpu.dot_dimension_numbers<[1], [0], [0], [1], [0, 0, 1, 1], [], []>} : vector<8x32xf32>, vector<32x128xf32>, vector<8x128xf32> -> vector<8x128xf32>
    %c0_64 = arith.constant 0 : index
    %c0_65 = arith.constant 0 : index
    %c0_66 = arith.constant 0 : index
    %155 = vector.load %arg12[%c0_64, %c0_65, %c0_66] : memref<4x1x128xf32, #tpu.memory_space<vmem>>, vector<1x1x128xf32>
    %156 = vector.shape_cast %155 : vector<1x1x128xf32> to vector<1x128xf32>
    %157 = vector.broadcast %156 : vector<1x128xf32> to vector<8x128xf32>
    %158 = arith.addf %154, %157 : vector<8x128xf32>
    %cst_67 = arith.constant 0.000000e+00 : f32
    %159 = vector.broadcast %cst_67 : f32 to vector<8x128xf32>
    %160 = arith.maximumf %158, %159 : vector<8x128xf32>
    %c0_68 = arith.constant 0 : index
    %c0_69 = arith.constant 0 : index
    %c0_70 = arith.constant 0 : index
    %161 = vector.load %arg13[%c0_68, %c0_69, %c0_70] : memref<4x128x32xf32, #tpu.memory_space<vmem>>, vector<1x128x32xf32>
    %162 = vector.shape_cast %161 : vector<1x128x32xf32> to vector<128x32xf32>
    %cst_71 = arith.constant dense<0.000000e+00> : vector<8x32xf32>
    %163 = tpu.matmul %160, %162, %cst_71 {dimension_numbers = #tpu.dot_dimension_numbers<[1], [0], [0], [1], [0, 0, 1, 1], [], []>} : vector<8x128xf32>, vector<128x32xf32>, vector<8x32xf32> -> vector<8x32xf32>
    %164 = arith.addf %125, %163 : vector<8x32xf32>
    %c0_72 = arith.constant 0 : index
    %c0_73 = arith.constant 0 : index
    %c0_74 = arith.constant 0 : index
    %165 = vector.load %arg14[%c0_72, %c0_73, %c0_74] : memref<4x1x32xf32, #tpu.memory_space<vmem>>, vector<1x1x32xf32>
    %166 = vector.shape_cast %165 : vector<1x1x32xf32> to vector<1x32xf32>
    %167 = vector.broadcast %166 : vector<1x32xf32> to vector<8x32xf32>
    %168 = arith.addf %164, %167 : vector<8x32xf32>
    %c1_75 = arith.constant 1 : index
    %c0_76 = arith.constant 0 : index
    %c0_77 = arith.constant 0 : index
    %169 = vector.load %arg6[%c1_75, %c0_76, %c0_77] : memref<4x1x32xf32, #tpu.memory_space<vmem>>, vector<1x1x32xf32>
    %170 = vector.shape_cast %169 : vector<1x1x32xf32> to vector<1x32xf32>
    %c1_78 = arith.constant 1 : index
    %c0_79 = arith.constant 0 : index
    %c0_80 = arith.constant 0 : index
    %171 = vector.load %arg7[%c1_78, %c0_79, %c0_80] : memref<4x1x32xf32, #tpu.memory_space<vmem>>, vector<1x1x32xf32>
    %172 = vector.shape_cast %171 : vector<1x1x32xf32> to vector<1x32xf32>
    %cst_81 = arith.constant dense<0.000000e+00> : vector<8xf32>
    %173 = vector.multi_reduction <add>, %168, %cst_81 [1] : vector<8x32xf32> to vector<8xf32>
    %174 = vector.shape_cast %173 : vector<8xf32> to vector<8x1xf32>
    %cst_82 = arith.constant 3.200000e+01 : f32
    %175 = vector.broadcast %cst_82 : f32 to vector<8x1xf32>
    %176 = arith.divf %174, %175 : vector<8x1xf32>
    %177 = vector.broadcast %176 : vector<8x1xf32> to vector<8x32xf32>
    %178 = arith.subf %168, %177 : vector<8x32xf32>
    %179 = arith.mulf %178, %178 : vector<8x32xf32>
    %cst_83 = arith.constant dense<0.000000e+00> : vector<8xf32>
    %180 = vector.multi_reduction <add>, %179, %cst_83 [1] : vector<8x32xf32> to vector<8xf32>
    %181 = vector.shape_cast %180 : vector<8xf32> to vector<8x1xf32>
    %cst_84 = arith.constant 3.200000e+01 : f32
    %182 = vector.broadcast %cst_84 : f32 to vector<8x1xf32>
    %183 = arith.divf %181, %182 : vector<8x1xf32>
    %184 = vector.broadcast %176 : vector<8x1xf32> to vector<8x32xf32>
    %185 = arith.subf %168, %184 : vector<8x32xf32>
    %cst_85 = arith.constant 9.99999974E-6 : f32
    %186 = vector.broadcast %cst_85 : f32 to vector<8x1xf32>
    %187 = arith.addf %183, %186 : vector<8x1xf32>
    %188 = math.rsqrt %187 : vector<8x1xf32>
    %189 = vector.broadcast %188 : vector<8x1xf32> to vector<8x32xf32>
    %190 = arith.mulf %185, %189 : vector<8x32xf32>
    %191 = vector.broadcast %170 : vector<1x32xf32> to vector<8x32xf32>
    %192 = arith.mulf %190, %191 : vector<8x32xf32>
    %193 = vector.broadcast %172 : vector<1x32xf32> to vector<8x32xf32>
    %194 = arith.addf %192, %193 : vector<8x32xf32>
    %c1_86 = arith.constant 1 : index
    %c0_87 = arith.constant 0 : index
    %c0_88 = arith.constant 0 : index
    %195 = vector.load %arg8[%c1_86, %c0_87, %c0_88] : memref<4x32x96xf32, #tpu.memory_space<vmem>>, vector<1x32x96xf32>
    %196 = vector.shape_cast %195 : vector<1x32x96xf32> to vector<32x96xf32>
    %cst_89 = arith.constant dense<0.000000e+00> : vector<8x96xf32>
    %197 = tpu.matmul %194, %196, %cst_89 {dimension_numbers = #tpu.dot_dimension_numbers<[1], [0], [0], [1], [0, 0, 1, 1], [], []>} : vector<8x32xf32>, vector<32x96xf32>, vector<8x96xf32> -> vector<8x96xf32>
    %198 = vector.extract_strided_slice %197 {offsets = [0, 0], sizes = [8, 32], strides = [1, 1]} : vector<8x96xf32> to vector<8x32xf32>
    %199 = vector.extract_strided_slice %197 {offsets = [0, 32], sizes = [8, 32], strides = [1, 1]} : vector<8x96xf32> to vector<8x32xf32>
    %200 = vector.extract_strided_slice %197 {offsets = [0, 64], sizes = [8, 32], strides = [1, 1]} : vector<8x96xf32> to vector<8x32xf32>
    %cst_90 = arith.constant 0.000000e+00 : f32
    %201 = vector.broadcast %cst_90 : f32 to vector<8x32xf32>
    %c0_91 = arith.constant 0 : index
    %c0_92 = arith.constant 0 : index
    %c0_93 = arith.constant 0 : index
    %202 = vector.load %arg5[%c0_91, %c0_92, %c0_93] : memref<4x1x32xf32, #tpu.memory_space<vmem>>, vector<1x1x32xf32>
    %203 = vector.shape_cast %202 : vector<1x1x32xf32> to vector<1x32xf32>
    %204 = vector.broadcast %203 : vector<1x32xf32> to vector<8x32xf32>
    %205 = arith.mulf %198, %204 : vector<8x32xf32>
    %cst_94 = arith.constant dense<0.000000e+00> : vector<8x8xf32>
    %206 = tpu.matmul %205, %199, %cst_94 {dimension_numbers = #tpu.dot_dimension_numbers<[1], [1], [0], [0], [0, 0, 1, 0], [], []>} : vector<8x32xf32>, vector<8x32xf32>, vector<8x8xf32> -> vector<8x8xf32>
    %207 = arith.addf %206, %11 : vector<8x8xf32>
    %cst_95 = arith.constant dense<0xFF800000> : vector<8xf32>
    %208 = vector.multi_reduction <maximumf>, %207, %cst_95 [1] : vector<8x8xf32> to vector<8xf32>
    %209 = vector.shape_cast %208 : vector<8xf32> to vector<8x1xf32>
    %210 = vector.broadcast %209 : vector<8x1xf32> to vector<8x8xf32>
    %211 = arith.subf %207, %210 : vector<8x8xf32>
    %212 = math.exp %211 : vector<8x8xf32>
    %cst_96 = arith.constant dense<0.000000e+00> : vector<8xf32>
    %213 = vector.multi_reduction <add>, %212, %cst_96 [1] : vector<8x8xf32> to vector<8xf32>
    %214 = vector.shape_cast %213 : vector<8xf32> to vector<8x1xf32>
    %215 = tpu.reciprocal %214 {approx = true} : vector<8x1xf32> -> vector<8x1xf32>
    %216 = vector.broadcast %215 : vector<8x1xf32> to vector<8x8xf32>
    %217 = arith.mulf %212, %216 : vector<8x8xf32>
    %218 = vector.broadcast %203 : vector<1x32xf32> to vector<8x32xf32>
    %219 = arith.mulf %200, %218 : vector<8x32xf32>
    %cst_97 = arith.constant dense<0.000000e+00> : vector<8x32xf32>
    %220 = tpu.matmul %217, %219, %cst_97 {dimension_numbers = #tpu.dot_dimension_numbers<[1], [0], [0], [1], [0, 0, 1, 1], [], []>} : vector<8x8xf32>, vector<8x32xf32>, vector<8x32xf32> -> vector<8x32xf32>
    %221 = arith.addf %201, %220 : vector<8x32xf32>
    %c1_98 = arith.constant 1 : index
    %c0_99 = arith.constant 0 : index
    %c0_100 = arith.constant 0 : index
    %222 = vector.load %arg5[%c1_98, %c0_99, %c0_100] : memref<4x1x32xf32, #tpu.memory_space<vmem>>, vector<1x1x32xf32>
    %223 = vector.shape_cast %222 : vector<1x1x32xf32> to vector<1x32xf32>
    %224 = vector.broadcast %223 : vector<1x32xf32> to vector<8x32xf32>
    %225 = arith.mulf %198, %224 : vector<8x32xf32>
    %cst_101 = arith.constant dense<0.000000e+00> : vector<8x8xf32>
    %226 = tpu.matmul %225, %199, %cst_101 {dimension_numbers = #tpu.dot_dimension_numbers<[1], [1], [0], [0], [0, 0, 1, 0], [], []>} : vector<8x32xf32>, vector<8x32xf32>, vector<8x8xf32> -> vector<8x8xf32>
    %227 = arith.addf %226, %11 : vector<8x8xf32>
    %cst_102 = arith.constant dense<0xFF800000> : vector<8xf32>
    %228 = vector.multi_reduction <maximumf>, %227, %cst_102 [1] : vector<8x8xf32> to vector<8xf32>
    %229 = vector.shape_cast %228 : vector<8xf32> to vector<8x1xf32>
    %230 = vector.broadcast %229 : vector<8x1xf32> to vector<8x8xf32>
    %231 = arith.subf %227, %230 : vector<8x8xf32>
    %232 = math.exp %231 : vector<8x8xf32>
    %cst_103 = arith.constant dense<0.000000e+00> : vector<8xf32>
    %233 = vector.multi_reduction <add>, %232, %cst_103 [1] : vector<8x8xf32> to vector<8xf32>
    %234 = vector.shape_cast %233 : vector<8xf32> to vector<8x1xf32>
    %235 = tpu.reciprocal %234 {approx = true} : vector<8x1xf32> -> vector<8x1xf32>
    %236 = vector.broadcast %235 : vector<8x1xf32> to vector<8x8xf32>
    %237 = arith.mulf %232, %236 : vector<8x8xf32>
    %238 = vector.broadcast %223 : vector<1x32xf32> to vector<8x32xf32>
    %239 = arith.mulf %200, %238 : vector<8x32xf32>
    %cst_104 = arith.constant dense<0.000000e+00> : vector<8x32xf32>
    %240 = tpu.matmul %237, %239, %cst_104 {dimension_numbers = #tpu.dot_dimension_numbers<[1], [0], [0], [1], [0, 0, 1, 1], [], []>} : vector<8x8xf32>, vector<8x32xf32>, vector<8x32xf32> -> vector<8x32xf32>
    %241 = arith.addf %221, %240 : vector<8x32xf32>
    %c2_105 = arith.constant 2 : index
    %c0_106 = arith.constant 0 : index
    %c0_107 = arith.constant 0 : index
    %242 = vector.load %arg5[%c2_105, %c0_106, %c0_107] : memref<4x1x32xf32, #tpu.memory_space<vmem>>, vector<1x1x32xf32>
    %243 = vector.shape_cast %242 : vector<1x1x32xf32> to vector<1x32xf32>
    %244 = vector.broadcast %243 : vector<1x32xf32> to vector<8x32xf32>
    %245 = arith.mulf %198, %244 : vector<8x32xf32>
    %cst_108 = arith.constant dense<0.000000e+00> : vector<8x8xf32>
    %246 = tpu.matmul %245, %199, %cst_108 {dimension_numbers = #tpu.dot_dimension_numbers<[1], [1], [0], [0], [0, 0, 1, 0], [], []>} : vector<8x32xf32>, vector<8x32xf32>, vector<8x8xf32> -> vector<8x8xf32>
    %247 = arith.addf %246, %11 : vector<8x8xf32>
    %cst_109 = arith.constant dense<0xFF800000> : vector<8xf32>
    %248 = vector.multi_reduction <maximumf>, %247, %cst_109 [1] : vector<8x8xf32> to vector<8xf32>
    %249 = vector.shape_cast %248 : vector<8xf32> to vector<8x1xf32>
    %250 = vector.broadcast %249 : vector<8x1xf32> to vector<8x8xf32>
    %251 = arith.subf %247, %250 : vector<8x8xf32>
    %252 = math.exp %251 : vector<8x8xf32>
    %cst_110 = arith.constant dense<0.000000e+00> : vector<8xf32>
    %253 = vector.multi_reduction <add>, %252, %cst_110 [1] : vector<8x8xf32> to vector<8xf32>
    %254 = vector.shape_cast %253 : vector<8xf32> to vector<8x1xf32>
    %255 = tpu.reciprocal %254 {approx = true} : vector<8x1xf32> -> vector<8x1xf32>
    %256 = vector.broadcast %255 : vector<8x1xf32> to vector<8x8xf32>
    %257 = arith.mulf %252, %256 : vector<8x8xf32>
    %258 = vector.broadcast %243 : vector<1x32xf32> to vector<8x32xf32>
    %259 = arith.mulf %200, %258 : vector<8x32xf32>
    %cst_111 = arith.constant dense<0.000000e+00> : vector<8x32xf32>
    %260 = tpu.matmul %257, %259, %cst_111 {dimension_numbers = #tpu.dot_dimension_numbers<[1], [0], [0], [1], [0, 0, 1, 1], [], []>} : vector<8x8xf32>, vector<8x32xf32>, vector<8x32xf32> -> vector<8x32xf32>
    %261 = arith.addf %241, %260 : vector<8x32xf32>
    %c3_112 = arith.constant 3 : index
    %c0_113 = arith.constant 0 : index
    %c0_114 = arith.constant 0 : index
    %262 = vector.load %arg5[%c3_112, %c0_113, %c0_114] : memref<4x1x32xf32, #tpu.memory_space<vmem>>, vector<1x1x32xf32>
    %263 = vector.shape_cast %262 : vector<1x1x32xf32> to vector<1x32xf32>
    %264 = vector.broadcast %263 : vector<1x32xf32> to vector<8x32xf32>
    %265 = arith.mulf %198, %264 : vector<8x32xf32>
    %cst_115 = arith.constant dense<0.000000e+00> : vector<8x8xf32>
    %266 = tpu.matmul %265, %199, %cst_115 {dimension_numbers = #tpu.dot_dimension_numbers<[1], [1], [0], [0], [0, 0, 1, 0], [], []>} : vector<8x32xf32>, vector<8x32xf32>, vector<8x8xf32> -> vector<8x8xf32>
    %267 = arith.addf %266, %11 : vector<8x8xf32>
    %cst_116 = arith.constant dense<0xFF800000> : vector<8xf32>
    %268 = vector.multi_reduction <maximumf>, %267, %cst_116 [1] : vector<8x8xf32> to vector<8xf32>
    %269 = vector.shape_cast %268 : vector<8xf32> to vector<8x1xf32>
    %270 = vector.broadcast %269 : vector<8x1xf32> to vector<8x8xf32>
    %271 = arith.subf %267, %270 : vector<8x8xf32>
    %272 = math.exp %271 : vector<8x8xf32>
    %cst_117 = arith.constant dense<0.000000e+00> : vector<8xf32>
    %273 = vector.multi_reduction <add>, %272, %cst_117 [1] : vector<8x8xf32> to vector<8xf32>
    %274 = vector.shape_cast %273 : vector<8xf32> to vector<8x1xf32>
    %275 = tpu.reciprocal %274 {approx = true} : vector<8x1xf32> -> vector<8x1xf32>
    %276 = vector.broadcast %275 : vector<8x1xf32> to vector<8x8xf32>
    %277 = arith.mulf %272, %276 : vector<8x8xf32>
    %278 = vector.broadcast %263 : vector<1x32xf32> to vector<8x32xf32>
    %279 = arith.mulf %200, %278 : vector<8x32xf32>
    %cst_118 = arith.constant dense<0.000000e+00> : vector<8x32xf32>
    %280 = tpu.matmul %277, %279, %cst_118 {dimension_numbers = #tpu.dot_dimension_numbers<[1], [0], [0], [1], [0, 0, 1, 1], [], []>} : vector<8x8xf32>, vector<8x32xf32>, vector<8x32xf32> -> vector<8x32xf32>
    %281 = arith.addf %261, %280 : vector<8x32xf32>
    %282 = arith.addf %168, %281 : vector<8x32xf32>
    %c1_119 = arith.constant 1 : index
    %c0_120 = arith.constant 0 : index
    %c0_121 = arith.constant 0 : index
    %283 = vector.load %arg9[%c1_119, %c0_120, %c0_121] : memref<4x1x32xf32, #tpu.memory_space<vmem>>, vector<1x1x32xf32>
    %284 = vector.shape_cast %283 : vector<1x1x32xf32> to vector<1x32xf32>
    %c1_122 = arith.constant 1 : index
    %c0_123 = arith.constant 0 : index
    %c0_124 = arith.constant 0 : index
    %285 = vector.load %arg10[%c1_122, %c0_123, %c0_124] : memref<4x1x32xf32, #tpu.memory_space<vmem>>, vector<1x1x32xf32>
    %286 = vector.shape_cast %285 : vector<1x1x32xf32> to vector<1x32xf32>
    %cst_125 = arith.constant dense<0.000000e+00> : vector<8xf32>
    %287 = vector.multi_reduction <add>, %282, %cst_125 [1] : vector<8x32xf32> to vector<8xf32>
    %288 = vector.shape_cast %287 : vector<8xf32> to vector<8x1xf32>
    %cst_126 = arith.constant 3.200000e+01 : f32
    %289 = vector.broadcast %cst_126 : f32 to vector<8x1xf32>
    %290 = arith.divf %288, %289 : vector<8x1xf32>
    %291 = vector.broadcast %290 : vector<8x1xf32> to vector<8x32xf32>
    %292 = arith.subf %282, %291 : vector<8x32xf32>
    %293 = arith.mulf %292, %292 : vector<8x32xf32>
    %cst_127 = arith.constant dense<0.000000e+00> : vector<8xf32>
    %294 = vector.multi_reduction <add>, %293, %cst_127 [1] : vector<8x32xf32> to vector<8xf32>
    %295 = vector.shape_cast %294 : vector<8xf32> to vector<8x1xf32>
    %cst_128 = arith.constant 3.200000e+01 : f32
    %296 = vector.broadcast %cst_128 : f32 to vector<8x1xf32>
    %297 = arith.divf %295, %296 : vector<8x1xf32>
    %298 = vector.broadcast %290 : vector<8x1xf32> to vector<8x32xf32>
    %299 = arith.subf %282, %298 : vector<8x32xf32>
    %cst_129 = arith.constant 9.99999974E-6 : f32
    %300 = vector.broadcast %cst_129 : f32 to vector<8x1xf32>
    %301 = arith.addf %297, %300 : vector<8x1xf32>
    %302 = math.rsqrt %301 : vector<8x1xf32>
    %303 = vector.broadcast %302 : vector<8x1xf32> to vector<8x32xf32>
    %304 = arith.mulf %299, %303 : vector<8x32xf32>
    %305 = vector.broadcast %284 : vector<1x32xf32> to vector<8x32xf32>
    %306 = arith.mulf %304, %305 : vector<8x32xf32>
    %307 = vector.broadcast %286 : vector<1x32xf32> to vector<8x32xf32>
    %308 = arith.addf %306, %307 : vector<8x32xf32>
    %c1_130 = arith.constant 1 : index
    %c0_131 = arith.constant 0 : index
    %c0_132 = arith.constant 0 : index
    %309 = vector.load %arg11[%c1_130, %c0_131, %c0_132] : memref<4x32x128xf32, #tpu.memory_space<vmem>>, vector<1x32x128xf32>
    %310 = vector.shape_cast %309 : vector<1x32x128xf32> to vector<32x128xf32>
    %cst_133 = arith.constant dense<0.000000e+00> : vector<8x128xf32>
    %311 = tpu.matmul %308, %310, %cst_133 {dimension_numbers = #tpu.dot_dimension_numbers<[1], [0], [0], [1], [0, 0, 1, 1], [], []>} : vector<8x32xf32>, vector<32x128xf32>, vector<8x128xf32> -> vector<8x128xf32>
    %c1_134 = arith.constant 1 : index
    %c0_135 = arith.constant 0 : index
    %c0_136 = arith.constant 0 : index
    %312 = vector.load %arg12[%c1_134, %c0_135, %c0_136] : memref<4x1x128xf32, #tpu.memory_space<vmem>>, vector<1x1x128xf32>
    %313 = vector.shape_cast %312 : vector<1x1x128xf32> to vector<1x128xf32>
    %314 = vector.broadcast %313 : vector<1x128xf32> to vector<8x128xf32>
    %315 = arith.addf %311, %314 : vector<8x128xf32>
    %cst_137 = arith.constant 0.000000e+00 : f32
    %316 = vector.broadcast %cst_137 : f32 to vector<8x128xf32>
    %317 = arith.maximumf %315, %316 : vector<8x128xf32>
    %c1_138 = arith.constant 1 : index
    %c0_139 = arith.constant 0 : index
    %c0_140 = arith.constant 0 : index
    %318 = vector.load %arg13[%c1_138, %c0_139, %c0_140] : memref<4x128x32xf32, #tpu.memory_space<vmem>>, vector<1x128x32xf32>
    %319 = vector.shape_cast %318 : vector<1x128x32xf32> to vector<128x32xf32>
    %cst_141 = arith.constant dense<0.000000e+00> : vector<8x32xf32>
    %320 = tpu.matmul %317, %319, %cst_141 {dimension_numbers = #tpu.dot_dimension_numbers<[1], [0], [0], [1], [0, 0, 1, 1], [], []>} : vector<8x128xf32>, vector<128x32xf32>, vector<8x32xf32> -> vector<8x32xf32>
    %321 = arith.addf %282, %320 : vector<8x32xf32>
    %c1_142 = arith.constant 1 : index
    %c0_143 = arith.constant 0 : index
    %c0_144 = arith.constant 0 : index
    %322 = vector.load %arg14[%c1_142, %c0_143, %c0_144] : memref<4x1x32xf32, #tpu.memory_space<vmem>>, vector<1x1x32xf32>
    %323 = vector.shape_cast %322 : vector<1x1x32xf32> to vector<1x32xf32>
    %324 = vector.broadcast %323 : vector<1x32xf32> to vector<8x32xf32>
    %325 = arith.addf %321, %324 : vector<8x32xf32>
    %c2_145 = arith.constant 2 : index
    %c0_146 = arith.constant 0 : index
    %c0_147 = arith.constant 0 : index
    %326 = vector.load %arg6[%c2_145, %c0_146, %c0_147] : memref<4x1x32xf32, #tpu.memory_space<vmem>>, vector<1x1x32xf32>
    %327 = vector.shape_cast %326 : vector<1x1x32xf32> to vector<1x32xf32>
    %c2_148 = arith.constant 2 : index
    %c0_149 = arith.constant 0 : index
    %c0_150 = arith.constant 0 : index
    %328 = vector.load %arg7[%c2_148, %c0_149, %c0_150] : memref<4x1x32xf32, #tpu.memory_space<vmem>>, vector<1x1x32xf32>
    %329 = vector.shape_cast %328 : vector<1x1x32xf32> to vector<1x32xf32>
    %cst_151 = arith.constant dense<0.000000e+00> : vector<8xf32>
    %330 = vector.multi_reduction <add>, %325, %cst_151 [1] : vector<8x32xf32> to vector<8xf32>
    %331 = vector.shape_cast %330 : vector<8xf32> to vector<8x1xf32>
    %cst_152 = arith.constant 3.200000e+01 : f32
    %332 = vector.broadcast %cst_152 : f32 to vector<8x1xf32>
    %333 = arith.divf %331, %332 : vector<8x1xf32>
    %334 = vector.broadcast %333 : vector<8x1xf32> to vector<8x32xf32>
    %335 = arith.subf %325, %334 : vector<8x32xf32>
    %336 = arith.mulf %335, %335 : vector<8x32xf32>
    %cst_153 = arith.constant dense<0.000000e+00> : vector<8xf32>
    %337 = vector.multi_reduction <add>, %336, %cst_153 [1] : vector<8x32xf32> to vector<8xf32>
    %338 = vector.shape_cast %337 : vector<8xf32> to vector<8x1xf32>
    %cst_154 = arith.constant 3.200000e+01 : f32
    %339 = vector.broadcast %cst_154 : f32 to vector<8x1xf32>
    %340 = arith.divf %338, %339 : vector<8x1xf32>
    %341 = vector.broadcast %333 : vector<8x1xf32> to vector<8x32xf32>
    %342 = arith.subf %325, %341 : vector<8x32xf32>
    %cst_155 = arith.constant 9.99999974E-6 : f32
    %343 = vector.broadcast %cst_155 : f32 to vector<8x1xf32>
    %344 = arith.addf %340, %343 : vector<8x1xf32>
    %345 = math.rsqrt %344 : vector<8x1xf32>
    %346 = vector.broadcast %345 : vector<8x1xf32> to vector<8x32xf32>
    %347 = arith.mulf %342, %346 : vector<8x32xf32>
    %348 = vector.broadcast %327 : vector<1x32xf32> to vector<8x32xf32>
    %349 = arith.mulf %347, %348 : vector<8x32xf32>
    %350 = vector.broadcast %329 : vector<1x32xf32> to vector<8x32xf32>
    %351 = arith.addf %349, %350 : vector<8x32xf32>
    %c2_156 = arith.constant 2 : index
    %c0_157 = arith.constant 0 : index
    %c0_158 = arith.constant 0 : index
    %352 = vector.load %arg8[%c2_156, %c0_157, %c0_158] : memref<4x32x96xf32, #tpu.memory_space<vmem>>, vector<1x32x96xf32>
    %353 = vector.shape_cast %352 : vector<1x32x96xf32> to vector<32x96xf32>
    %cst_159 = arith.constant dense<0.000000e+00> : vector<8x96xf32>
    %354 = tpu.matmul %351, %353, %cst_159 {dimension_numbers = #tpu.dot_dimension_numbers<[1], [0], [0], [1], [0, 0, 1, 1], [], []>} : vector<8x32xf32>, vector<32x96xf32>, vector<8x96xf32> -> vector<8x96xf32>
    %355 = vector.extract_strided_slice %354 {offsets = [0, 0], sizes = [8, 32], strides = [1, 1]} : vector<8x96xf32> to vector<8x32xf32>
    %356 = vector.extract_strided_slice %354 {offsets = [0, 32], sizes = [8, 32], strides = [1, 1]} : vector<8x96xf32> to vector<8x32xf32>
    %357 = vector.extract_strided_slice %354 {offsets = [0, 64], sizes = [8, 32], strides = [1, 1]} : vector<8x96xf32> to vector<8x32xf32>
    %cst_160 = arith.constant 0.000000e+00 : f32
    %358 = vector.broadcast %cst_160 : f32 to vector<8x32xf32>
    %c0_161 = arith.constant 0 : index
    %c0_162 = arith.constant 0 : index
    %c0_163 = arith.constant 0 : index
    %359 = vector.load %arg5[%c0_161, %c0_162, %c0_163] : memref<4x1x32xf32, #tpu.memory_space<vmem>>, vector<1x1x32xf32>
    %360 = vector.shape_cast %359 : vector<1x1x32xf32> to vector<1x32xf32>
    %361 = vector.broadcast %360 : vector<1x32xf32> to vector<8x32xf32>
    %362 = arith.mulf %355, %361 : vector<8x32xf32>
    %cst_164 = arith.constant dense<0.000000e+00> : vector<8x8xf32>
    %363 = tpu.matmul %362, %356, %cst_164 {dimension_numbers = #tpu.dot_dimension_numbers<[1], [1], [0], [0], [0, 0, 1, 0], [], []>} : vector<8x32xf32>, vector<8x32xf32>, vector<8x8xf32> -> vector<8x8xf32>
    %364 = arith.addf %363, %11 : vector<8x8xf32>
    %cst_165 = arith.constant dense<0xFF800000> : vector<8xf32>
    %365 = vector.multi_reduction <maximumf>, %364, %cst_165 [1] : vector<8x8xf32> to vector<8xf32>
    %366 = vector.shape_cast %365 : vector<8xf32> to vector<8x1xf32>
    %367 = vector.broadcast %366 : vector<8x1xf32> to vector<8x8xf32>
    %368 = arith.subf %364, %367 : vector<8x8xf32>
    %369 = math.exp %368 : vector<8x8xf32>
    %cst_166 = arith.constant dense<0.000000e+00> : vector<8xf32>
    %370 = vector.multi_reduction <add>, %369, %cst_166 [1] : vector<8x8xf32> to vector<8xf32>
    %371 = vector.shape_cast %370 : vector<8xf32> to vector<8x1xf32>
    %372 = tpu.reciprocal %371 {approx = true} : vector<8x1xf32> -> vector<8x1xf32>
    %373 = vector.broadcast %372 : vector<8x1xf32> to vector<8x8xf32>
    %374 = arith.mulf %369, %373 : vector<8x8xf32>
    %375 = vector.broadcast %360 : vector<1x32xf32> to vector<8x32xf32>
    %376 = arith.mulf %357, %375 : vector<8x32xf32>
    %cst_167 = arith.constant dense<0.000000e+00> : vector<8x32xf32>
    %377 = tpu.matmul %374, %376, %cst_167 {dimension_numbers = #tpu.dot_dimension_numbers<[1], [0], [0], [1], [0, 0, 1, 1], [], []>} : vector<8x8xf32>, vector<8x32xf32>, vector<8x32xf32> -> vector<8x32xf32>
    %378 = arith.addf %358, %377 : vector<8x32xf32>
    %c1_168 = arith.constant 1 : index
    %c0_169 = arith.constant 0 : index
    %c0_170 = arith.constant 0 : index
    %379 = vector.load %arg5[%c1_168, %c0_169, %c0_170] : memref<4x1x32xf32, #tpu.memory_space<vmem>>, vector<1x1x32xf32>
    %380 = vector.shape_cast %379 : vector<1x1x32xf32> to vector<1x32xf32>
    %381 = vector.broadcast %380 : vector<1x32xf32> to vector<8x32xf32>
    %382 = arith.mulf %355, %381 : vector<8x32xf32>
    %cst_171 = arith.constant dense<0.000000e+00> : vector<8x8xf32>
    %383 = tpu.matmul %382, %356, %cst_171 {dimension_numbers = #tpu.dot_dimension_numbers<[1], [1], [0], [0], [0, 0, 1, 0], [], []>} : vector<8x32xf32>, vector<8x32xf32>, vector<8x8xf32> -> vector<8x8xf32>
    %384 = arith.addf %383, %11 : vector<8x8xf32>
    %cst_172 = arith.constant dense<0xFF800000> : vector<8xf32>
    %385 = vector.multi_reduction <maximumf>, %384, %cst_172 [1] : vector<8x8xf32> to vector<8xf32>
    %386 = vector.shape_cast %385 : vector<8xf32> to vector<8x1xf32>
    %387 = vector.broadcast %386 : vector<8x1xf32> to vector<8x8xf32>
    %388 = arith.subf %384, %387 : vector<8x8xf32>
    %389 = math.exp %388 : vector<8x8xf32>
    %cst_173 = arith.constant dense<0.000000e+00> : vector<8xf32>
    %390 = vector.multi_reduction <add>, %389, %cst_173 [1] : vector<8x8xf32> to vector<8xf32>
    %391 = vector.shape_cast %390 : vector<8xf32> to vector<8x1xf32>
    %392 = tpu.reciprocal %391 {approx = true} : vector<8x1xf32> -> vector<8x1xf32>
    %393 = vector.broadcast %392 : vector<8x1xf32> to vector<8x8xf32>
    %394 = arith.mulf %389, %393 : vector<8x8xf32>
    %395 = vector.broadcast %380 : vector<1x32xf32> to vector<8x32xf32>
    %396 = arith.mulf %357, %395 : vector<8x32xf32>
    %cst_174 = arith.constant dense<0.000000e+00> : vector<8x32xf32>
    %397 = tpu.matmul %394, %396, %cst_174 {dimension_numbers = #tpu.dot_dimension_numbers<[1], [0], [0], [1], [0, 0, 1, 1], [], []>} : vector<8x8xf32>, vector<8x32xf32>, vector<8x32xf32> -> vector<8x32xf32>
    %398 = arith.addf %378, %397 : vector<8x32xf32>
    %c2_175 = arith.constant 2 : index
    %c0_176 = arith.constant 0 : index
    %c0_177 = arith.constant 0 : index
    %399 = vector.load %arg5[%c2_175, %c0_176, %c0_177] : memref<4x1x32xf32, #tpu.memory_space<vmem>>, vector<1x1x32xf32>
    %400 = vector.shape_cast %399 : vector<1x1x32xf32> to vector<1x32xf32>
    %401 = vector.broadcast %400 : vector<1x32xf32> to vector<8x32xf32>
    %402 = arith.mulf %355, %401 : vector<8x32xf32>
    %cst_178 = arith.constant dense<0.000000e+00> : vector<8x8xf32>
    %403 = tpu.matmul %402, %356, %cst_178 {dimension_numbers = #tpu.dot_dimension_numbers<[1], [1], [0], [0], [0, 0, 1, 0], [], []>} : vector<8x32xf32>, vector<8x32xf32>, vector<8x8xf32> -> vector<8x8xf32>
    %404 = arith.addf %403, %11 : vector<8x8xf32>
    %cst_179 = arith.constant dense<0xFF800000> : vector<8xf32>
    %405 = vector.multi_reduction <maximumf>, %404, %cst_179 [1] : vector<8x8xf32> to vector<8xf32>
    %406 = vector.shape_cast %405 : vector<8xf32> to vector<8x1xf32>
    %407 = vector.broadcast %406 : vector<8x1xf32> to vector<8x8xf32>
    %408 = arith.subf %404, %407 : vector<8x8xf32>
    %409 = math.exp %408 : vector<8x8xf32>
    %cst_180 = arith.constant dense<0.000000e+00> : vector<8xf32>
    %410 = vector.multi_reduction <add>, %409, %cst_180 [1] : vector<8x8xf32> to vector<8xf32>
    %411 = vector.shape_cast %410 : vector<8xf32> to vector<8x1xf32>
    %412 = tpu.reciprocal %411 {approx = true} : vector<8x1xf32> -> vector<8x1xf32>
    %413 = vector.broadcast %412 : vector<8x1xf32> to vector<8x8xf32>
    %414 = arith.mulf %409, %413 : vector<8x8xf32>
    %415 = vector.broadcast %400 : vector<1x32xf32> to vector<8x32xf32>
    %416 = arith.mulf %357, %415 : vector<8x32xf32>
    %cst_181 = arith.constant dense<0.000000e+00> : vector<8x32xf32>
    %417 = tpu.matmul %414, %416, %cst_181 {dimension_numbers = #tpu.dot_dimension_numbers<[1], [0], [0], [1], [0, 0, 1, 1], [], []>} : vector<8x8xf32>, vector<8x32xf32>, vector<8x32xf32> -> vector<8x32xf32>
    %418 = arith.addf %398, %417 : vector<8x32xf32>
    %c3_182 = arith.constant 3 : index
    %c0_183 = arith.constant 0 : index
    %c0_184 = arith.constant 0 : index
    %419 = vector.load %arg5[%c3_182, %c0_183, %c0_184] : memref<4x1x32xf32, #tpu.memory_space<vmem>>, vector<1x1x32xf32>
    %420 = vector.shape_cast %419 : vector<1x1x32xf32> to vector<1x32xf32>
    %421 = vector.broadcast %420 : vector<1x32xf32> to vector<8x32xf32>
    %422 = arith.mulf %355, %421 : vector<8x32xf32>
    %cst_185 = arith.constant dense<0.000000e+00> : vector<8x8xf32>
    %423 = tpu.matmul %422, %356, %cst_185 {dimension_numbers = #tpu.dot_dimension_numbers<[1], [1], [0], [0], [0, 0, 1, 0], [], []>} : vector<8x32xf32>, vector<8x32xf32>, vector<8x8xf32> -> vector<8x8xf32>
    %424 = arith.addf %423, %11 : vector<8x8xf32>
    %cst_186 = arith.constant dense<0xFF800000> : vector<8xf32>
    %425 = vector.multi_reduction <maximumf>, %424, %cst_186 [1] : vector<8x8xf32> to vector<8xf32>
    %426 = vector.shape_cast %425 : vector<8xf32> to vector<8x1xf32>
    %427 = vector.broadcast %426 : vector<8x1xf32> to vector<8x8xf32>
    %428 = arith.subf %424, %427 : vector<8x8xf32>
    %429 = math.exp %428 : vector<8x8xf32>
    %cst_187 = arith.constant dense<0.000000e+00> : vector<8xf32>
    %430 = vector.multi_reduction <add>, %429, %cst_187 [1] : vector<8x8xf32> to vector<8xf32>
    %431 = vector.shape_cast %430 : vector<8xf32> to vector<8x1xf32>
    %432 = tpu.reciprocal %431 {approx = true} : vector<8x1xf32> -> vector<8x1xf32>
    %433 = vector.broadcast %432 : vector<8x1xf32> to vector<8x8xf32>
    %434 = arith.mulf %429, %433 : vector<8x8xf32>
    %435 = vector.broadcast %420 : vector<1x32xf32> to vector<8x32xf32>
    %436 = arith.mulf %357, %435 : vector<8x32xf32>
    %cst_188 = arith.constant dense<0.000000e+00> : vector<8x32xf32>
    %437 = tpu.matmul %434, %436, %cst_188 {dimension_numbers = #tpu.dot_dimension_numbers<[1], [0], [0], [1], [0, 0, 1, 1], [], []>} : vector<8x8xf32>, vector<8x32xf32>, vector<8x32xf32> -> vector<8x32xf32>
    %438 = arith.addf %418, %437 : vector<8x32xf32>
    %439 = arith.addf %325, %438 : vector<8x32xf32>
    %c2_189 = arith.constant 2 : index
    %c0_190 = arith.constant 0 : index
    %c0_191 = arith.constant 0 : index
    %440 = vector.load %arg9[%c2_189, %c0_190, %c0_191] : memref<4x1x32xf32, #tpu.memory_space<vmem>>, vector<1x1x32xf32>
    %441 = vector.shape_cast %440 : vector<1x1x32xf32> to vector<1x32xf32>
    %c2_192 = arith.constant 2 : index
    %c0_193 = arith.constant 0 : index
    %c0_194 = arith.constant 0 : index
    %442 = vector.load %arg10[%c2_192, %c0_193, %c0_194] : memref<4x1x32xf32, #tpu.memory_space<vmem>>, vector<1x1x32xf32>
    %443 = vector.shape_cast %442 : vector<1x1x32xf32> to vector<1x32xf32>
    %cst_195 = arith.constant dense<0.000000e+00> : vector<8xf32>
    %444 = vector.multi_reduction <add>, %439, %cst_195 [1] : vector<8x32xf32> to vector<8xf32>
    %445 = vector.shape_cast %444 : vector<8xf32> to vector<8x1xf32>
    %cst_196 = arith.constant 3.200000e+01 : f32
    %446 = vector.broadcast %cst_196 : f32 to vector<8x1xf32>
    %447 = arith.divf %445, %446 : vector<8x1xf32>
    %448 = vector.broadcast %447 : vector<8x1xf32> to vector<8x32xf32>
    %449 = arith.subf %439, %448 : vector<8x32xf32>
    %450 = arith.mulf %449, %449 : vector<8x32xf32>
    %cst_197 = arith.constant dense<0.000000e+00> : vector<8xf32>
    %451 = vector.multi_reduction <add>, %450, %cst_197 [1] : vector<8x32xf32> to vector<8xf32>
    %452 = vector.shape_cast %451 : vector<8xf32> to vector<8x1xf32>
    %cst_198 = arith.constant 3.200000e+01 : f32
    %453 = vector.broadcast %cst_198 : f32 to vector<8x1xf32>
    %454 = arith.divf %452, %453 : vector<8x1xf32>
    %455 = vector.broadcast %447 : vector<8x1xf32> to vector<8x32xf32>
    %456 = arith.subf %439, %455 : vector<8x32xf32>
    %cst_199 = arith.constant 9.99999974E-6 : f32
    %457 = vector.broadcast %cst_199 : f32 to vector<8x1xf32>
    %458 = arith.addf %454, %457 : vector<8x1xf32>
    %459 = math.rsqrt %458 : vector<8x1xf32>
    %460 = vector.broadcast %459 : vector<8x1xf32> to vector<8x32xf32>
    %461 = arith.mulf %456, %460 : vector<8x32xf32>
    %462 = vector.broadcast %441 : vector<1x32xf32> to vector<8x32xf32>
    %463 = arith.mulf %461, %462 : vector<8x32xf32>
    %464 = vector.broadcast %443 : vector<1x32xf32> to vector<8x32xf32>
    %465 = arith.addf %463, %464 : vector<8x32xf32>
    %c2_200 = arith.constant 2 : index
    %c0_201 = arith.constant 0 : index
    %c0_202 = arith.constant 0 : index
    %466 = vector.load %arg11[%c2_200, %c0_201, %c0_202] : memref<4x32x128xf32, #tpu.memory_space<vmem>>, vector<1x32x128xf32>
    %467 = vector.shape_cast %466 : vector<1x32x128xf32> to vector<32x128xf32>
    %cst_203 = arith.constant dense<0.000000e+00> : vector<8x128xf32>
    %468 = tpu.matmul %465, %467, %cst_203 {dimension_numbers = #tpu.dot_dimension_numbers<[1], [0], [0], [1], [0, 0, 1, 1], [], []>} : vector<8x32xf32>, vector<32x128xf32>, vector<8x128xf32> -> vector<8x128xf32>
    %c2_204 = arith.constant 2 : index
    %c0_205 = arith.constant 0 : index
    %c0_206 = arith.constant 0 : index
    %469 = vector.load %arg12[%c2_204, %c0_205, %c0_206] : memref<4x1x128xf32, #tpu.memory_space<vmem>>, vector<1x1x128xf32>
    %470 = vector.shape_cast %469 : vector<1x1x128xf32> to vector<1x128xf32>
    %471 = vector.broadcast %470 : vector<1x128xf32> to vector<8x128xf32>
    %472 = arith.addf %468, %471 : vector<8x128xf32>
    %cst_207 = arith.constant 0.000000e+00 : f32
    %473 = vector.broadcast %cst_207 : f32 to vector<8x128xf32>
    %474 = arith.maximumf %472, %473 : vector<8x128xf32>
    %c2_208 = arith.constant 2 : index
    %c0_209 = arith.constant 0 : index
    %c0_210 = arith.constant 0 : index
    %475 = vector.load %arg13[%c2_208, %c0_209, %c0_210] : memref<4x128x32xf32, #tpu.memory_space<vmem>>, vector<1x128x32xf32>
    %476 = vector.shape_cast %475 : vector<1x128x32xf32> to vector<128x32xf32>
    %cst_211 = arith.constant dense<0.000000e+00> : vector<8x32xf32>
    %477 = tpu.matmul %474, %476, %cst_211 {dimension_numbers = #tpu.dot_dimension_numbers<[1], [0], [0], [1], [0, 0, 1, 1], [], []>} : vector<8x128xf32>, vector<128x32xf32>, vector<8x32xf32> -> vector<8x32xf32>
    %478 = arith.addf %439, %477 : vector<8x32xf32>
    %c2_212 = arith.constant 2 : index
    %c0_213 = arith.constant 0 : index
    %c0_214 = arith.constant 0 : index
    %479 = vector.load %arg14[%c2_212, %c0_213, %c0_214] : memref<4x1x32xf32, #tpu.memory_space<vmem>>, vector<1x1x32xf32>
    %480 = vector.shape_cast %479 : vector<1x1x32xf32> to vector<1x32xf32>
    %481 = vector.broadcast %480 : vector<1x32xf32> to vector<8x32xf32>
    %482 = arith.addf %478, %481 : vector<8x32xf32>
    %c3_215 = arith.constant 3 : index
    %c0_216 = arith.constant 0 : index
    %c0_217 = arith.constant 0 : index
    %483 = vector.load %arg6[%c3_215, %c0_216, %c0_217] : memref<4x1x32xf32, #tpu.memory_space<vmem>>, vector<1x1x32xf32>
    %484 = vector.shape_cast %483 : vector<1x1x32xf32> to vector<1x32xf32>
    %c3_218 = arith.constant 3 : index
    %c0_219 = arith.constant 0 : index
    %c0_220 = arith.constant 0 : index
    %485 = vector.load %arg7[%c3_218, %c0_219, %c0_220] : memref<4x1x32xf32, #tpu.memory_space<vmem>>, vector<1x1x32xf32>
    %486 = vector.shape_cast %485 : vector<1x1x32xf32> to vector<1x32xf32>
    %cst_221 = arith.constant dense<0.000000e+00> : vector<8xf32>
    %487 = vector.multi_reduction <add>, %482, %cst_221 [1] : vector<8x32xf32> to vector<8xf32>
    %488 = vector.shape_cast %487 : vector<8xf32> to vector<8x1xf32>
    %cst_222 = arith.constant 3.200000e+01 : f32
    %489 = vector.broadcast %cst_222 : f32 to vector<8x1xf32>
    %490 = arith.divf %488, %489 : vector<8x1xf32>
    %491 = vector.broadcast %490 : vector<8x1xf32> to vector<8x32xf32>
    %492 = arith.subf %482, %491 : vector<8x32xf32>
    %493 = arith.mulf %492, %492 : vector<8x32xf32>
    %cst_223 = arith.constant dense<0.000000e+00> : vector<8xf32>
    %494 = vector.multi_reduction <add>, %493, %cst_223 [1] : vector<8x32xf32> to vector<8xf32>
    %495 = vector.shape_cast %494 : vector<8xf32> to vector<8x1xf32>
    %cst_224 = arith.constant 3.200000e+01 : f32
    %496 = vector.broadcast %cst_224 : f32 to vector<8x1xf32>
    %497 = arith.divf %495, %496 : vector<8x1xf32>
    %498 = vector.broadcast %490 : vector<8x1xf32> to vector<8x32xf32>
    %499 = arith.subf %482, %498 : vector<8x32xf32>
    %cst_225 = arith.constant 9.99999974E-6 : f32
    %500 = vector.broadcast %cst_225 : f32 to vector<8x1xf32>
    %501 = arith.addf %497, %500 : vector<8x1xf32>
    %502 = math.rsqrt %501 : vector<8x1xf32>
    %503 = vector.broadcast %502 : vector<8x1xf32> to vector<8x32xf32>
    %504 = arith.mulf %499, %503 : vector<8x32xf32>
    %505 = vector.broadcast %484 : vector<1x32xf32> to vector<8x32xf32>
    %506 = arith.mulf %504, %505 : vector<8x32xf32>
    %507 = vector.broadcast %486 : vector<1x32xf32> to vector<8x32xf32>
    %508 = arith.addf %506, %507 : vector<8x32xf32>
    %c3_226 = arith.constant 3 : index
    %c0_227 = arith.constant 0 : index
    %c0_228 = arith.constant 0 : index
    %509 = vector.load %arg8[%c3_226, %c0_227, %c0_228] : memref<4x32x96xf32, #tpu.memory_space<vmem>>, vector<1x32x96xf32>
    %510 = vector.shape_cast %509 : vector<1x32x96xf32> to vector<32x96xf32>
    %cst_229 = arith.constant dense<0.000000e+00> : vector<8x96xf32>
    %511 = tpu.matmul %508, %510, %cst_229 {dimension_numbers = #tpu.dot_dimension_numbers<[1], [0], [0], [1], [0, 0, 1, 1], [], []>} : vector<8x32xf32>, vector<32x96xf32>, vector<8x96xf32> -> vector<8x96xf32>
    %512 = vector.extract_strided_slice %511 {offsets = [0, 0], sizes = [8, 32], strides = [1, 1]} : vector<8x96xf32> to vector<8x32xf32>
    %513 = vector.extract_strided_slice %511 {offsets = [0, 32], sizes = [8, 32], strides = [1, 1]} : vector<8x96xf32> to vector<8x32xf32>
    %514 = vector.extract_strided_slice %511 {offsets = [0, 64], sizes = [8, 32], strides = [1, 1]} : vector<8x96xf32> to vector<8x32xf32>
    %cst_230 = arith.constant 0.000000e+00 : f32
    %515 = vector.broadcast %cst_230 : f32 to vector<8x32xf32>
    %c0_231 = arith.constant 0 : index
    %c0_232 = arith.constant 0 : index
    %c0_233 = arith.constant 0 : index
    %516 = vector.load %arg5[%c0_231, %c0_232, %c0_233] : memref<4x1x32xf32, #tpu.memory_space<vmem>>, vector<1x1x32xf32>
    %517 = vector.shape_cast %516 : vector<1x1x32xf32> to vector<1x32xf32>
    %518 = vector.broadcast %517 : vector<1x32xf32> to vector<8x32xf32>
    %519 = arith.mulf %512, %518 : vector<8x32xf32>
    %cst_234 = arith.constant dense<0.000000e+00> : vector<8x8xf32>
    %520 = tpu.matmul %519, %513, %cst_234 {dimension_numbers = #tpu.dot_dimension_numbers<[1], [1], [0], [0], [0, 0, 1, 0], [], []>} : vector<8x32xf32>, vector<8x32xf32>, vector<8x8xf32> -> vector<8x8xf32>
    %521 = arith.addf %520, %11 : vector<8x8xf32>
    %cst_235 = arith.constant dense<0xFF800000> : vector<8xf32>
    %522 = vector.multi_reduction <maximumf>, %521, %cst_235 [1] : vector<8x8xf32> to vector<8xf32>
    %523 = vector.shape_cast %522 : vector<8xf32> to vector<8x1xf32>
    %524 = vector.broadcast %523 : vector<8x1xf32> to vector<8x8xf32>
    %525 = arith.subf %521, %524 : vector<8x8xf32>
    %526 = math.exp %525 : vector<8x8xf32>
    %cst_236 = arith.constant dense<0.000000e+00> : vector<8xf32>
    %527 = vector.multi_reduction <add>, %526, %cst_236 [1] : vector<8x8xf32> to vector<8xf32>
    %528 = vector.shape_cast %527 : vector<8xf32> to vector<8x1xf32>
    %529 = tpu.reciprocal %528 {approx = true} : vector<8x1xf32> -> vector<8x1xf32>
    %530 = vector.broadcast %529 : vector<8x1xf32> to vector<8x8xf32>
    %531 = arith.mulf %526, %530 : vector<8x8xf32>
    %532 = vector.broadcast %517 : vector<1x32xf32> to vector<8x32xf32>
    %533 = arith.mulf %514, %532 : vector<8x32xf32>
    %cst_237 = arith.constant dense<0.000000e+00> : vector<8x32xf32>
    %534 = tpu.matmul %531, %533, %cst_237 {dimension_numbers = #tpu.dot_dimension_numbers<[1], [0], [0], [1], [0, 0, 1, 1], [], []>} : vector<8x8xf32>, vector<8x32xf32>, vector<8x32xf32> -> vector<8x32xf32>
    %535 = arith.addf %515, %534 : vector<8x32xf32>
    %c1_238 = arith.constant 1 : index
    %c0_239 = arith.constant 0 : index
    %c0_240 = arith.constant 0 : index
    %536 = vector.load %arg5[%c1_238, %c0_239, %c0_240] : memref<4x1x32xf32, #tpu.memory_space<vmem>>, vector<1x1x32xf32>
    %537 = vector.shape_cast %536 : vector<1x1x32xf32> to vector<1x32xf32>
    %538 = vector.broadcast %537 : vector<1x32xf32> to vector<8x32xf32>
    %539 = arith.mulf %512, %538 : vector<8x32xf32>
    %cst_241 = arith.constant dense<0.000000e+00> : vector<8x8xf32>
    %540 = tpu.matmul %539, %513, %cst_241 {dimension_numbers = #tpu.dot_dimension_numbers<[1], [1], [0], [0], [0, 0, 1, 0], [], []>} : vector<8x32xf32>, vector<8x32xf32>, vector<8x8xf32> -> vector<8x8xf32>
    %541 = arith.addf %540, %11 : vector<8x8xf32>
    %cst_242 = arith.constant dense<0xFF800000> : vector<8xf32>
    %542 = vector.multi_reduction <maximumf>, %541, %cst_242 [1] : vector<8x8xf32> to vector<8xf32>
    %543 = vector.shape_cast %542 : vector<8xf32> to vector<8x1xf32>
    %544 = vector.broadcast %543 : vector<8x1xf32> to vector<8x8xf32>
    %545 = arith.subf %541, %544 : vector<8x8xf32>
    %546 = math.exp %545 : vector<8x8xf32>
    %cst_243 = arith.constant dense<0.000000e+00> : vector<8xf32>
    %547 = vector.multi_reduction <add>, %546, %cst_243 [1] : vector<8x8xf32> to vector<8xf32>
    %548 = vector.shape_cast %547 : vector<8xf32> to vector<8x1xf32>
    %549 = tpu.reciprocal %548 {approx = true} : vector<8x1xf32> -> vector<8x1xf32>
    %550 = vector.broadcast %549 : vector<8x1xf32> to vector<8x8xf32>
    %551 = arith.mulf %546, %550 : vector<8x8xf32>
    %552 = vector.broadcast %537 : vector<1x32xf32> to vector<8x32xf32>
    %553 = arith.mulf %514, %552 : vector<8x32xf32>
    %cst_244 = arith.constant dense<0.000000e+00> : vector<8x32xf32>
    %554 = tpu.matmul %551, %553, %cst_244 {dimension_numbers = #tpu.dot_dimension_numbers<[1], [0], [0], [1], [0, 0, 1, 1], [], []>} : vector<8x8xf32>, vector<8x32xf32>, vector<8x32xf32> -> vector<8x32xf32>
    %555 = arith.addf %535, %554 : vector<8x32xf32>
    %c2_245 = arith.constant 2 : index
    %c0_246 = arith.constant 0 : index
    %c0_247 = arith.constant 0 : index
    %556 = vector.load %arg5[%c2_245, %c0_246, %c0_247] : memref<4x1x32xf32, #tpu.memory_space<vmem>>, vector<1x1x32xf32>
    %557 = vector.shape_cast %556 : vector<1x1x32xf32> to vector<1x32xf32>
    %558 = vector.broadcast %557 : vector<1x32xf32> to vector<8x32xf32>
    %559 = arith.mulf %512, %558 : vector<8x32xf32>
    %cst_248 = arith.constant dense<0.000000e+00> : vector<8x8xf32>
    %560 = tpu.matmul %559, %513, %cst_248 {dimension_numbers = #tpu.dot_dimension_numbers<[1], [1], [0], [0], [0, 0, 1, 0], [], []>} : vector<8x32xf32>, vector<8x32xf32>, vector<8x8xf32> -> vector<8x8xf32>
    %561 = arith.addf %560, %11 : vector<8x8xf32>
    %cst_249 = arith.constant dense<0xFF800000> : vector<8xf32>
    %562 = vector.multi_reduction <maximumf>, %561, %cst_249 [1] : vector<8x8xf32> to vector<8xf32>
    %563 = vector.shape_cast %562 : vector<8xf32> to vector<8x1xf32>
    %564 = vector.broadcast %563 : vector<8x1xf32> to vector<8x8xf32>
    %565 = arith.subf %561, %564 : vector<8x8xf32>
    %566 = math.exp %565 : vector<8x8xf32>
    %cst_250 = arith.constant dense<0.000000e+00> : vector<8xf32>
    %567 = vector.multi_reduction <add>, %566, %cst_250 [1] : vector<8x8xf32> to vector<8xf32>
    %568 = vector.shape_cast %567 : vector<8xf32> to vector<8x1xf32>
    %569 = tpu.reciprocal %568 {approx = true} : vector<8x1xf32> -> vector<8x1xf32>
    %570 = vector.broadcast %569 : vector<8x1xf32> to vector<8x8xf32>
    %571 = arith.mulf %566, %570 : vector<8x8xf32>
    %572 = vector.broadcast %557 : vector<1x32xf32> to vector<8x32xf32>
    %573 = arith.mulf %514, %572 : vector<8x32xf32>
    %cst_251 = arith.constant dense<0.000000e+00> : vector<8x32xf32>
    %574 = tpu.matmul %571, %573, %cst_251 {dimension_numbers = #tpu.dot_dimension_numbers<[1], [0], [0], [1], [0, 0, 1, 1], [], []>} : vector<8x8xf32>, vector<8x32xf32>, vector<8x32xf32> -> vector<8x32xf32>
    %575 = arith.addf %555, %574 : vector<8x32xf32>
    %c3_252 = arith.constant 3 : index
    %c0_253 = arith.constant 0 : index
    %c0_254 = arith.constant 0 : index
    %576 = vector.load %arg5[%c3_252, %c0_253, %c0_254] : memref<4x1x32xf32, #tpu.memory_space<vmem>>, vector<1x1x32xf32>
    %577 = vector.shape_cast %576 : vector<1x1x32xf32> to vector<1x32xf32>
    %578 = vector.broadcast %577 : vector<1x32xf32> to vector<8x32xf32>
    %579 = arith.mulf %512, %578 : vector<8x32xf32>
    %cst_255 = arith.constant dense<0.000000e+00> : vector<8x8xf32>
    %580 = tpu.matmul %579, %513, %cst_255 {dimension_numbers = #tpu.dot_dimension_numbers<[1], [1], [0], [0], [0, 0, 1, 0], [], []>} : vector<8x32xf32>, vector<8x32xf32>, vector<8x8xf32> -> vector<8x8xf32>
    %581 = arith.addf %580, %11 : vector<8x8xf32>
    %cst_256 = arith.constant dense<0xFF800000> : vector<8xf32>
    %582 = vector.multi_reduction <maximumf>, %581, %cst_256 [1] : vector<8x8xf32> to vector<8xf32>
    %583 = vector.shape_cast %582 : vector<8xf32> to vector<8x1xf32>
    %584 = vector.broadcast %583 : vector<8x1xf32> to vector<8x8xf32>
    %585 = arith.subf %581, %584 : vector<8x8xf32>
    %586 = math.exp %585 : vector<8x8xf32>
    %cst_257 = arith.constant dense<0.000000e+00> : vector<8xf32>
    %587 = vector.multi_reduction <add>, %586, %cst_257 [1] : vector<8x8xf32> to vector<8xf32>
    %588 = vector.shape_cast %587 : vector<8xf32> to vector<8x1xf32>
    %589 = tpu.reciprocal %588 {approx = true} : vector<8x1xf32> -> vector<8x1xf32>
    %590 = vector.broadcast %589 : vector<8x1xf32> to vector<8x8xf32>
    %591 = arith.mulf %586, %590 : vector<8x8xf32>
    %592 = vector.broadcast %577 : vector<1x32xf32> to vector<8x32xf32>
    %593 = arith.mulf %514, %592 : vector<8x32xf32>
    %cst_258 = arith.constant dense<0.000000e+00> : vector<8x32xf32>
    %594 = tpu.matmul %591, %593, %cst_258 {dimension_numbers = #tpu.dot_dimension_numbers<[1], [0], [0], [1], [0, 0, 1, 1], [], []>} : vector<8x8xf32>, vector<8x32xf32>, vector<8x32xf32> -> vector<8x32xf32>
    %595 = arith.addf %575, %594 : vector<8x32xf32>
    %596 = arith.addf %482, %595 : vector<8x32xf32>
    %c3_259 = arith.constant 3 : index
    %c0_260 = arith.constant 0 : index
    %c0_261 = arith.constant 0 : index
    %597 = vector.load %arg9[%c3_259, %c0_260, %c0_261] : memref<4x1x32xf32, #tpu.memory_space<vmem>>, vector<1x1x32xf32>
    %598 = vector.shape_cast %597 : vector<1x1x32xf32> to vector<1x32xf32>
    %c3_262 = arith.constant 3 : index
    %c0_263 = arith.constant 0 : index
    %c0_264 = arith.constant 0 : index
    %599 = vector.load %arg10[%c3_262, %c0_263, %c0_264] : memref<4x1x32xf32, #tpu.memory_space<vmem>>, vector<1x1x32xf32>
    %600 = vector.shape_cast %599 : vector<1x1x32xf32> to vector<1x32xf32>
    %cst_265 = arith.constant dense<0.000000e+00> : vector<8xf32>
    %601 = vector.multi_reduction <add>, %596, %cst_265 [1] : vector<8x32xf32> to vector<8xf32>
    %602 = vector.shape_cast %601 : vector<8xf32> to vector<8x1xf32>
    %cst_266 = arith.constant 3.200000e+01 : f32
    %603 = vector.broadcast %cst_266 : f32 to vector<8x1xf32>
    %604 = arith.divf %602, %603 : vector<8x1xf32>
    %605 = vector.broadcast %604 : vector<8x1xf32> to vector<8x32xf32>
    %606 = arith.subf %596, %605 : vector<8x32xf32>
    %607 = arith.mulf %606, %606 : vector<8x32xf32>
    %cst_267 = arith.constant dense<0.000000e+00> : vector<8xf32>
    %608 = vector.multi_reduction <add>, %607, %cst_267 [1] : vector<8x32xf32> to vector<8xf32>
    %609 = vector.shape_cast %608 : vector<8xf32> to vector<8x1xf32>
    %cst_268 = arith.constant 3.200000e+01 : f32
    %610 = vector.broadcast %cst_268 : f32 to vector<8x1xf32>
    %611 = arith.divf %609, %610 : vector<8x1xf32>
    %612 = vector.broadcast %604 : vector<8x1xf32> to vector<8x32xf32>
    %613 = arith.subf %596, %612 : vector<8x32xf32>
    %cst_269 = arith.constant 9.99999974E-6 : f32
    %614 = vector.broadcast %cst_269 : f32 to vector<8x1xf32>
    %615 = arith.addf %611, %614 : vector<8x1xf32>
    %616 = math.rsqrt %615 : vector<8x1xf32>
    %617 = vector.broadcast %616 : vector<8x1xf32> to vector<8x32xf32>
    %618 = arith.mulf %613, %617 : vector<8x32xf32>
    %619 = vector.broadcast %598 : vector<1x32xf32> to vector<8x32xf32>
    %620 = arith.mulf %618, %619 : vector<8x32xf32>
    %621 = vector.broadcast %600 : vector<1x32xf32> to vector<8x32xf32>
    %622 = arith.addf %620, %621 : vector<8x32xf32>
    %c3_270 = arith.constant 3 : index
    %c0_271 = arith.constant 0 : index
    %c0_272 = arith.constant 0 : index
    %623 = vector.load %arg11[%c3_270, %c0_271, %c0_272] : memref<4x32x128xf32, #tpu.memory_space<vmem>>, vector<1x32x128xf32>
    %624 = vector.shape_cast %623 : vector<1x32x128xf32> to vector<32x128xf32>
    %cst_273 = arith.constant dense<0.000000e+00> : vector<8x128xf32>
    %625 = tpu.matmul %622, %624, %cst_273 {dimension_numbers = #tpu.dot_dimension_numbers<[1], [0], [0], [1], [0, 0, 1, 1], [], []>} : vector<8x32xf32>, vector<32x128xf32>, vector<8x128xf32> -> vector<8x128xf32>
    %c3_274 = arith.constant 3 : index
    %c0_275 = arith.constant 0 : index
    %c0_276 = arith.constant 0 : index
    %626 = vector.load %arg12[%c3_274, %c0_275, %c0_276] : memref<4x1x128xf32, #tpu.memory_space<vmem>>, vector<1x1x128xf32>
    %627 = vector.shape_cast %626 : vector<1x1x128xf32> to vector<1x128xf32>
    %628 = vector.broadcast %627 : vector<1x128xf32> to vector<8x128xf32>
    %629 = arith.addf %625, %628 : vector<8x128xf32>
    %cst_277 = arith.constant 0.000000e+00 : f32
    %630 = vector.broadcast %cst_277 : f32 to vector<8x128xf32>
    %631 = arith.maximumf %629, %630 : vector<8x128xf32>
    %c3_278 = arith.constant 3 : index
    %c0_279 = arith.constant 0 : index
    %c0_280 = arith.constant 0 : index
    %632 = vector.load %arg13[%c3_278, %c0_279, %c0_280] : memref<4x128x32xf32, #tpu.memory_space<vmem>>, vector<1x128x32xf32>
    %633 = vector.shape_cast %632 : vector<1x128x32xf32> to vector<128x32xf32>
    %cst_281 = arith.constant dense<0.000000e+00> : vector<8x32xf32>
    %634 = tpu.matmul %631, %633, %cst_281 {dimension_numbers = #tpu.dot_dimension_numbers<[1], [0], [0], [1], [0, 0, 1, 1], [], []>} : vector<8x128xf32>, vector<128x32xf32>, vector<8x32xf32> -> vector<8x32xf32>
    %635 = arith.addf %596, %634 : vector<8x32xf32>
    %c3_282 = arith.constant 3 : index
    %c0_283 = arith.constant 0 : index
    %c0_284 = arith.constant 0 : index
    %636 = vector.load %arg14[%c3_282, %c0_283, %c0_284] : memref<4x1x32xf32, #tpu.memory_space<vmem>>, vector<1x1x32xf32>
    %637 = vector.shape_cast %636 : vector<1x1x32xf32> to vector<1x32xf32>
    %638 = vector.broadcast %637 : vector<1x32xf32> to vector<8x32xf32>
    %639 = arith.addf %635, %638 : vector<8x32xf32>
    %c0_285 = arith.constant 0 : index
    %c0_286 = arith.constant 0 : index
    %640 = vector.load %arg15[%c0_285, %c0_286] : memref<1x32xf32, #tpu.memory_space<vmem>>, vector<1x32xf32>
    %c0_287 = arith.constant 0 : index
    %c0_288 = arith.constant 0 : index
    %641 = vector.load %arg16[%c0_287, %c0_288] : memref<1x32xf32, #tpu.memory_space<vmem>>, vector<1x32xf32>
    %cst_289 = arith.constant dense<0.000000e+00> : vector<8xf32>
    %642 = vector.multi_reduction <add>, %639, %cst_289 [1] : vector<8x32xf32> to vector<8xf32>
    %643 = vector.shape_cast %642 : vector<8xf32> to vector<8x1xf32>
    %cst_290 = arith.constant 3.200000e+01 : f32
    %644 = vector.broadcast %cst_290 : f32 to vector<8x1xf32>
    %645 = arith.divf %643, %644 : vector<8x1xf32>
    %646 = vector.broadcast %645 : vector<8x1xf32> to vector<8x32xf32>
    %647 = arith.subf %639, %646 : vector<8x32xf32>
    %648 = arith.mulf %647, %647 : vector<8x32xf32>
    %cst_291 = arith.constant dense<0.000000e+00> : vector<8xf32>
    %649 = vector.multi_reduction <add>, %648, %cst_291 [1] : vector<8x32xf32> to vector<8xf32>
    %650 = vector.shape_cast %649 : vector<8xf32> to vector<8x1xf32>
    %cst_292 = arith.constant 3.200000e+01 : f32
    %651 = vector.broadcast %cst_292 : f32 to vector<8x1xf32>
    %652 = arith.divf %650, %651 : vector<8x1xf32>
    %653 = vector.broadcast %645 : vector<8x1xf32> to vector<8x32xf32>
    %654 = arith.subf %639, %653 : vector<8x32xf32>
    %cst_293 = arith.constant 9.99999974E-6 : f32
    %655 = vector.broadcast %cst_293 : f32 to vector<8x1xf32>
    %656 = arith.addf %652, %655 : vector<8x1xf32>
    %657 = math.rsqrt %656 : vector<8x1xf32>
    %658 = vector.broadcast %657 : vector<8x1xf32> to vector<8x32xf32>
    %659 = arith.mulf %654, %658 : vector<8x32xf32>
    %660 = vector.broadcast %640 : vector<1x32xf32> to vector<8x32xf32>
    %661 = arith.mulf %659, %660 : vector<8x32xf32>
    %662 = vector.broadcast %641 : vector<1x32xf32> to vector<8x32xf32>
    %663 = arith.addf %661, %662 : vector<8x32xf32>
    %c0_294 = arith.constant 0 : index
    %c0_295 = arith.constant 0 : index
    %664 = vector.load %arg17[%c0_294, %c0_295] : memref<32x128xf32, #tpu.memory_space<vmem>>, vector<32x128xf32>
    %cst_296 = arith.constant dense<0.000000e+00> : vector<8x128xf32>
    %665 = tpu.matmul %663, %664, %cst_296 {dimension_numbers = #tpu.dot_dimension_numbers<[1], [0], [0], [1], [0, 0, 1, 1], [], []>} : vector<8x32xf32>, vector<32x128xf32>, vector<8x128xf32> -> vector<8x128xf32>
    %c0_297 = arith.constant 0 : index
    %c0_298 = arith.constant 0 : index
    %666 = vector.load %arg18[%c0_297, %c0_298] : memref<1x128xf32, #tpu.memory_space<vmem>>, vector<1x128xf32>
    %667 = vector.broadcast %666 : vector<1x128xf32> to vector<8x128xf32>
    %668 = arith.addf %665, %667 : vector<8x128xf32>
    %c0_299 = arith.constant 0 : index
    %c0_300 = arith.constant 0 : index
    %c0_301 = arith.constant 0 : index
    %669 = vector.load %arg19[%c0_299, %c0_300, %c0_301] : memref<1x8x128xf32, #tpu.memory_space<vmem>>, vector<1x8x128xf32>
    %670 = vector.shape_cast %669 : vector<1x8x128xf32> to vector<8x128xf32>
    %671 = vector.shape_cast %668 : vector<8x128xf32> to vector<1x8x128xf32>
    tpu.vector_store %arg19[%c0_299, %c0_300, %c0_301], %671 {strides = array<i32>} : memref<1x8x128xf32, #tpu.memory_space<vmem>>, vector<1x8x128xf32>,
    return
  }
  func.func @transform_0(%arg0: i32) -> (i32, i32, i32) {
    %c0_i32 = arith.constant 0 : i32
    %c0_i32_0 = arith.constant 0 : i32
    %c0_i32_1 = arith.constant 0 : i32
    return %arg0, %c0_i32, %c0_i32_0 : i32, i32, i32
  }
  func.func @transform_1(%arg0: i32) -> (i32, i32) {
    %c0_i32 = arith.constant 0 : i32
    %c0_i32_0 = arith.constant 0 : i32
    %c0_i32_1 = arith.constant 0 : i32
    return %c0_i32, %c0_i32_0 : i32, i32
  }
  func.func @transform_2(%arg0: i32) -> (i32, i32) {
    %c0_i32 = arith.constant 0 : i32
    %c0_i32_0 = arith.constant 0 : i32
    %c0_i32_1 = arith.constant 0 : i32
    return %c0_i32, %c0_i32_0 : i32, i32
  }
  func.func @transform_3(%arg0: i32) -> (i32, i32) {
    %c0_i32 = arith.constant 0 : i32
    %c0_i32_0 = arith.constant 0 : i32
    %c0_i32_1 = arith.constant 0 : i32
    return %c0_i32, %c0_i32_0 : i32, i32
  }
  func.func @transform_4(%arg0: i32) -> (i32, i32, i32) {
    %c0_i32 = arith.constant 0 : i32
    %c0_i32_0 = arith.constant 0 : i32
    %c0_i32_1 = arith.constant 0 : i32
    %c0_i32_2 = arith.constant 0 : i32
    return %c0_i32, %c0_i32_0, %c0_i32_1 : i32, i32, i32
  }
  func.func @transform_5(%arg0: i32) -> (i32, i32, i32) {
    %c0_i32 = arith.constant 0 : i32
    %c0_i32_0 = arith.constant 0 : i32
    %c0_i32_1 = arith.constant 0 : i32
    %c0_i32_2 = arith.constant 0 : i32
    return %c0_i32, %c0_i32_0, %c0_i32_1 : i32, i32, i32
  }
  func.func @transform_6(%arg0: i32) -> (i32, i32, i32) {
    %c0_i32 = arith.constant 0 : i32
    %c0_i32_0 = arith.constant 0 : i32
    %c0_i32_1 = arith.constant 0 : i32
    %c0_i32_2 = arith.constant 0 : i32
    return %c0_i32, %c0_i32_0, %c0_i32_1 : i32, i32, i32
  }
  func.func @transform_7(%arg0: i32) -> (i32, i32, i32) {
    %c0_i32 = arith.constant 0 : i32
    %c0_i32_0 = arith.constant 0 : i32
    %c0_i32_1 = arith.constant 0 : i32
    %c0_i32_2 = arith.constant 0 : i32
    return %c0_i32, %c0_i32_0, %c0_i32_1 : i32, i32, i32
  }
  func.func @transform_8(%arg0: i32) -> (i32, i32, i32) {
    %c0_i32 = arith.constant 0 : i32
    %c0_i32_0 = arith.constant 0 : i32
    %c0_i32_1 = arith.constant 0 : i32
    %c0_i32_2 = arith.constant 0 : i32
    return %c0_i32, %c0_i32_0, %c0_i32_1 : i32, i32, i32
  }
  func.func @transform_9(%arg0: i32) -> (i32, i32, i32) {
    %c0_i32 = arith.constant 0 : i32
    %c0_i32_0 = arith.constant 0 : i32
    %c0_i32_1 = arith.constant 0 : i32
    %c0_i32_2 = arith.constant 0 : i32
    return %c0_i32, %c0_i32_0, %c0_i32_1 : i32, i32, i32
  }
  func.func @transform_10(%arg0: i32) -> (i32, i32, i32) {
    %c0_i32 = arith.constant 0 : i32
    %c0_i32_0 = arith.constant 0 : i32
    %c0_i32_1 = arith.constant 0 : i32
    %c0_i32_2 = arith.constant 0 : i32
    return %c0_i32, %c0_i32_0, %c0_i32_1 : i32, i32, i32
  }
  func.func @transform_11(%arg0: i32) -> (i32, i32, i32) {
    %c0_i32 = arith.constant 0 : i32
    %c0_i32_0 = arith.constant 0 : i32
    %c0_i32_1 = arith.constant 0 : i32
    %c0_i32_2 = arith.constant 0 : i32
    return %c0_i32, %c0_i32_0, %c0_i32_1 : i32, i32, i32
  }
  func.func @transform_12(%arg0: i32) -> (i32, i32, i32) {
    %c0_i32 = arith.constant 0 : i32
    %c0_i32_0 = arith.constant 0 : i32
    %c0_i32_1 = arith.constant 0 : i32
    %c0_i32_2 = arith.constant 0 : i32
    return %c0_i32, %c0_i32_0, %c0_i32_1 : i32, i32, i32
  }
  func.func @transform_13(%arg0: i32) -> (i32, i32, i32) {
    %c0_i32 = arith.constant 0 : i32
    %c0_i32_0 = arith.constant 0 : i32
    %c0_i32_1 = arith.constant 0 : i32
    %c0_i32_2 = arith.constant 0 : i32
    return %c0_i32, %c0_i32_0, %c0_i32_1 : i32, i32, i32
  }
  func.func @transform_14(%arg0: i32) -> (i32, i32) {
    %c0_i32 = arith.constant 0 : i32
    %c0_i32_0 = arith.constant 0 : i32
    %c0_i32_1 = arith.constant 0 : i32
    return %c0_i32, %c0_i32_0 : i32, i32
  }
  func.func @transform_15(%arg0: i32) -> (i32, i32) {
    %c0_i32 = arith.constant 0 : i32
    %c0_i32_0 = arith.constant 0 : i32
    %c0_i32_1 = arith.constant 0 : i32
    return %c0_i32, %c0_i32_0 : i32, i32
  }
  func.func @transform_16(%arg0: i32) -> (i32, i32) {
    %c0_i32 = arith.constant 0 : i32
    %c0_i32_0 = arith.constant 0 : i32
    %c0_i32_1 = arith.constant 0 : i32
    return %c0_i32, %c0_i32_0 : i32, i32
  }
  func.func @transform_17(%arg0: i32) -> (i32, i32) {
    %c0_i32 = arith.constant 0 : i32
    %c0_i32_0 = arith.constant 0 : i32
    %c0_i32_1 = arith.constant 0 : i32
    return %c0_i32, %c0_i32_0 : i32, i32
  }
  func.func @transform_18(%arg0: i32) -> (i32, i32, i32) {
    %c0_i32 = arith.constant 0 : i32
    %c0_i32_0 = arith.constant 0 : i32
    %c0_i32_1 = arith.constant 0 : i32
    return %arg0, %c0_i32, %c0_i32_0 : i32, i32, i32
  }
}

</mosaic_0001>

<llo_original>
// kernel: small_gpt_forward.1
$region0: #{small_gpt_forward.1}
  #allocation0 [shape = 'u32[]', space=smem, size = 0x4, offset = 0x4, fixed_abs, tag = 'smem constant byte address 0x4 - core index']
  #allocation1 [shape = 'u32[144,128]{1,0:T(1,128)}', space=vmem, size = 0x12000, scoped, tag = 'internal scratch']
  %s0 = inlined_call_operand.vmem [shape: s32[2,8,1], index: 0, kind: input, shape index: {}]
  %s1 = inlined_call_operand.vmem [shape: f32[64,32], index: 1, kind: input, shape index: {}]
  %s2 = inlined_call_operand.vmem [shape: f32[8,32], index: 2, kind: input, shape index: {}]
  %s3 = inlined_call_operand.vmem [shape: f32[8,8], index: 3, kind: input, shape index: {}]
  %s4 = inlined_call_operand.vmem [shape: f32[4,1,32], index: 4, kind: input, shape index: {}]
  %s5 = inlined_call_operand.vmem [shape: f32[4,1,32], index: 5, kind: input, shape index: {}]
  %s6 = inlined_call_operand.vmem [shape: f32[4,1,32], index: 6, kind: input, shape index: {}]
  %s7 = inlined_call_operand.vmem [shape: f32[4,32,96], index: 7, kind: input, shape index: {}]
  %s8 = inlined_call_operand.vmem [shape: f32[4,1,32], index: 8, kind: input, shape index: {}]
  %s9 = inlined_call_operand.vmem [shape: f32[4,1,32], index: 9, kind: input, shape index: {}]
  %s10 = inlined_call_operand.vmem [shape: f32[4,32,128], index: 10, kind: input, shape index: {}]
  %s11 = inlined_call_operand.vmem [shape: f32[4,1,128], index: 11, kind: input, shape index: {}]
  %s12 = inlined_call_operand.vmem [shape: f32[4,128,32], index: 12, kind: input, shape index: {}]
  %s13 = inlined_call_operand.vmem [shape: f32[4,1,32], index: 13, kind: input, shape index: {}]
  %s14 = inlined_call_operand.vmem [shape: f32[1,32], index: 14, kind: input, shape index: {}]
  %s15 = inlined_call_operand.vmem [shape: f32[1,32], index: 15, kind: input, shape index: {}]
  %s16 = inlined_call_operand.vmem [shape: f32[32,128], index: 16, kind: input, shape index: {}]
  %s17 = inlined_call_operand.vmem [shape: f32[1,128], index: 17, kind: input, shape index: {}]
  %s18 = inlined_call_operand.hbm [shape: f32[2,8,128], index: 18, kind: output, shape index: {}]
  %s19 = sld [smem:[#allocation0]]
  $region105: #{small_gpt_forward.1} parent=0
    _
  %s21 = ssub.s32 1, %s19
  %s22 = scalar_select 0, %s21, %s19
  $region1: #{small_gpt_forward.1} parent=0
    #allocation2 [shape = 'u8[8192]{0}', space=vmem, size = 0x2000, scoped, tag = 'output window, operand 0']
    #allocation3 [shape = 's32[2]{0}', space=sflag, size = 0x8, scoped, tag = 'scoped memory for small_gpt_forward.1']
    %23 = vsyncpa [#allocation3], 0
    %s24 = scalar_lea.sflag [#allocation3], 1
    %25 = vsyncpa %s24, 0
    loop: start=0, step=1, limit=4
    $region2: #{small_gpt_forward.1} parent=1 // loop_pre_header
      _
    $region3: #{small_gpt_forward.1} parent=1 // loop_header
      %s27 = sphi 0, %s31
      %p28 = scmp.ge.s32.totalorder %s27, 4
      %s37 = sphi 0, %s39
      %s40 = sphi 0, %s37
      %s41 = sphi 0, %s40
      %s57 = sphi 0, %s41
      %s61 = sphi 0, %s61
      %s63 = sphi 0, %s61
      %s64 = sphi 0, %s63
      %s78 = sphi 0, %s64
      %s82 = sphi 0, %s82
      %s84 = sphi 0, %s82
      %s85 = sphi 0, %s84
      %s99 = sphi 0, %s85
      %s103 = sphi 0, %s103
      %s105 = sphi 0, %s103
      %s106 = sphi 0, %s105
      %s120 = sphi 0, %s106
      %s124 = sphi 0, %s124
      %s126 = sphi 0, %s124
      %s127 = sphi 0, %s126
      %s141 = sphi 0, %s127
      %s145 = sphi 0, %s145
      %s147 = sphi 0, %s145
      %s148 = sphi 0, %s147
      %s162 = sphi 0, %s148
      %s166 = sphi 0, %s166
      %s168 = sphi 0, %s166
      %s169 = sphi 0, %s168
      %s183 = sphi 0, %s169
      %s187 = sphi 0, %s187
      %s189 = sphi 0, %s187
      %s190 = sphi 0, %s189
      %s204 = sphi 0, %s190
      %s208 = sphi 0, %s208
      %s210 = sphi 0, %s208
      %s211 = sphi 0, %s210
      %s225 = sphi 0, %s211
      %s229 = sphi 0, %s229
      %s231 = sphi 0, %s229
      %s232 = sphi 0, %s231
      %s246 = sphi 0, %s232
      %s250 = sphi 0, %s250
      %s252 = sphi 0, %s250
      %s253 = sphi 0, %s252
      %s267 = sphi 0, %s253
      %s271 = sphi 0, %s271
      %s273 = sphi 0, %s271
      %s274 = sphi 0, %s273
      %s288 = sphi 0, %s274
      %s292 = sphi 0, %s292
      %s294 = sphi 0, %s292
      %s295 = sphi 0, %s294
      %s309 = sphi 0, %s295
      %s313 = sphi 0, %s313
      %s315 = sphi 0, %s313
      %s316 = sphi 0, %s315
      %s330 = sphi 0, %s316
      %s334 = sphi 0, %s334
      %s336 = sphi 0, %s334
      %s337 = sphi 0, %s336
      %s351 = sphi 0, %s337
      %s355 = sphi 0, %s355
      %s357 = sphi 0, %s355
      %s358 = sphi 0, %s357
      %s372 = sphi 0, %s358
      %s376 = sphi 0, %s376
      %s378 = sphi 0, %s376
      %s379 = sphi 0, %s378
      %s393 = sphi 0, %s379
      %s397 = sphi 0, %s397
      %s399 = sphi 0, %s397
      %s400 = sphi 0, %s399
      %s414 = sphi 0, %s400
      %s420 = sphi 0, %s422
      %s423 = sphi 0, %s420
      %s424 = sphi 0, %s423
      %s440 = sphi 0, %s424
    $region4: #{small_gpt_forward.1} parent=1 // loop_header_branch
      %30 = sbr.rel (%p28) target = $region8
    $region5: #{small_gpt_forward.1} parent=1 // loop_body
      %s32 = ssub.s32 %s27, 1
      %s33 = ssub.s32 %s27, 2
      %s34 = sadd.s32 %s27, 1
      %s35 = ssub.s32 %s27, %s34
      %p36 = scmp.eq.s32.totalorder %s35, 0
      %s38 = sadd.s32 %s37, 1
      %s39 = scalar_select %p36, %s37, %s38
      %p42 = pneg %p36
      %p43 = scmp.eq.s32.totalorder %s27, 1
      %p44 = por %p42, %p43
      %p45 = scmp.ne.s32.totalorder %s37, %s40
      %p46 = scmp.eq.s32.totalorder %s27, 0
      %p47 = por %p45, %p46
      %p48 = scmp.ne.s32.totalorder %s37, %s40
      %p49 = scmp.eq.s32.totalorder %s32, 1
      %p50 = por %p48, %p49
      %p51 = scmp.ne.s32.totalorder %s40, %s41
      %p52 = scmp.eq.s32.totalorder %s32, 0
      %p53 = por %p51, %p52
      %p54 = scmp.ne.s32.totalorder %s40, %s41
      %p55 = scmp.eq.s32.totalorder %s33, 1
      %p56 = por %p54, %p55
      %p58 = scmp.ne.s32.totalorder %s41, %s57
      %p59 = scmp.eq.s32.totalorder %s33, 0
      %p60 = por %p58, %p59
      %s62 = sadd.s32 %s61, 1
      %p65 = scmp.eq.s32.totalorder %s27, 1
      %p66 = scmp.ne.s32.totalorder %s61, %s63
      %p67 = scmp.eq.s32.totalorder %s27, 0
      %p68 = por %p66, %p67
      %p69 = scmp.ne.s32.totalorder %s61, %s63
      %p70 = scmp.eq.s32.totalorder %s32, 1
      %p71 = por %p69, %p70
      %p72 = scmp.ne.s32.totalorder %s63, %s64
      %p73 = scmp.eq.s32.totalorder %s32, 0
      %p74 = por %p72, %p73
      %p75 = scmp.ne.s32.totalorder %s63, %s64
      %p76 = scmp.eq.s32.totalorder %s33, 1
      %p77 = por %p75, %p76
      %p79 = scmp.ne.s32.totalorder %s64, %s78
      %p80 = scmp.eq.s32.totalorder %s33, 0
      %p81 = por %p79, %p80
      %s83 = sadd.s32 %s82, 1
      %p86 = scmp.eq.s32.totalorder %s27, 1
      %p87 = scmp.ne.s32.totalorder %s82, %s84
      %p88 = scmp.eq.s32.totalorder %s27, 0
      %p89 = por %p87, %p88
      %p90 = scmp.ne.s32.totalorder %s82, %s84
      %p91 = scmp.eq.s32.totalorder %s32, 1
      %p92 = por %p90, %p91
      %p93 = scmp.ne.s32.totalorder %s84, %s85
      %p94 = scmp.eq.s32.totalorder %s32, 0
      %p95 = por %p93, %p94
      %p96 = scmp.ne.s32.totalorder %s84, %s85
      %p97 = scmp.eq.s32.totalorder %s33, 1
      %p98 = por %p96, %p97
      %p100 = scmp.ne.s32.totalorder %s85, %s99
      %p101 = scmp.eq.s32.totalorder %s33, 0
      %p102 = por %p100, %p101
      %s104 = sadd.s32 %s103, 1
      %p107 = scmp.eq.s32.totalorder %s27, 1
      %p108 = scmp.ne.s32.totalorder %s103, %s105
      %p109 = scmp.eq.s32.totalorder %s27, 0
      %p110 = por %p108, %p109
      %p111 = scmp.ne.s32.totalorder %s103, %s105
      %p112 = scmp.eq.s32.totalorder %s32, 1
      %p113 = por %p111, %p112
      %p114 = scmp.ne.s32.totalorder %s105, %s106
      %p115 = scmp.eq.s32.totalorder %s32, 0
      %p116 = por %p114, %p115
      %p117 = scmp.ne.s32.totalorder %s105, %s106
      %p118 = scmp.eq.s32.totalorder %s33, 1
      %p119 = por %p117, %p118
      %p121 = scmp.ne.s32.totalorder %s106, %s120
      %p122 = scmp.eq.s32.totalorder %s33, 0
      %p123 = por %p121, %p122
      %s125 = sadd.s32 %s124, 1
      %p128 = scmp.eq.s32.totalorder %s27, 1
      %p129 = scmp.ne.s32.totalorder %s124, %s126
      %p130 = scmp.eq.s32.totalorder %s27, 0
      %p131 = por %p129, %p130
      %p132 = scmp.ne.s32.totalorder %s124, %s126
      %p133 = scmp.eq.s32.totalorder %s32, 1
      %p134 = por %p132, %p133
      %p135 = scmp.ne.s32.totalorder %s126, %s127
      %p136 = scmp.eq.s32.totalorder %s32, 0
      %p137 = por %p135, %p136
      %p138 = scmp.ne.s32.totalorder %s126, %s127
      %p139 = scmp.eq.s32.totalorder %s33, 1
      %p140 = por %p138, %p139
      %p142 = scmp.ne.s32.totalorder %s127, %s141
      %p143 = scmp.eq.s32.totalorder %s33, 0
      %p144 = por %p142, %p143
      %s146 = sadd.s32 %s145, 1
      %p149 = scmp.eq.s32.totalorder %s27, 1
      %p150 = scmp.ne.s32.totalorder %s145, %s147
      %p151 = scmp.eq.s32.totalorder %s27, 0
      %p152 = por %p150, %p151
      %p153 = scmp.ne.s32.totalorder %s145, %s147
      %p154 = scmp.eq.s32.totalorder %s32, 1
      %p155 = por %p153, %p154
      %p156 = scmp.ne.s32.totalorder %s147, %s148
      %p157 = scmp.eq.s32.totalorder %s32, 0
      %p158 = por %p156, %p157
      %p159 = scmp.ne.s32.totalorder %s147, %s148
      %p160 = scmp.eq.s32.totalorder %s33, 1
      %p161 = por %p159, %p160
      %p163 = scmp.ne.s32.totalorder %s148, %s162
      %p164 = scmp.eq.s32.totalorder %s33, 0
      %p165 = por %p163, %p164
      %s167 = sadd.s32 %s166, 1
      %p170 = scmp.eq.s32.totalorder %s27, 1
      %p171 = scmp.ne.s32.totalorder %s166, %s168
      %p172 = scmp.eq.s32.totalorder %s27, 0
      %p173 = por %p171, %p172
      %p174 = scmp.ne.s32.totalorder %s166, %s168
      %p175 = scmp.eq.s32.totalorder %s32, 1
      %p176 = por %p174, %p175
      %p177 = scmp.ne.s32.totalorder %s168, %s169
      %p178 = scmp.eq.s32.totalorder %s32, 0
      %p179 = por %p177, %p178
      %p180 = scmp.ne.s32.totalorder %s168, %s169
      %p181 = scmp.eq.s32.totalorder %s33, 1
      %p182 = por %p180, %p181
      %p184 = scmp.ne.s32.totalorder %s169, %s183
      %p185 = scmp.eq.s32.totalorder %s33, 0
      %p186 = por %p184, %p185
      %s188 = sadd.s32 %s187, 1
      %p191 = scmp.eq.s32.totalorder %s27, 1
      %p192 = scmp.ne.s32.totalorder %s187, %s189
      %p193 = scmp.eq.s32.totalorder %s27, 0
      %p194 = por %p192, %p193
      %p195 = scmp.ne.s32.totalorder %s187, %s189
      %p196 = scmp.eq.s32.totalorder %s32, 1
      %p197 = por %p195, %p196
      %p198 = scmp.ne.s32.totalorder %s189, %s190
      %p199 = scmp.eq.s32.totalorder %s32, 0
      %p200 = por %p198, %p199
      %p201 = scmp.ne.s32.totalorder %s189, %s190
      %p202 = scmp.eq.s32.totalorder %s33, 1
      %p203 = por %p201, %p202
      %p205 = scmp.ne.s32.totalorder %s190, %s204
      %p206 = scmp.eq.s32.totalorder %s33, 0
      %p207 = por %p205, %p206
      %s209 = sadd.s32 %s208, 1
      %p212 = scmp.eq.s32.totalorder %s27, 1
      %p213 = scmp.ne.s32.totalorder %s208, %s210
      %p214 = scmp.eq.s32.totalorder %s27, 0
      %p215 = por %p213, %p214
      %p216 = scmp.ne.s32.totalorder %s208, %s210
      %p217 = scmp.eq.s32.totalorder %s32, 1
      %p218 = por %p216, %p217
      %p219 = scmp.ne.s32.totalorder %s210, %s211
      %p220 = scmp.eq.s32.totalorder %s32, 0
      %p221 = por %p219, %p220
      %p222 = scmp.ne.s32.totalorder %s210, %s211
      %p223 = scmp.eq.s32.totalorder %s33, 1
      %p224 = por %p222, %p223
      %p226 = scmp.ne.s32.totalorder %s211, %s225
      %p227 = scmp.eq.s32.totalorder %s33, 0
      %p228 = por %p226, %p227
      %s230 = sadd.s32 %s229, 1
      %p233 = scmp.eq.s32.totalorder %s27, 1
      %p234 = scmp.ne.s32.totalorder %s229, %s231
      %p235 = scmp.eq.s32.totalorder %s27, 0
      %p236 = por %p234, %p235
      %p237 = scmp.ne.s32.totalorder %s229, %s231
      %p238 = scmp.eq.s32.totalorder %s32, 1
      %p239 = por %p237, %p238
      %p240 = scmp.ne.s32.totalorder %s231, %s232
      %p241 = scmp.eq.s32.totalorder %s32, 0
      %p242 = por %p240, %p241
      %p243 = scmp.ne.s32.totalorder %s231, %s232
      %p244 = scmp.eq.s32.totalorder %s33, 1
      %p245 = por %p243, %p244
      %p247 = scmp.ne.s32.totalorder %s232, %s246
      %p248 = scmp.eq.s32.totalorder %s33, 0
      %p249 = por %p247, %p248
      %s251 = sadd.s32 %s250, 1
      %p254 = scmp.eq.s32.totalorder %s27, 1
      %p255 = scmp.ne.s32.totalorder %s250, %s252
      %p256 = scmp.eq.s32.totalorder %s27, 0
      %p257 = por %p255, %p256
      %p258 = scmp.ne.s32.totalorder %s250, %s252
      %p259 = scmp.eq.s32.totalorder %s32, 1
      %p260 = por %p258, %p259
      %p261 = scmp.ne.s32.totalorder %s252, %s253
      %p262 = scmp.eq.s32.totalorder %s32, 0
      %p263 = por %p261, %p262
      %p264 = scmp.ne.s32.totalorder %s252, %s253
      %p265 = scmp.eq.s32.totalorder %s33, 1
      %p266 = por %p264, %p265
      %p268 = scmp.ne.s32.totalorder %s253, %s267
      %p269 = scmp.eq.s32.totalorder %s33, 0
      %p270 = por %p268, %p269
      %s272 = sadd.s32 %s271, 1
      %p275 = scmp.eq.s32.totalorder %s27, 1
      %p276 = scmp.ne.s32.totalorder %s271, %s273
      %p277 = scmp.eq.s32.totalorder %s27, 0
      %p278 = por %p276, %p277
      %p279 = scmp.ne.s32.totalorder %s271, %s273
      %p280 = scmp.eq.s32.totalorder %s32, 1
      %p281 = por %p279, %p280
      %p282 = scmp.ne.s32.totalorder %s273, %s274
      %p283 = scmp.eq.s32.totalorder %s32, 0
      %p284 = por %p282, %p283
      %p285 = scmp.ne.s32.totalorder %s273, %s274
      %p286 = scmp.eq.s32.totalorder %s33, 1
      %p287 = por %p285, %p286
      %p289 = scmp.ne.s32.totalorder %s274, %s288
      %p290 = scmp.eq.s32.totalorder %s33, 0
      %p291 = por %p289, %p290
      %s293 = sadd.s32 %s292, 1
      %p296 = scmp.eq.s32.totalorder %s27, 1
      %p297 = scmp.ne.s32.totalorder %s292, %s294
      %p298 = scmp.eq.s32.totalorder %s27, 0
      %p299 = por %p297, %p298
      %p300 = scmp.ne.s32.totalorder %s292, %s294
      %p301 = scmp.eq.s32.totalorder %s32, 1
      %p302 = por %p300, %p301
      %p303 = scmp.ne.s32.totalorder %s294, %s295
      %p304 = scmp.eq.s32.totalorder %s32, 0
      %p305 = por %p303, %p304
      %p306 = scmp.ne.s32.totalorder %s294, %s295
      %p307 = scmp.eq.s32.totalorder %s33, 1
      %p308 = por %p306, %p307
      %p310 = scmp.ne.s32.totalorder %s295, %s309
      %p311 = scmp.eq.s32.totalorder %s33, 0
      %p312 = por %p310, %p311
      %s314 = sadd.s32 %s313, 1
      %p317 = scmp.eq.s32.totalorder %s27, 1
      %p318 = scmp.ne.s32.totalorder %s313, %s315
      %p319 = scmp.eq.s32.totalorder %s27, 0
      %p320 = por %p318, %p319
      %p321 = scmp.ne.s32.totalorder %s313, %s315
      %p322 = scmp.eq.s32.totalorder %s32, 1
      %p323 = por %p321, %p322
      %p324 = scmp.ne.s32.totalorder %s315, %s316
      %p325 = scmp.eq.s32.totalorder %s32, 0
      %p326 = por %p324, %p325
      %p327 = scmp.ne.s32.totalorder %s315, %s316
      %p328 = scmp.eq.s32.totalorder %s33, 1
      %p329 = por %p327, %p328
      %p331 = scmp.ne.s32.totalorder %s316, %s330
      %p332 = scmp.eq.s32.totalorder %s33, 0
      %p333 = por %p331, %p332
      %s335 = sadd.s32 %s334, 1
      %p338 = scmp.eq.s32.totalorder %s27, 1
      %p339 = scmp.ne.s32.totalorder %s334, %s336
      %p340 = scmp.eq.s32.totalorder %s27, 0
      %p341 = por %p339, %p340
      %p342 = scmp.ne.s32.totalorder %s334, %s336
      %p343 = scmp.eq.s32.totalorder %s32, 1
      %p344 = por %p342, %p343
      %p345 = scmp.ne.s32.totalorder %s336, %s337
      %p346 = scmp.eq.s32.totalorder %s32, 0
      %p347 = por %p345, %p346
      %p348 = scmp.ne.s32.totalorder %s336, %s337
      %p349 = scmp.eq.s32.totalorder %s33, 1
      %p350 = por %p348, %p349
      %p352 = scmp.ne.s32.totalorder %s337, %s351
      %p353 = scmp.eq.s32.totalorder %s33, 0
      %p354 = por %p352, %p353
      %s356 = sadd.s32 %s355, 1
      %p359 = scmp.eq.s32.totalorder %s27, 1
      %p360 = scmp.ne.s32.totalorder %s355, %s357
      %p361 = scmp.eq.s32.totalorder %s27, 0
      %p362 = por %p360, %p361
      %p363 = scmp.ne.s32.totalorder %s355, %s357
      %p364 = scmp.eq.s32.totalorder %s32, 1
      %p365 = por %p363, %p364
      %p366 = scmp.ne.s32.totalorder %s357, %s358
      %p367 = scmp.eq.s32.totalorder %s32, 0
      %p368 = por %p366, %p367
      %p369 = scmp.ne.s32.totalorder %s357, %s358
      %p370 = scmp.eq.s32.totalorder %s33, 1
      %p371 = por %p369, %p370
      %p373 = scmp.ne.s32.totalorder %s358, %s372
      %p374 = scmp.eq.s32.totalorder %s33, 0
      %p375 = por %p373, %p374
      %s377 = sadd.s32 %s376, 1
      %p380 = scmp.eq.s32.totalorder %s27, 1
      %p381 = scmp.ne.s32.totalorder %s376, %s378
      %p382 = scmp.eq.s32.totalorder %s27, 0
      %p383 = por %p381, %p382
      %p384 = scmp.ne.s32.totalorder %s376, %s378
      %p385 = scmp.eq.s32.totalorder %s32, 1
      %p386 = por %p384, %p385
      %p387 = scmp.ne.s32.totalorder %s378, %s379
      %p388 = scmp.eq.s32.totalorder %s32, 0
      %p389 = por %p387, %p388
      %p390 = scmp.ne.s32.totalorder %s378, %s379
      %p391 = scmp.eq.s32.totalorder %s33, 1
      %p392 = por %p390, %p391
      %p394 = scmp.ne.s32.totalorder %s379, %s393
      %p395 = scmp.eq.s32.totalorder %s33, 0
      %p396 = por %p394, %p395
      %s398 = sadd.s32 %s397, 1
      %p401 = scmp.eq.s32.totalorder %s27, 1
      %p402 = scmp.ne.s32.totalorder %s397, %s399
      %p403 = scmp.eq.s32.totalorder %s27, 0
      %p404 = por %p402, %p403
      %p405 = scmp.ne.s32.totalorder %s397, %s399
      %p406 = scmp.eq.s32.totalorder %s32, 1
      %p407 = por %p405, %p406
      %p408 = scmp.ne.s32.totalorder %s399, %s400
      %p409 = scmp.eq.s32.totalorder %s32, 0
      %p410 = por %p408, %p409
      %p411 = scmp.ne.s32.totalorder %s399, %s400
      %p412 = scmp.eq.s32.totalorder %s33, 1
      %p413 = por %p411, %p412
      %p415 = scmp.ne.s32.totalorder %s400, %s414
      %p416 = scmp.eq.s32.totalorder %s33, 0
      %p417 = por %p415, %p416
      %s418 = ssub.s32 %s27, %s34
      %p419 = scmp.eq.s32.totalorder %s418, 0
      %s421 = sadd.s32 %s420, 1
      %s422 = scalar_select %p419, %s420, %s421
      %p425 = pneg %p419
      %p426 = scmp.eq.s32.totalorder %s27, 1
      %p427 = por %p425, %p426
      %p428 = scmp.ne.s32.totalorder %s420, %s423
      %p429 = scmp.eq.s32.totalorder %s27, 0
      %p430 = por %p428, %p429
      %p431 = scmp.ne.s32.totalorder %s420, %s423
      %p432 = scmp.eq.s32.totalorder %s32, 1
      %p433 = por %p431, %p432
      %p434 = scmp.ne.s32.totalorder %s423, %s424
      %p435 = scmp.eq.s32.totalorder %s32, 0
      %p436 = por %p434, %p435
      %p437 = scmp.ne.s32.totalorder %s423, %s424
      %p438 = scmp.eq.s32.totalorder %s33, 1
      %p439 = por %p437, %p438
      %p441 = scmp.ne.s32.totalorder %s424, %s440
      %p442 = scmp.eq.s32.totalorder %s33, 0
      %p443 = por %p441, %p442
      %p444 = scmp.le.s32.totalorder 1, %s27
      %p445 = scmp.lt.s32.totalorder %s27, 3
      %p446 = pnand %p444, %p445
      %p447 = pneg %p446
      // Predicated region
      $region9: #{small_gpt_forward.1} parent=5 // pred_check
        _
      $region10: #{small_gpt_forward.1} parent=5 // pred_check_branch
        %449 = sbr.rel (%p446) target = $region12
      $region11: #{small_gpt_forward.1} parent=5 // pred_region
        %s450 = ssub.s32 %s27, 1
        // Predicated region
        $region13: #{small_gpt_forward.1} parent=11 // pred_check
          %p451 = pneg %p74
        $region14: #{small_gpt_forward.1} parent=11 // pred_check_branch
          %453 = sbr.rel (%p451) target = $region16
        $region15: #{small_gpt_forward.1} parent=11 // pred_region
          _
        $region16: #{small_gpt_forward.1} parent=11 // pred_fallthru
          _
        // Predicated region
        $region17: #{small_gpt_forward.1} parent=11 // pred_check
          %p454 = pneg %p95
        $region18: #{small_gpt_forward.1} parent=11 // pred_check_branch
          %456 = sbr.rel (%p454) target = $region20
        $region19: #{small_gpt_forward.1} parent=11 // pred_region
          _
        $region20: #{small_gpt_forward.1} parent=11 // pred_fallthru
          _
        // Predicated region
        $region21: #{small_gpt_forward.1} parent=11 // pred_check
          %p457 = pneg %p116
        $region22: #{small_gpt_forward.1} parent=11 // pred_check_branch
          %459 = sbr.rel (%p457) target = $region24
        $region23: #{small_gpt_forward.1} parent=11 // pred_region
          _
        $region24: #{small_gpt_forward.1} parent=11 // pred_fallthru
          _
        // Predicated region
        $region25: #{small_gpt_forward.1} parent=11 // pred_check
          %p460 = pneg %p137
        $region26: #{small_gpt_forward.1} parent=11 // pred_check_branch
          %462 = sbr.rel (%p460) target = $region28
        $region27: #{small_gpt_forward.1} parent=11 // pred_region
          _
        $region28: #{small_gpt_forward.1} parent=11 // pred_fallthru
          _
        // Predicated region
        $region29: #{small_gpt_forward.1} parent=11 // pred_check
          %p463 = pneg %p158
        $region30: #{small_gpt_forward.1} parent=11 // pred_check_branch
          %465 = sbr.rel (%p463) target = $region32
        $region31: #{small_gpt_forward.1} parent=11 // pred_region
          _
        $region32: #{small_gpt_forward.1} parent=11 // pred_fallthru
          _
        // Predicated region
        $region33: #{small_gpt_forward.1} parent=11 // pred_check
          %p466 = pneg %p179
        $region34: #{small_gpt_forward.1} parent=11 // pred_check_branch
          %468 = sbr.rel (%p466) target = $region36
        $region35: #{small_gpt_forward.1} parent=11 // pred_region
          _
        $region36: #{small_gpt_forward.1} parent=11 // pred_fallthru
          _
        // Predicated region
        $region37: #{small_gpt_forward.1} parent=11 // pred_check
          %p469 = pneg %p200
        $region38: #{small_gpt_forward.1} parent=11 // pred_check_branch
          %471 = sbr.rel (%p469) target = $region40
        $region39: #{small_gpt_forward.1} parent=11 // pred_region
          _
        $region40: #{small_gpt_forward.1} parent=11 // pred_fallthru
          _
        // Predicated region
        $region41: #{small_gpt_forward.1} parent=11 // pred_check
          %p472 = pneg %p221
        $region42: #{small_gpt_forward.1} parent=11 // pred_check_branch
          %474 = sbr.rel (%p472) target = $region44
        $region43: #{small_gpt_forward.1} parent=11 // pred_region
          _
        $region44: #{small_gpt_forward.1} parent=11 // pred_fallthru
          _
        // Predicated region
        $region45: #{small_gpt_forward.1} parent=11 // pred_check
          %p475 = pneg %p242
        $region46: #{small_gpt_forward.1} parent=11 // pred_check_branch
          %477 = sbr.rel (%p475) target = $region48
        $region47: #{small_gpt_forward.1} parent=11 // pred_region
          _
        $region48: #{small_gpt_forward.1} parent=11 // pred_fallthru
          _
        // Predicated region
        $region49: #{small_gpt_forward.1} parent=11 // pred_check
          %p478 = pneg %p263
        $region50: #{small_gpt_forward.1} parent=11 // pred_check_branch
          %480 = sbr.rel (%p478) target = $region52
        $region51: #{small_gpt_forward.1} parent=11 // pred_region
          _
        $region52: #{small_gpt_forward.1} parent=11 // pred_fallthru
          _
        // Predicated region
        $region53: #{small_gpt_forward.1} parent=11 // pred_check
          %p481 = pneg %p284
        $region54: #{small_gpt_forward.1} parent=11 // pred_check_branch
          %483 = sbr.rel (%p481) target = $region56
        $region55: #{small_gpt_forward.1} parent=11 // pred_region
          _
        $region56: #{small_gpt_forward.1} parent=11 // pred_fallthru
          _
        // Predicated region
        $region57: #{small_gpt_forward.1} parent=11 // pred_check
          %p484 = pneg %p305
        $region58: #{small_gpt_forward.1} parent=11 // pred_check_branch
          %486 = sbr.rel (%p484) target = $region60
        $region59: #{small_gpt_forward.1} parent=11 // pred_region
          _
        $region60: #{small_gpt_forward.1} parent=11 // pred_fallthru
          _
        // Predicated region
        $region61: #{small_gpt_forward.1} parent=11 // pred_check
          %p487 = pneg %p326
        $region62: #{small_gpt_forward.1} parent=11 // pred_check_branch
          %489 = sbr.rel (%p487) target = $region64
        $region63: #{small_gpt_forward.1} parent=11 // pred_region
          _
        $region64: #{small_gpt_forward.1} parent=11 // pred_fallthru
          _
        // Predicated region
        $region65: #{small_gpt_forward.1} parent=11 // pred_check
          %p490 = pneg %p347
        $region66: #{small_gpt_forward.1} parent=11 // pred_check_branch
          %492 = sbr.rel (%p490) target = $region68
        $region67: #{small_gpt_forward.1} parent=11 // pred_region
          _
        $region68: #{small_gpt_forward.1} parent=11 // pred_fallthru
          _
        // Predicated region
        $region69: #{small_gpt_forward.1} parent=11 // pred_check
          %p493 = pneg %p368
        $region70: #{small_gpt_forward.1} parent=11 // pred_check_branch
          %495 = sbr.rel (%p493) target = $region72
        $region71: #{small_gpt_forward.1} parent=11 // pred_region
          _
        $region72: #{small_gpt_forward.1} parent=11 // pred_fallthru
          _
        // Predicated region
        $region73: #{small_gpt_forward.1} parent=11 // pred_check
          %p496 = pneg %p389
        $region74: #{small_gpt_forward.1} parent=11 // pred_check_branch
          %498 = sbr.rel (%p496) target = $region76
        $region75: #{small_gpt_forward.1} parent=11 // pred_region
          _
        $region76: #{small_gpt_forward.1} parent=11 // pred_fallthru
          _
        // Predicated region
        $region77: #{small_gpt_forward.1} parent=11 // pred_check
          %p499 = pneg %p410
        $region78: #{small_gpt_forward.1} parent=11 // pred_check_branch
          %501 = sbr.rel (%p499) target = $region80
        $region79: #{small_gpt_forward.1} parent=11 // pred_region
          _
        $region80: #{small_gpt_forward.1} parent=11 // pred_fallthru
          _
      $region12: #{small_gpt_forward.1} parent=5 // pred_fallthru
        _
      %p502 = scmp.lt.s32.totalorder %s27, 2
      // Predicated region
      $region81: #{small_gpt_forward.1} parent=5 // pred_check
        %p503 = pneg %p502
      $region82: #{small_gpt_forward.1} parent=5 // pred_check_branch
        %505 = sbr.rel (%p503) target = $region84
      $region83: #{small_gpt_forward.1} parent=5 // pred_region
        // Predicated region
        $region85: #{small_gpt_forward.1} parent=83 // pred_check
          %p506 = pneg %p47
        $region86: #{small_gpt_forward.1} parent=83 // pred_check_branch
          %508 = sbr.rel (%p506) target = $region88
        $region87: #{small_gpt_forward.1} parent=83 // pred_region
          %p509 = scmp.lt.s32.totalorder %s27, 1
          %s510 = scalar_select %p509, %s27, 1
          %s511 = smul.addr %s510, 8
          %s512 = scalar_lea.vmem %s0, %s511
        $region88: #{small_gpt_forward.1} parent=83 // pred_fallthru
          _
      $region84: #{small_gpt_forward.1} parent=5 // pred_fallthru
        _
      %p513 = scmp.le.s32.totalorder 1, %s27
      %p514 = scmp.lt.s32.totalorder %s27, 3
      %p515 = pnand %p513, %p514
      %p516 = pneg %p515
      // Predicated region
      $region89: #{small_gpt_forward.1} parent=5 // pred_check
        _
      $region90: #{small_gpt_forward.1} parent=5 // pred_check_branch
        %518 = sbr.rel (%p515) target = $region92
      $region91: #{small_gpt_forward.1} parent=5 // pred_region
        %s519 = ssub.s32 %s27, 1
        %p520 = scmp.lt.s32.totalorder %s32, 1
        %s521 = scalar_select %p520, %s32, 1
        %s522 = smul.addr %s521, 8
        %s523 = scalar_lea.vmem %s0, %s522
        %p524 = pneg %p53
        %p525 = pneg %p50
        %p526 = pneg %p74
        %p527 = pneg %p71
        %p528 = pneg %p95
        %p529 = pneg %p92
        %p530 = pneg %p116
        %p531 = pneg %p113
        %p532 = pneg %p137
        %p533 = pneg %p134
        %p534 = pneg %p158
        %p535 = pneg %p155
        %p536 = pneg %p179
        %p537 = pneg %p176
        %p538 = pneg %p200
        %p539 = pneg %p197
        %p540 = pneg %p221
        %p541 = pneg %p218
        %p542 = pneg %p242
        %p543 = pneg %p239
        %p544 = pneg %p263
        %p545 = pneg %p260
        %p546 = pneg %p284
        %p547 = pneg %p281
        %p548 = pneg %p305
        %p549 = pneg %p302
        %p550 = pneg %p326
        %p551 = pneg %p323
        %p552 = pneg %p347
        %p553 = pneg %p344
        %p554 = pneg %p368
        %p555 = pneg %p365
        %p556 = pneg %p389
        %p557 = pneg %p386
        %p558 = pneg %p410
        %p559 = pneg %p407
        %p560 = pneg %p436
        %p561 = pneg %p433
        %s562 = sand.u32 %s423, 1
        %s563 = scalar_lea.sflag [#allocation3], %s562
        %s564 = sand.u32 %s423, 1
        %s565 = smul.addr %s564, 8
        %s566 = scalar_lea.vmem [#allocation2], %s565
        %p567 = scmp.lt.s32.totalorder %s32, 1
        %s568 = scalar_select %p567, %s32, 1
        %s569 = smul.addr %s568, 8
        %s570 = scalar_lea.vmem %s0, %s569
        %v571 = vld [vmem:[%s570] sm:$0xff]
        %v572 = vlaneseq
        %v573 = vand.u32 %v572, 127
        %574 = vset.pattern.permute.xlu0 0
        %575 = vperm.xlu0 %574, %v571
        %v576 = vpop.permute.xlu0 %575
        %vm577 = vcmp.eq.s32.totalorder %v573, %v576
        %v578 = vsel %vm577, 1, 0
        %v579 = vcvt.s32.f32 %v578
        %v580 = vld [vmem:[%s1] sm:$0xff]
        %v581 = vld [vmem:[%s1 + $0x8] sm:$0xff]
        %v582 = vld [vmem:[%s1 + $0x10] sm:$0xff]
        %v583 = vld [vmem:[%s1 + $0x18] sm:$0xff]
        %v584 = vld [vmem:[%s1 + $0x20] sm:$0xff]
        %v585 = vld [vmem:[%s1 + $0x28] sm:$0xff]
        %v586 = vld [vmem:[%s1 + $0x30] sm:$0xff]
        %v587 = vld [vmem:[%s1 + $0x38] sm:$0xff]
        %v588 = vld [vmem:[%s2] sm:$0xff]
        %vm589 = vcmask 523264
        %v591 = vsel %vm589, %v579, 0
        %593 = vmatprep.subr.mxu0 0.0
        %594 = vmatpush1.msra.mxu0 %v580
        %595 = vmatprep.subr.mxu0 0.0
        %596 = vmatpush1.msra.mxu0 %v581
        %597 = vmatprep.subr.mxu0 0.0
        %598 = vmatpush1.msra.mxu0 %v582
        %599 = vmatprep.subr.mxu0 0.0
        %600 = vmatpush1.msra.mxu0 %v583
        %601 = vmatprep.subr.mxu0 0.0
        %602 = vmatpush1.msra.mxu0 %v584
        %603 = vmatprep.subr.mxu0 0.0
        %604 = vmatpush1.msra.mxu0 %v585
        %605 = vmatprep.subr.mxu0 0.0
        %606 = vmatpush1.msra.mxu0 %v586
        %607 = vmatprep.subr.mxu0 0.0
        %608 = vmatpush1.msra.mxu0 %v587
        %609 = vmatprep.subr.mxu0 0.0
        %610 = vmatpush1.msra.mxu0 0.0
        %611 = vmatprep.subr.mxu0 0.0
        %612 = vmatpush1.msra.mxu0 0.0
        %613 = vmatprep.subr.mxu0 0.0
        %614 = vmatpush1.msra.mxu0 0.0
        %615 = vmatprep.subr.mxu0 0.0
        %616 = vmatpush1.msra.mxu0 0.0
        %617 = vmatprep.subr.mxu0 0.0
        %618 = vmatpush1.msra.mxu0 0.0
        %619 = vmatprep.subr.mxu0 0.0
        %620 = vmatpush1.msra.mxu0 0.0
        %621 = vmatprep.subr.mxu0 0.0
        %622 = vmatpush1.msra.mxu0 0.0
        %623 = vmatprep.subr.mxu0 0.0
        %624 = vmatpush1.msra.mxu0 0.0
        %625 = vmatprep.subr.mxu0 0.0
        %626 = vmatpush1.msra.mxu0 0.0
        %627 = vmatprep.subr.mxu0 0.0
        %628 = vmatpush1.msra.mxu0 0.0
        %629 = vmatprep.subr.mxu0 0.0
        %630 = vmatpush1.msra.mxu0 0.0
        %631 = vmatprep.subr.mxu0 0.0
        %632 = vmatpush1.msra.mxu0 0.0
        %633 = vmatprep.subr.mxu0 0.0
        %634 = vmatpush1.msra.mxu0 0.0
        %635 = vmatprep.subr.mxu0 0.0
        %636 = vmatpush1.msra.mxu0 0.0
        %637 = vmatprep.subr.mxu0 0.0
        %638 = vmatpush1.msra.mxu0 0.0
        %639 = vmatprep.subr.mxu0 0.0
        %640 = vmatpush1.msra.mxu0 0.0
        %641 = vmatprep.subr.mxu0 0.0
        %642 = vmatpush1.msra.mxu0 0.0
        %643 = vmatprep.subr.mxu0 0.0
        %644 = vmatpush1.msra.mxu0 0.0
        %645 = vmatprep.subr.mxu0 0.0
        %646 = vmatpush1.msra.mxu0 0.0
        %647 = vmatprep.subr.mxu0 0.0
        %648 = vmatpush1.msra.mxu0 0.0
        %649 = vmatprep.subr.mxu0 0.0
        %650 = vmatpush1.msra.mxu0 0.0
        %651 = vmatprep.subr.mxu0 0.0
        %652 = vmatpush1.msra.mxu0 0.0
        %653 = vmatprep.subr.mxu0 0.0
        %654 = vmatpush1.msra.mxu0 0.0
        %655 = vmatprep.subr.mxu0 0.0
        %656 = vmatpush1.msra.mxu0 0.0
        %657 = vmatprep.mubr.f32.mxu0 0.0
        %658 = vmatmul.mubr.f32.gmra.mrb[0].mxu0 %v591
        %v659 = vpop.f32.mrb[0].mxu0
        %v660 = vadd.f32 %v588, %v659
        %v661 = vpop.f32.mrb[0].mxu0
        %662 = vdwg.mxu0
        %v663 = vld [vmem:[%s3] sm:$0xff]
        %v664 = vld [vmem:[%s5] sm:$0x1]
        %v665 = vld [vmem:[%s6] sm:$0x1]
        %vm666 = vcmask 261120
        %v667 = vsel %vm666, %v660, 0.0
        %668 = vadd.xlane.f32.xlu0 %v667
        %v669 = vpop.xlane.xlu0 %668
        %v670 = vrcp.pop 32.0
        %v671 = vmul.f32 %v669, %v670
        %v672 = vsub.f32 %v660, %v671
        %v673 = vmul.f32 %v672, %v672
        %v674 = vsel %vm666, %v673, 0.0
        %675 = vadd.xlane.f32.xlu0 %v674
        %v676 = vpop.xlane.xlu0 %675
        %v677 = vmul.f32 %v676, %v670
        %v678 = vadd.f32 %v677, 1e-05
        %v679 = vrsqrt.pop %v678
        %v680 = vmul.f32 %v672, %v679
        %v682 = vlaneseq
        %v683 = vshrl.u32 %v682, 7
        %v684 = vsub.s32 0, %v683
        %v685 = vrot.slane %v664, %v684
        %v687 = vmul.f32 %v680, %v685
        %v689 = vlaneseq
        %v690 = vshrl.u32 %v689, 7
        %v691 = vsub.s32 0, %v690
        %v692 = vrot.slane %v665, %v691
        %v694 = vadd.f32 %v687, %v692
        %v695 = vld [vmem:[%s7] sm:$0xff]
        %v696 = vld [vmem:[%s7 + $0x8] sm:$0xff]
        %v697 = vld [vmem:[%s7 + $0x10] sm:$0xff]
        %v698 = vld [vmem:[%s7 + $0x18] sm:$0xff]
        %v700 = vsel %vm666, %v694, 0
        %702 = vmatprep.subr.mxu0 0.0
        %703 = vmatpush1.msra.mxu0 %v695
        %704 = vmatprep.subr.mxu0 0.0
        %705 = vmatpush1.msra.mxu0 %v696
        %706 = vmatprep.subr.mxu0 0.0
        %707 = vmatpush1.msra.mxu0 %v697
        %708 = vmatprep.subr.mxu0 0.0
        %709 = vmatpush1.msra.mxu0 %v698
        %710 = vmatprep.subr.mxu0 0.0
        %711 = vmatpush1.msra.mxu0 0.0
        %712 = vmatprep.subr.mxu0 0.0
        %713 = vmatpush1.msra.mxu0 0.0
        %714 = vmatprep.subr.mxu0 0.0
        %715 = vmatpush1.msra.mxu0 0.0
        %716 = vmatprep.subr.mxu0 0.0
        %717 = vmatpush1.msra.mxu0 0.0
        %718 = vmatprep.subr.mxu0 0.0
        %719 = vmatpush1.msra.mxu0 0.0
        %720 = vmatprep.subr.mxu0 0.0
        %721 = vmatpush1.msra.mxu0 0.0
        %722 = vmatprep.subr.mxu0 0.0
        %723 = vmatpush1.msra.mxu0 0.0
        %724 = vmatprep.subr.mxu0 0.0
        %725 = vmatpush1.msra.mxu0 0.0
        %726 = vmatprep.subr.mxu0 0.0
        %727 = vmatpush1.msra.mxu0 0.0
        %728 = vmatprep.subr.mxu0 0.0
        %729 = vmatpush1.msra.mxu0 0.0
        %730 = vmatprep.subr.mxu0 0.0
        %731 = vmatpush1.msra.mxu0 0.0
        %732 = vmatprep.subr.mxu0 0.0
        %733 = vmatpush1.msra.mxu0 0.0
        %734 = vmatprep.subr.mxu0 0.0
        %735 = vmatpush1.msra.mxu0 0.0
        %736 = vmatprep.subr.mxu0 0.0
        %737 = vmatpush1.msra.mxu0 0.0
        %738 = vmatprep.subr.mxu0 0.0
        %739 = vmatpush1.msra.mxu0 0.0
        %740 = vmatprep.subr.mxu0 0.0
        %741 = vmatpush1.msra.mxu0 0.0
        %742 = vmatprep.subr.mxu0 0.0
        %743 = vmatpush1.msra.mxu0 0.0
        %744 = vmatprep.subr.mxu0 0.0
        %745 = vmatpush1.msra.mxu0 0.0
        %746 = vmatprep.subr.mxu0 0.0
        %747 = vmatpush1.msra.mxu0 0.0
        %748 = vmatprep.subr.mxu0 0.0
        %749 = vmatpush1.msra.mxu0 0.0
        %750 = vmatprep.subr.mxu0 0.0
        %751 = vmatpush1.msra.mxu0 0.0
        %752 = vmatprep.subr.mxu0 0.0
        %753 = vmatpush1.msra.mxu0 0.0
        %754 = vmatprep.subr.mxu0 0.0
        %755 = vmatpush1.msra.mxu0 0.0
        %756 = vmatprep.subr.mxu0 0.0
        %757 = vmatpush1.msra.mxu0 0.0
        %758 = vmatprep.subr.mxu0 0.0
        %759 = vmatpush1.msra.mxu0 0.0
        %760 = vmatprep.subr.mxu0 0.0
        %761 = vmatpush1.msra.mxu0 0.0
        %762 = vmatprep.subr.mxu0 0.0
        %763 = vmatpush1.msra.mxu0 0.0
        %764 = vmatprep.subr.mxu0 0.0
        %765 = vmatpush1.msra.mxu0 0.0
        %766 = vmatprep.mubr.f32.mxu0 0.0
        %767 = vmatmul.mubr.f32.gmra.mrb[0].mxu0 %v700
        %v768 = vpop.f32.mrb[0].mxu0
        %v769 = vadd.f32 0.0, %v768
        %v770 = vpop.f32.mrb[0].mxu0
        %771 = vdwg.mxu0
        %v772 = vld [vmem:[%s4] sm:$0x1]
        %v774 = vlaneseq
        %v775 = vshrl.u32 %v774, 7
        %v776 = vsub.s32 0, %v775
        %v777 = vrot.slane %v772, %v776
        %v779 = vmul.f32 %v769, %v777
        %781 = vrot.lane.b32.xlu0 %v769, 96
        %v782 = vpop.permute.xlu0 %781
        %v784 = vsel %vm666, %v779, 0
        %v786 = vsel %vm666, %v782, 0
        %788 = vmatprep.subr.mxu0 0.0
        %789 = vmatpush1.xpose.msra.mxu0 %v786
        %790 = vmatprep.subr.mxu0 0.0
        %791 = vmatpush1.xpose.msra.mxu0 0.0
        %792 = vmatprep.subr.mxu0 0.0
        %793 = vmatpush1.xpose.msra.mxu0 0.0
        %794 = vmatprep.subr.mxu0 0.0
        %795 = vmatpush1.xpose.msra.mxu0 0.0
        %796 = vmatprep.subr.mxu0 0.0
        %797 = vmatpush1.xpose.msra.mxu0 0.0
        %798 = vmatprep.subr.mxu0 0.0
        %799 = vmatpush1.xpose.msra.mxu0 0.0
        %800 = vmatprep.subr.mxu0 0.0
        %801 = vmatpush1.xpose.msra.mxu0 0.0
        %802 = vmatprep.subr.mxu0 0.0
        %803 = vmatpush1.xpose.msra.mxu0 0.0
        %804 = vmatprep.subr.mxu0 0.0
        %805 = vmatpush1.xpose.msra.mxu0 0.0
        %806 = vmatprep.subr.mxu0 0.0
        %807 = vmatpush1.xpose.msra.mxu0 0.0
        %808 = vmatprep.subr.mxu0 0.0
        %809 = vmatpush1.xpose.msra.mxu0 0.0
        %810 = vmatprep.subr.mxu0 0.0
        %811 = vmatpush1.xpose.msra.mxu0 0.0
        %812 = vmatprep.subr.mxu0 0.0
        %813 = vmatpush1.xpose.msra.mxu0 0.0
        %814 = vmatprep.subr.mxu0 0.0
        %815 = vmatpush1.xpose.msra.mxu0 0.0
        %816 = vmatprep.subr.mxu0 0.0
        %817 = vmatpush1.xpose.msra.mxu0 0.0
        %818 = vmatprep.subr.mxu0 0.0
        %819 = vmatpush1.xpose.msra.mxu0 0.0
        %820 = vmatprep.subr.mxu0 0.0
        %821 = vmatpush1.xpose.msra.mxu0 0.0
        %822 = vmatprep.subr.mxu0 0.0
        %823 = vmatpush1.xpose.msra.mxu0 0.0
        %824 = vmatprep.subr.mxu0 0.0
        %825 = vmatpush1.xpose.msra.mxu0 0.0
        %826 = vmatprep.subr.mxu0 0.0
        %827 = vmatpush1.xpose.msra.mxu0 0.0
        %828 = vmatprep.subr.mxu0 0.0
        %829 = vmatpush1.xpose.msra.mxu0 0.0
        %830 = vmatprep.subr.mxu0 0.0
        %831 = vmatpush1.xpose.msra.mxu0 0.0
        %832 = vmatprep.subr.mxu0 0.0
        %833 = vmatpush1.xpose.msra.mxu0 0.0
        %834 = vmatprep.subr.mxu0 0.0
        %835 = vmatpush1.xpose.msra.mxu0 0.0
        %836 = vmatprep.subr.mxu0 0.0
        %837 = vmatpush1.xpose.msra.mxu0 0.0
        %838 = vmatprep.subr.mxu0 0.0
        %839 = vmatpush1.xpose.msra.mxu0 0.0
        %840 = vmatprep.subr.mxu0 0.0
        %841 = vmatpush1.xpose.msra.mxu0 0.0
        %842 = vmatprep.subr.mxu0 0.0
        %843 = vmatpush1.xpose.msra.mxu0 0.0
        %844 = vmatprep.subr.mxu0 0.0
        %845 = vmatpush1.xpose.msra.mxu0 0.0
        %846 = vmatprep.subr.mxu0 0.0
        %847 = vmatpush1.xpose.msra.mxu0 0.0
        %848 = vmatprep.subr.mxu0 0.0
        %849 = vmatpush1.xpose.msra.mxu0 0.0
        %850 = vmatprep.subr.mxu0 0.0
        %851 = vmatpush1.xpose.msra.mxu0 0.0
        %852 = vmatprep.mubr.f32.mxu0 0.0
        %853 = vmatmul.mubr.f32.gmra.mrb[0].mxu0 %v784
        %v854 = vpop.f32.mrb[0].mxu0
        %v855 = vadd.f32 %v663, %v854
        %v856 = vpop.f32.mrb[0].mxu0
        %857 = vdwg.mxu0
        %vm858 = vcmask 64512
        %v859 = vsel %vm858, %v855, -inf
        %860 = vmax.xlane.f32.xlu0 %v859
        %v861 = vpop.xlane.xlu0 %860
        %v862 = vsub.f32 %v855, %v861
        %v863 = vmul.f32 %v862, 1.442695
        %v864 = vpow.pop %v863
        %v865 = vsel %vm858, %v864, 0.0
        %866 = vadd.xlane.f32.xlu0 %v865
        %v867 = vpop.xlane.xlu0 %866
        %v868 = vrcp.pop %v867
        %v869 = vmul.f32 %v864, %v868
        %870 = vrot.lane.b32.xlu0 %v777, 64
        %v871 = vpop.permute.xlu0 %870
        %v873 = vmul.f32 %v769, %v871
        %s874 = scalar_lea.vmem %s4, 1
        %v875 = vld [vmem:[%s874] sm:$0x1]
        %v877 = vlaneseq
        %v878 = vshrl.u32 %v877, 7
        %v879 = vsub.s32 0, %v878
        %v880 = vrot.slane %v875, %v879
        %v882 = vmul.f32 %v769, %v880
        %v884 = vsel %vm666, %v882, 0
        %886 = vmatprep.subr.mxu0 0.0
        %887 = vmatpush1.xpose.msra.mxu0 %v786
        %888 = vmatprep.subr.mxu0 0.0
        %889 = vmatpush1.xpose.msra.mxu0 0.0
        %890 = vmatprep.subr.mxu0 0.0
        %891 = vmatpush1.xpose.msra.mxu0 0.0
        %892 = vmatprep.subr.mxu0 0.0
        %893 = vmatpush1.xpose.msra.mxu0 0.0
        %894 = vmatprep.subr.mxu0 0.0
        %895 = vmatpush1.xpose.msra.mxu0 0.0
        %896 = vmatprep.subr.mxu0 0.0
        %897 = vmatpush1.xpose.msra.mxu0 0.0
        %898 = vmatprep.subr.mxu0 0.0
        %899 = vmatpush1.xpose.msra.mxu0 0.0
        %900 = vmatprep.subr.mxu0 0.0
        %901 = vmatpush1.xpose.msra.mxu0 0.0
        %902 = vmatprep.subr.mxu0 0.0
        %903 = vmatpush1.xpose.msra.mxu0 0.0
        %904 = vmatprep.subr.mxu0 0.0
        %905 = vmatpush1.xpose.msra.mxu0 0.0
        %906 = vmatprep.subr.mxu0 0.0
        %907 = vmatpush1.xpose.msra.mxu0 0.0
        %908 = vmatprep.subr.mxu0 0.0
        %909 = vmatpush1.xpose.msra.mxu0 0.0
        %910 = vmatprep.subr.mxu0 0.0
        %911 = vmatpush1.xpose.msra.mxu0 0.0
        %912 = vmatprep.subr.mxu0 0.0
        %913 = vmatpush1.xpose.msra.mxu0 0.0
        %914 = vmatprep.subr.mxu0 0.0
        %915 = vmatpush1.xpose.msra.mxu0 0.0
        %916 = vmatprep.subr.mxu0 0.0
        %917 = vmatpush1.xpose.msra.mxu0 0.0
        %918 = vmatprep.subr.mxu0 0.0
        %919 = vmatpush1.xpose.msra.mxu0 0.0
        %920 = vmatprep.subr.mxu0 0.0
        %921 = vmatpush1.xpose.msra.mxu0 0.0
        %922 = vmatprep.subr.mxu0 0.0
        %923 = vmatpush1.xpose.msra.mxu0 0.0
        %924 = vmatprep.subr.mxu0 0.0
        %925 = vmatpush1.xpose.msra.mxu0 0.0
        %926 = vmatprep.subr.mxu0 0.0
        %927 = vmatpush1.xpose.msra.mxu0 0.0
        %928 = vmatprep.subr.mxu0 0.0
        %929 = vmatpush1.xpose.msra.mxu0 0.0
        %930 = vmatprep.subr.mxu0 0.0
        %931 = vmatpush1.xpose.msra.mxu0 0.0
        %932 = vmatprep.subr.mxu0 0.0
        %933 = vmatpush1.xpose.msra.mxu0 0.0
        %934 = vmatprep.subr.mxu0 0.0
        %935 = vmatpush1.xpose.msra.mxu0 0.0
        %936 = vmatprep.subr.mxu0 0.0
        %937 = vmatpush1.xpose.msra.mxu0 0.0
        %938 = vmatprep.subr.mxu0 0.0
        %939 = vmatpush1.xpose.msra.mxu0 0.0
        %940 = vmatprep.subr.mxu0 0.0
        %941 = vmatpush1.xpose.msra.mxu0 0.0
        %942 = vmatprep.subr.mxu0 0.0
        %943 = vmatpush1.xpose.msra.mxu0 0.0
        %944 = vmatprep.subr.mxu0 0.0
        %945 = vmatpush1.xpose.msra.mxu0 0.0
        %946 = vmatprep.subr.mxu0 0.0
        %947 = vmatpush1.xpose.msra.mxu0 0.0
        %948 = vmatprep.subr.mxu0 0.0
        %949 = vmatpush1.xpose.msra.mxu0 0.0
        %950 = vmatprep.mubr.f32.mxu0 0.0
        %951 = vmatmul.mubr.f32.gmra.mrb[0].mxu0 %v884
        %v952 = vpop.f32.mrb[0].mxu0
        %v953 = vadd.f32 %v663, %v952
        %v954 = vpop.f32.mrb[0].mxu0
        %955 = vdwg.mxu0
        %v956 = vsel %vm858, %v953, -inf
        %957 = vmax.xlane.f32.xlu0 %v956
        %v958 = vpop.xlane.xlu0 %957
        %v959 = vsub.f32 %v953, %v958
        %v960 = vmul.f32 %v959, 1.442695
        %v961 = vpow.pop %v960
        %v962 = vsel %vm858, %v961, 0.0
        %963 = vadd.xlane.f32.xlu0 %v962
        %v964 = vpop.xlane.xlu0 %963
        %v965 = vrcp.pop %v964
        %v966 = vmul.f32 %v961, %v965
        %967 = vrot.lane.b32.xlu0 %v880, 64
        %v968 = vpop.permute.xlu0 %967
        %v970 = vmul.f32 %v769, %v968
        %972 = vrot.lane.b32.xlu0 %v970, 64
        %v973 = vpop.permute.xlu0 %972
        %v976 = vsel %vm858, %v966, 0
        %978 = vmatprep.subr.mxu0 0.0
        %979 = vmatpush1.msra.mxu0 %v973
        %980 = vmatprep.subr.mxu0 0.0
        %981 = vmatpush1.msra.mxu0 0.0
        %982 = vmatprep.subr.mxu0 0.0
        %983 = vmatpush1.msra.mxu0 0.0
        %984 = vmatprep.subr.mxu0 0.0
        %985 = vmatpush1.msra.mxu0 0.0
        %986 = vmatprep.subr.mxu0 0.0
        %987 = vmatpush1.msra.mxu0 0.0
        %988 = vmatprep.subr.mxu0 0.0
        %989 = vmatpush1.msra.mxu0 0.0
        %990 = vmatprep.subr.mxu0 0.0
        %991 = vmatpush1.msra.mxu0 0.0
        %992 = vmatprep.subr.mxu0 0.0
        %993 = vmatpush1.msra.mxu0 0.0
        %994 = vmatprep.subr.mxu0 0.0
        %995 = vmatpush1.msra.mxu0 0.0
        %996 = vmatprep.subr.mxu0 0.0
        %997 = vmatpush1.msra.mxu0 0.0
        %998 = vmatprep.subr.mxu0 0.0
        %999 = vmatpush1.msra.mxu0 0.0
        %1000 = vmatprep.subr.mxu0 0.0
        %1001 = vmatpush1.msra.mxu0 0.0
        %1002 = vmatprep.subr.mxu0 0.0
        %1003 = vmatpush1.msra.mxu0 0.0
        %1004 = vmatprep.subr.mxu0 0.0
        %1005 = vmatpush1.msra.mxu0 0.0
        %1006 = vmatprep.subr.mxu0 0.0
        %1007 = vmatpush1.msra.mxu0 0.0
        %1008 = vmatprep.subr.mxu0 0.0
        %1009 = vmatpush1.msra.mxu0 0.0
        %1010 = vmatprep.subr.mxu0 0.0
        %1011 = vmatpush1.msra.mxu0 0.0
        %1012 = vmatprep.subr.mxu0 0.0
        %1013 = vmatpush1.msra.mxu0 0.0
        %1014 = vmatprep.subr.mxu0 0.0
        %1015 = vmatpush1.msra.mxu0 0.0
        %1016 = vmatprep.subr.mxu0 0.0
        %1017 = vmatpush1.msra.mxu0 0.0
        %1018 = vmatprep.subr.mxu0 0.0
        %1019 = vmatpush1.msra.mxu0 0.0
        %1020 = vmatprep.subr.mxu0 0.0
        %1021 = vmatpush1.msra.mxu0 0.0
        %1022 = vmatprep.subr.mxu0 0.0
        %1023 = vmatpush1.msra.mxu0 0.0
        %1024 = vmatprep.subr.mxu0 0.0
        %1025 = vmatpush1.msra.mxu0 0.0
        %1026 = vmatprep.subr.mxu0 0.0
        %1027 = vmatpush1.msra.mxu0 0.0
        %1028 = vmatprep.subr.mxu0 0.0
        %1029 = vmatpush1.msra.mxu0 0.0
        %1030 = vmatprep.subr.mxu0 0.0
        %1031 = vmatpush1.msra.mxu0 0.0
        %1032 = vmatprep.subr.mxu0 0.0
        %1033 = vmatpush1.msra.mxu0 0.0
        %1034 = vmatprep.subr.mxu0 0.0
        %1035 = vmatpush1.msra.mxu0 0.0
        %1036 = vmatprep.subr.mxu0 0.0
        %1037 = vmatpush1.msra.mxu0 0.0
        %1038 = vmatprep.subr.mxu0 0.0
        %1039 = vmatpush1.msra.mxu0 0.0
        %1040 = vmatprep.subr.mxu0 0.0
        %1041 = vmatpush1.msra.mxu0 0.0
        %1042 = vmatprep.mubr.f32.mxu0 0.0
        %1043 = vmatmul.mubr.f32.gmra.mrb[0].mxu0 %v976
        %v1044 = vpop.f32.mrb[0].mxu0
        %v1045 = vadd.f32 0.0, %v1044
        %v1046 = vpop.f32.mrb[0].mxu0
        %1047 = vdwg.mxu0
        %1049 = vrot.lane.b32.xlu0 %v873, 64
        %v1050 = vpop.permute.xlu0 %1049
        %v1053 = vsel %vm858, %v869, 0
        %1055 = vmatprep.subr.mxu0 0.0
        %1056 = vmatpush1.msra.mxu0 %v1050
        %1057 = vmatprep.subr.mxu0 0.0
        %1058 = vmatpush1.msra.mxu0 0.0
        %1059 = vmatprep.subr.mxu0 0.0
        %1060 = vmatpush1.msra.mxu0 0.0
        %1061 = vmatprep.subr.mxu0 0.0
        %1062 = vmatpush1.msra.mxu0 0.0
        %1063 = vmatprep.subr.mxu0 0.0
        %1064 = vmatpush1.msra.mxu0 0.0
        %1065 = vmatprep.subr.mxu0 0.0
        %1066 = vmatpush1.msra.mxu0 0.0
        %1067 = vmatprep.subr.mxu0 0.0
        %1068 = vmatpush1.msra.mxu0 0.0
        %1069 = vmatprep.subr.mxu0 0.0
        %1070 = vmatpush1.msra.mxu0 0.0
        %1071 = vmatprep.subr.mxu0 0.0
        %1072 = vmatpush1.msra.mxu0 0.0
        %1073 = vmatprep.subr.mxu0 0.0
        %1074 = vmatpush1.msra.mxu0 0.0
        %1075 = vmatprep.subr.mxu0 0.0
        %1076 = vmatpush1.msra.mxu0 0.0
        %1077 = vmatprep.subr.mxu0 0.0
        %1078 = vmatpush1.msra.mxu0 0.0
        %1079 = vmatprep.subr.mxu0 0.0
        %1080 = vmatpush1.msra.mxu0 0.0
        %1081 = vmatprep.subr.mxu0 0.0
        %1082 = vmatpush1.msra.mxu0 0.0
        %1083 = vmatprep.subr.mxu0 0.0
        %1084 = vmatpush1.msra.mxu0 0.0
        %1085 = vmatprep.subr.mxu0 0.0
        %1086 = vmatpush1.msra.mxu0 0.0
        %1087 = vmatprep.subr.mxu0 0.0
        %1088 = vmatpush1.msra.mxu0 0.0
        %1089 = vmatprep.subr.mxu0 0.0
        %1090 = vmatpush1.msra.mxu0 0.0
        %1091 = vmatprep.subr.mxu0 0.0
        %1092 = vmatpush1.msra.mxu0 0.0
        %1093 = vmatprep.subr.mxu0 0.0
        %1094 = vmatpush1.msra.mxu0 0.0
        %1095 = vmatprep.subr.mxu0 0.0
        %1096 = vmatpush1.msra.mxu0 0.0
        %1097 = vmatprep.subr.mxu0 0.0
        %1098 = vmatpush1.msra.mxu0 0.0
        %1099 = vmatprep.subr.mxu0 0.0
        %1100 = vmatpush1.msra.mxu0 0.0
        %1101 = vmatprep.subr.mxu0 0.0
        %1102 = vmatpush1.msra.mxu0 0.0
        %1103 = vmatprep.subr.mxu0 0.0
        %1104 = vmatpush1.msra.mxu0 0.0
        %1105 = vmatprep.subr.mxu0 0.0
        %1106 = vmatpush1.msra.mxu0 0.0
        %1107 = vmatprep.subr.mxu0 0.0
        %1108 = vmatpush1.msra.mxu0 0.0
        %1109 = vmatprep.subr.mxu0 0.0
        %1110 = vmatpush1.msra.mxu0 0.0
        %1111 = vmatprep.subr.mxu0 0.0
        %1112 = vmatpush1.msra.mxu0 0.0
        %1113 = vmatprep.subr.mxu0 0.0
        %1114 = vmatpush1.msra.mxu0 0.0
        %1115 = vmatprep.subr.mxu0 0.0
        %1116 = vmatpush1.msra.mxu0 0.0
        %1117 = vmatprep.subr.mxu0 0.0
        %1118 = vmatpush1.msra.mxu0 0.0
        %1119 = vmatprep.mubr.f32.mxu0 0.0
        %1120 = vmatmul.mubr.f32.gmra.mrb[0].mxu0 %v1053
        %v1121 = vpop.f32.mrb[0].mxu0
        %v1122 = vadd.f32 %v1045, %v1121
        %v1123 = vpop.f32.mrb[0].mxu0
        %1124 = vdwg.mxu0
        %s1125 = scalar_lea.vmem %s4, 2
        %v1126 = vld [vmem:[%s1125] sm:$0x1]
        %v1128 = vlaneseq
        %v1129 = vshrl.u32 %v1128, 7
        %v1130 = vsub.s32 0, %v1129
        %v1131 = vrot.slane %v1126, %v1130
        %v1133 = vmul.f32 %v769, %v1131
        %v1135 = vsel %vm666, %v1133, 0
        %1137 = vmatprep.subr.mxu0 0.0
        %1138 = vmatpush1.xpose.msra.mxu0 %v786
        %1139 = vmatprep.subr.mxu0 0.0
        %1140 = vmatpush1.xpose.msra.mxu0 0.0
        %1141 = vmatprep.subr.mxu0 0.0
        %1142 = vmatpush1.xpose.msra.mxu0 0.0
        %1143 = vmatprep.subr.mxu0 0.0
        %1144 = vmatpush1.xpose.msra.mxu0 0.0
        %1145 = vmatprep.subr.mxu0 0.0
        %1146 = vmatpush1.xpose.msra.mxu0 0.0
        %1147 = vmatprep.subr.mxu0 0.0
        %1148 = vmatpush1.xpose.msra.mxu0 0.0
        %1149 = vmatprep.subr.mxu0 0.0
        %1150 = vmatpush1.xpose.msra.mxu0 0.0
        %1151 = vmatprep.subr.mxu0 0.0
        %1152 = vmatpush1.xpose.msra.mxu0 0.0
        %1153 = vmatprep.subr.mxu0 0.0
        %1154 = vmatpush1.xpose.msra.mxu0 0.0
        %1155 = vmatprep.subr.mxu0 0.0
        %1156 = vmatpush1.xpose.msra.mxu0 0.0
        %1157 = vmatprep.subr.mxu0 0.0
        %1158 = vmatpush1.xpose.msra.mxu0 0.0
        %1159 = vmatprep.subr.mxu0 0.0
        %1160 = vmatpush1.xpose.msra.mxu0 0.0
        %1161 = vmatprep.subr.mxu0 0.0
        %1162 = vmatpush1.xpose.msra.mxu0 0.0
        %1163 = vmatprep.subr.mxu0 0.0
        %1164 = vmatpush1.xpose.msra.mxu0 0.0
        %1165 = vmatprep.subr.mxu0 0.0
        %1166 = vmatpush1.xpose.msra.mxu0 0.0
        %1167 = vmatprep.subr.mxu0 0.0
        %1168 = vmatpush1.xpose.msra.mxu0 0.0
        %1169 = vmatprep.subr.mxu0 0.0
        %1170 = vmatpush1.xpose.msra.mxu0 0.0
        %1171 = vmatprep.subr.mxu0 0.0
        %1172 = vmatpush1.xpose.msra.mxu0 0.0
        %1173 = vmatprep.subr.mxu0 0.0
        %1174 = vmatpush1.xpose.msra.mxu0 0.0
        %1175 = vmatprep.subr.mxu0 0.0
        %1176 = vmatpush1.xpose.msra.mxu0 0.0
        %1177 = vmatprep.subr.mxu0 0.0
        %1178 = vmatpush1.xpose.msra.mxu0 0.0
        %1179 = vmatprep.subr.mxu0 0.0
        %1180 = vmatpush1.xpose.msra.mxu0 0.0
        %1181 = vmatprep.subr.mxu0 0.0
        %1182 = vmatpush1.xpose.msra.mxu0 0.0
        %1183 = vmatprep.subr.mxu0 0.0
        %1184 = vmatpush1.xpose.msra.mxu0 0.0
        %1185 = vmatprep.subr.mxu0 0.0
        %1186 = vmatpush1.xpose.msra.mxu0 0.0
        %1187 = vmatprep.subr.mxu0 0.0
        %1188 = vmatpush1.xpose.msra.mxu0 0.0
        %1189 = vmatprep.subr.mxu0 0.0
        %1190 = vmatpush1.xpose.msra.mxu0 0.0
        %1191 = vmatprep.subr.mxu0 0.0
        %1192 = vmatpush1.xpose.msra.mxu0 0.0
        %1193 = vmatprep.subr.mxu0 0.0
        %1194 = vmatpush1.xpose.msra.mxu0 0.0
        %1195 = vmatprep.subr.mxu0 0.0
        %1196 = vmatpush1.xpose.msra.mxu0 0.0
        %1197 = vmatprep.subr.mxu0 0.0
        %1198 = vmatpush1.xpose.msra.mxu0 0.0
        %1199 = vmatprep.subr.mxu0 0.0
        %1200 = vmatpush1.xpose.msra.mxu0 0.0
        %1201 = vmatprep.mubr.f32.mxu0 0.0
        %1202 = vmatmul.mubr.f32.gmra.mrb[0].mxu0 %v1135
        %v1203 = vpop.f32.mrb[0].mxu0
        %v1204 = vadd.f32 %v663, %v1203
        %v1205 = vpop.f32.mrb[0].mxu0
        %1206 = vdwg.mxu0
        %v1207 = vsel %vm858, %v1204, -inf
        %1208 = vmax.xlane.f32.xlu0 %v1207
        %v1209 = vpop.xlane.xlu0 %1208
        %v1210 = vsub.f32 %v1204, %v1209
        %v1211 = vmul.f32 %v1210, 1.442695
        %v1212 = vpow.pop %v1211
        %v1213 = vsel %vm858, %v1212, 0.0
        %1214 = vadd.xlane.f32.xlu0 %v1213
        %v1215 = vpop.xlane.xlu0 %1214
        %v1216 = vrcp.pop %v1215
        %v1217 = vmul.f32 %v1212, %v1216
        %1218 = vrot.lane.b32.xlu0 %v1131, 64
        %v1219 = vpop.permute.xlu0 %1218
        %v1221 = vmul.f32 %v769, %v1219
        %1223 = vrot.lane.b32.xlu0 %v1221, 64
        %v1224 = vpop.permute.xlu0 %1223
        %v1227 = vsel %vm858, %v1217, 0
        %1229 = vmatprep.subr.mxu0 0.0
        %1230 = vmatpush1.msra.mxu0 %v1224
        %1231 = vmatprep.subr.mxu0 0.0
        %1232 = vmatpush1.msra.mxu0 0.0
        %1233 = vmatprep.subr.mxu0 0.0
        %1234 = vmatpush1.msra.mxu0 0.0
        %1235 = vmatprep.subr.mxu0 0.0
        %1236 = vmatpush1.msra.mxu0 0.0
        %1237 = vmatprep.subr.mxu0 0.0
        %1238 = vmatpush1.msra.mxu0 0.0
        %1239 = vmatprep.subr.mxu0 0.0
        %1240 = vmatpush1.msra.mxu0 0.0
        %1241 = vmatprep.subr.mxu0 0.0
        %1242 = vmatpush1.msra.mxu0 0.0
        %1243 = vmatprep.subr.mxu0 0.0
        %1244 = vmatpush1.msra.mxu0 0.0
        %1245 = vmatprep.subr.mxu0 0.0
        %1246 = vmatpush1.msra.mxu0 0.0
        %1247 = vmatprep.subr.mxu0 0.0
        %1248 = vmatpush1.msra.mxu0 0.0
        %1249 = vmatprep.subr.mxu0 0.0
        %1250 = vmatpush1.msra.mxu0 0.0
        %1251 = vmatprep.subr.mxu0 0.0
        %1252 = vmatpush1.msra.mxu0 0.0
        %1253 = vmatprep.subr.mxu0 0.0
        %1254 = vmatpush1.msra.mxu0 0.0
        %1255 = vmatprep.subr.mxu0 0.0
        %1256 = vmatpush1.msra.mxu0 0.0
        %1257 = vmatprep.subr.mxu0 0.0
        %1258 = vmatpush1.msra.mxu0 0.0
        %1259 = vmatprep.subr.mxu0 0.0
        %1260 = vmatpush1.msra.mxu0 0.0
        %1261 = vmatprep.subr.mxu0 0.0
        %1262 = vmatpush1.msra.mxu0 0.0
        %1263 = vmatprep.subr.mxu0 0.0
        %1264 = vmatpush1.msra.mxu0 0.0
        %1265 = vmatprep.subr.mxu0 0.0
        %1266 = vmatpush1.msra.mxu0 0.0
        %1267 = vmatprep.subr.mxu0 0.0
        %1268 = vmatpush1.msra.mxu0 0.0
        %1269 = vmatprep.subr.mxu0 0.0
        %1270 = vmatpush1.msra.mxu0 0.0
        %1271 = vmatprep.subr.mxu0 0.0
        %1272 = vmatpush1.msra.mxu0 0.0
        %1273 = vmatprep.subr.mxu0 0.0
        %1274 = vmatpush1.msra.mxu0 0.0
        %1275 = vmatprep.subr.mxu0 0.0
        %1276 = vmatpush1.msra.mxu0 0.0
        %1277 = vmatprep.subr.mxu0 0.0
        %1278 = vmatpush1.msra.mxu0 0.0
        %1279 = vmatprep.subr.mxu0 0.0
        %1280 = vmatpush1.msra.mxu0 0.0
        %1281 = vmatprep.subr.mxu0 0.0
        %1282 = vmatpush1.msra.mxu0 0.0
        %1283 = vmatprep.subr.mxu0 0.0
        %1284 = vmatpush1.msra.mxu0 0.0
        %1285 = vmatprep.subr.mxu0 0.0
        %1286 = vmatpush1.msra.mxu0 0.0
        %1287 = vmatprep.subr.mxu0 0.0
        %1288 = vmatpush1.msra.mxu0 0.0
        %1289 = vmatprep.subr.mxu0 0.0
        %1290 = vmatpush1.msra.mxu0 0.0
        %1291 = vmatprep.subr.mxu0 0.0
        %1292 = vmatpush1.msra.mxu0 0.0
        %1293 = vmatprep.mubr.f32.mxu0 0.0
        %1294 = vmatmul.mubr.f32.gmra.mrb[0].mxu0 %v1227
        %v1295 = vpop.f32.mrb[0].mxu0
        %v1296 = vadd.f32 0.0, %v1295
        %v1297 = vpop.f32.mrb[0].mxu0
        %1298 = vdwg.mxu0
        %v1299 = vadd.f32 %v1122, %v1296
        %s1300 = scalar_lea.vmem %s4, 3
        %v1301 = vld [vmem:[%s1300] sm:$0x1]
        %v1303 = vlaneseq
        %v1304 = vshrl.u32 %v1303, 7
        %v1305 = vsub.s32 0, %v1304
        %v1306 = vrot.slane %v1301, %v1305
        %v1308 = vmul.f32 %v769, %v1306
        %v1310 = vsel %vm666, %v1308, 0
        %1312 = vmatprep.subr.mxu0 0.0
        %1313 = vmatpush1.xpose.msra.mxu0 %v786
        %1314 = vmatprep.subr.mxu0 0.0
        %1315 = vmatpush1.xpose.msra.mxu0 0.0
        %1316 = vmatprep.subr.mxu0 0.0
        %1317 = vmatpush1.xpose.msra.mxu0 0.0
        %1318 = vmatprep.subr.mxu0 0.0
        %1319 = vmatpush1.xpose.msra.mxu0 0.0
        %1320 = vmatprep.subr.mxu0 0.0
        %1321 = vmatpush1.xpose.msra.mxu0 0.0
        %1322 = vmatprep.subr.mxu0 0.0
        %1323 = vmatpush1.xpose.msra.mxu0 0.0
        %1324 = vmatprep.subr.mxu0 0.0
        %1325 = vmatpush1.xpose.msra.mxu0 0.0
        %1326 = vmatprep.subr.mxu0 0.0
        %1327 = vmatpush1.xpose.msra.mxu0 0.0
        %1328 = vmatprep.subr.mxu0 0.0
        %1329 = vmatpush1.xpose.msra.mxu0 0.0
        %1330 = vmatprep.subr.mxu0 0.0
        %1331 = vmatpush1.xpose.msra.mxu0 0.0
        %1332 = vmatprep.subr.mxu0 0.0
        %1333 = vmatpush1.xpose.msra.mxu0 0.0
        %1334 = vmatprep.subr.mxu0 0.0
        %1335 = vmatpush1.xpose.msra.mxu0 0.0
        %1336 = vmatprep.subr.mxu0 0.0
        %1337 = vmatpush1.xpose.msra.mxu0 0.0
        %1338 = vmatprep.subr.mxu0 0.0
        %1339 = vmatpush1.xpose.msra.mxu0 0.0
        %1340 = vmatprep.subr.mxu0 0.0
        %1341 = vmatpush1.xpose.msra.mxu0 0.0
        %1342 = vmatprep.subr.mxu0 0.0
        %1343 = vmatpush1.xpose.msra.mxu0 0.0
        %1344 = vmatprep.subr.mxu0 0.0
        %1345 = vmatpush1.xpose.msra.mxu0 0.0
        %1346 = vmatprep.subr.mxu0 0.0
        %1347 = vmatpush1.xpose.msra.mxu0 0.0
        %1348 = vmatprep.subr.mxu0 0.0
        %1349 = vmatpush1.xpose.msra.mxu0 0.0
        %1350 = vmatprep.subr.mxu0 0.0
        %1351 = vmatpush1.xpose.msra.mxu0 0.0
        %1352 = vmatprep.subr.mxu0 0.0
        %1353 = vmatpush1.xpose.msra.mxu0 0.0
        %1354 = vmatprep.subr.mxu0 0.0
        %1355 = vmatpush1.xpose.msra.mxu0 0.0
        %1356 = vmatprep.subr.mxu0 0.0
        %1357 = vmatpush1.xpose.msra.mxu0 0.0
        %1358 = vmatprep.subr.mxu0 0.0
        %1359 = vmatpush1.xpose.msra.mxu0 0.0
        %1360 = vmatprep.subr.mxu0 0.0
        %1361 = vmatpush1.xpose.msra.mxu0 0.0
        %1362 = vmatprep.subr.mxu0 0.0
        %1363 = vmatpush1.xpose.msra.mxu0 0.0
        %1364 = vmatprep.subr.mxu0 0.0
        %1365 = vmatpush1.xpose.msra.mxu0 0.0
        %1366 = vmatprep.subr.mxu0 0.0
        %1367 = vmatpush1.xpose.msra.mxu0 0.0
        %1368 = vmatprep.subr.mxu0 0.0
        %1369 = vmatpush1.xpose.msra.mxu0 0.0
        %1370 = vmatprep.subr.mxu0 0.0
        %1371 = vmatpush1.xpose.msra.mxu0 0.0
        %1372 = vmatprep.subr.mxu0 0.0
        %1373 = vmatpush1.xpose.msra.mxu0 0.0
        %1374 = vmatprep.subr.mxu0 0.0
        %1375 = vmatpush1.xpose.msra.mxu0 0.0
        %1376 = vmatprep.mubr.f32.mxu0 0.0
        %1377 = vmatmul.mubr.f32.gmra.mrb[0].mxu0 %v1310
        %v1378 = vpop.f32.mrb[0].mxu0
        %v1379 = vadd.f32 %v663, %v1378
        %v1380 = vpop.f32.mrb[0].mxu0
        %1381 = vdwg.mxu0
        %v1382 = vsel %vm858, %v1379, -inf
        %1383 = vmax.xlane.f32.xlu0 %v1382
        %v1384 = vpop.xlane.xlu0 %1383
        %v1385 = vsub.f32 %v1379, %v1384
        %v1386 = vmul.f32 %v1385, 1.442695
        %v1387 = vpow.pop %v1386
        %v1388 = vsel %vm858, %v1387, 0.0
        %1389 = vadd.xlane.f32.xlu0 %v1388
        %v1390 = vpop.xlane.xlu0 %1389
        %v1391 = vrcp.pop %v1390
        %v1392 = vmul.f32 %v1387, %v1391
        %1393 = vrot.lane.b32.xlu0 %v1306, 64
        %v1394 = vpop.permute.xlu0 %1393
        %v1396 = vmul.f32 %v769, %v1394
        %1398 = vrot.lane.b32.xlu0 %v1396, 64
        %v1399 = vpop.permute.xlu0 %1398
        %v1402 = vsel %vm858, %v1392, 0
        %1404 = vmatprep.subr.mxu0 0.0
        %1405 = vmatpush1.msra.mxu0 %v1399
        %1406 = vmatprep.subr.mxu0 0.0
        %1407 = vmatpush1.msra.mxu0 0.0
        %1408 = vmatprep.subr.mxu0 0.0
        %1409 = vmatpush1.msra.mxu0 0.0
        %1410 = vmatprep.subr.mxu0 0.0
        %1411 = vmatpush1.msra.mxu0 0.0
        %1412 = vmatprep.subr.mxu0 0.0
        %1413 = vmatpush1.msra.mxu0 0.0
        %1414 = vmatprep.subr.mxu0 0.0
        %1415 = vmatpush1.msra.mxu0 0.0
        %1416 = vmatprep.subr.mxu0 0.0
        %1417 = vmatpush1.msra.mxu0 0.0
        %1418 = vmatprep.subr.mxu0 0.0
        %1419 = vmatpush1.msra.mxu0 0.0
        %1420 = vmatprep.subr.mxu0 0.0
        %1421 = vmatpush1.msra.mxu0 0.0
        %1422 = vmatprep.subr.mxu0 0.0
        %1423 = vmatpush1.msra.mxu0 0.0
        %1424 = vmatprep.subr.mxu0 0.0
        %1425 = vmatpush1.msra.mxu0 0.0
        %1426 = vmatprep.subr.mxu0 0.0
        %1427 = vmatpush1.msra.mxu0 0.0
        %1428 = vmatprep.subr.mxu0 0.0
        %1429 = vmatpush1.msra.mxu0 0.0
        %1430 = vmatprep.subr.mxu0 0.0
        %1431 = vmatpush1.msra.mxu0 0.0
        %1432 = vmatprep.subr.mxu0 0.0
        %1433 = vmatpush1.msra.mxu0 0.0
        %1434 = vmatprep.subr.mxu0 0.0
        %1435 = vmatpush1.msra.mxu0 0.0
        %1436 = vmatprep.subr.mxu0 0.0
        %1437 = vmatpush1.msra.mxu0 0.0
        %1438 = vmatprep.subr.mxu0 0.0
        %1439 = vmatpush1.msra.mxu0 0.0
        %1440 = vmatprep.subr.mxu0 0.0
        %1441 = vmatpush1.msra.mxu0 0.0
        %1442 = vmatprep.subr.mxu0 0.0
        %1443 = vmatpush1.msra.mxu0 0.0
        %1444 = vmatprep.subr.mxu0 0.0
        %1445 = vmatpush1.msra.mxu0 0.0
        %1446 = vmatprep.subr.mxu0 0.0
        %1447 = vmatpush1.msra.mxu0 0.0
        %1448 = vmatprep.subr.mxu0 0.0
        %1449 = vmatpush1.msra.mxu0 0.0
        %1450 = vmatprep.subr.mxu0 0.0
        %1451 = vmatpush1.msra.mxu0 0.0
        %1452 = vmatprep.subr.mxu0 0.0
        %1453 = vmatpush1.msra.mxu0 0.0
        %1454 = vmatprep.subr.mxu0 0.0
        %1455 = vmatpush1.msra.mxu0 0.0
        %1456 = vmatprep.subr.mxu0 0.0
        %1457 = vmatpush1.msra.mxu0 0.0
        %1458 = vmatprep.subr.mxu0 0.0
        %1459 = vmatpush1.msra.mxu0 0.0
        %1460 = vmatprep.subr.mxu0 0.0
        %1461 = vmatpush1.msra.mxu0 0.0
        %1462 = vmatprep.subr.mxu0 0.0
        %1463 = vmatpush1.msra.mxu0 0.0
        %1464 = vmatprep.subr.mxu0 0.0
        %1465 = vmatpush1.msra.mxu0 0.0
        %1466 = vmatprep.subr.mxu0 0.0
        %1467 = vmatpush1.msra.mxu0 0.0
        %1468 = vmatprep.mubr.f32.mxu0 0.0
        %1469 = vmatmul.mubr.f32.gmra.mrb[0].mxu0 %v1402
        %v1470 = vpop.f32.mrb[0].mxu0
        %v1471 = vadd.f32 0.0, %v1470
        %v1472 = vpop.f32.mrb[0].mxu0
        %1473 = vdwg.mxu0
        %v1474 = vadd.f32 %v1299, %v1471
        %v1475 = vadd.f32 %v660, %v1474
        %v1476 = vld [vmem:[%s8] sm:$0x1]
        %v1477 = vld [vmem:[%s9] sm:$0x1]
        %v1478 = vsel %vm666, %v1475, 0.0
        %1479 = vadd.xlane.f32.xlu0 %v1478
        %v1480 = vpop.xlane.xlu0 %1479
        %v1481 = vmul.f32 %v1480, %v670
        %v1482 = vsub.f32 %v1475, %v1481
        %v1483 = vmul.f32 %v1482, %v1482
        %v1484 = vsel %vm666, %v1483, 0.0
        %1485 = vadd.xlane.f32.xlu0 %v1484
        %v1486 = vpop.xlane.xlu0 %1485
        %v1487 = vmul.f32 %v1486, %v670
        %v1488 = vadd.f32 %v1487, 1e-05
        %v1489 = vrsqrt.pop %v1488
        %v1490 = vmul.f32 %v1482, %v1489
        %v1492 = vlaneseq
        %v1493 = vshrl.u32 %v1492, 7
        %v1494 = vsub.s32 0, %v1493
        %v1495 = vrot.slane %v1476, %v1494
        %v1497 = vmul.f32 %v1490, %v1495
        %v1499 = vlaneseq
        %v1500 = vshrl.u32 %v1499, 7
        %v1501 = vsub.s32 0, %v1500
        %v1502 = vrot.slane %v1477, %v1501
        %v1504 = vadd.f32 %v1497, %v1502
        %v1505 = vld [vmem:[%s10] sm:$0xff]
        %v1506 = vld [vmem:[%s10 + $0x8] sm:$0xff]
        %v1507 = vld [vmem:[%s10 + $0x10] sm:$0xff]
        %v1508 = vld [vmem:[%s10 + $0x18] sm:$0xff]
        %v1509 = vld [vmem:[%s11] sm:$0x1]
        %v1511 = vlaneseq
        %v1512 = vshrl.u32 %v1511, 7
        %v1513 = vsub.s32 0, %v1512
        %v1514 = vrot.slane %v1509, %v1513
        %v1517 = vsel %vm666, %v1504, 0
        %1519 = vmatprep.subr.mxu0 0.0
        %1520 = vmatpush1.msra.mxu0 %v1505
        %1521 = vmatprep.subr.mxu0 0.0
        %1522 = vmatpush1.msra.mxu0 %v1506
        %1523 = vmatprep.subr.mxu0 0.0
        %1524 = vmatpush1.msra.mxu0 %v1507
        %1525 = vmatprep.subr.mxu0 0.0
        %1526 = vmatpush1.msra.mxu0 %v1508
        %1527 = vmatprep.subr.mxu0 0.0
        %1528 = vmatpush1.msra.mxu0 0.0
        %1529 = vmatprep.subr.mxu0 0.0
        %1530 = vmatpush1.msra.mxu0 0.0
        %1531 = vmatprep.subr.mxu0 0.0
        %1532 = vmatpush1.msra.mxu0 0.0
        %1533 = vmatprep.subr.mxu0 0.0
        %1534 = vmatpush1.msra.mxu0 0.0
        %1535 = vmatprep.subr.mxu0 0.0
        %1536 = vmatpush1.msra.mxu0 0.0
        %1537 = vmatprep.subr.mxu0 0.0
        %1538 = vmatpush1.msra.mxu0 0.0
        %1539 = vmatprep.subr.mxu0 0.0
        %1540 = vmatpush1.msra.mxu0 0.0
        %1541 = vmatprep.subr.mxu0 0.0
        %1542 = vmatpush1.msra.mxu0 0.0
        %1543 = vmatprep.subr.mxu0 0.0
        %1544 = vmatpush1.msra.mxu0 0.0
        %1545 = vmatprep.subr.mxu0 0.0
        %1546 = vmatpush1.msra.mxu0 0.0
        %1547 = vmatprep.subr.mxu0 0.0
        %1548 = vmatpush1.msra.mxu0 0.0
        %1549 = vmatprep.subr.mxu0 0.0
        %1550 = vmatpush1.msra.mxu0 0.0
        %1551 = vmatprep.subr.mxu0 0.0
        %1552 = vmatpush1.msra.mxu0 0.0
        %1553 = vmatprep.subr.mxu0 0.0
        %1554 = vmatpush1.msra.mxu0 0.0
        %1555 = vmatprep.subr.mxu0 0.0
        %1556 = vmatpush1.msra.mxu0 0.0
        %1557 = vmatprep.subr.mxu0 0.0
        %1558 = vmatpush1.msra.mxu0 0.0
        %1559 = vmatprep.subr.mxu0 0.0
        %1560 = vmatpush1.msra.mxu0 0.0
        %1561 = vmatprep.subr.mxu0 0.0
        %1562 = vmatpush1.msra.mxu0 0.0
        %1563 = vmatprep.subr.mxu0 0.0
        %1564 = vmatpush1.msra.mxu0 0.0
        %1565 = vmatprep.subr.mxu0 0.0
        %1566 = vmatpush1.msra.mxu0 0.0
        %1567 = vmatprep.subr.mxu0 0.0
        %1568 = vmatpush1.msra.mxu0 0.0
        %1569 = vmatprep.subr.mxu0 0.0
        %1570 = vmatpush1.msra.mxu0 0.0
        %1571 = vmatprep.subr.mxu0 0.0
        %1572 = vmatpush1.msra.mxu0 0.0
        %1573 = vmatprep.subr.mxu0 0.0
        %1574 = vmatpush1.msra.mxu0 0.0
        %1575 = vmatprep.subr.mxu0 0.0
        %1576 = vmatpush1.msra.mxu0 0.0
        %1577 = vmatprep.subr.mxu0 0.0
        %1578 = vmatpush1.msra.mxu0 0.0
        %1579 = vmatprep.subr.mxu0 0.0
        %1580 = vmatpush1.msra.mxu0 0.0
        %1581 = vmatprep.subr.mxu0 0.0
        %1582 = vmatpush1.msra.mxu0 0.0
        %1583 = vmatprep.mubr.f32.mxu0 0.0
        %1584 = vmatmul.mubr.f32.gmra.mrb[0].mxu0 %v1517
        %v1585 = vpop.f32.mrb[0].mxu0
        %v1586 = vadd.f32 %v1514, %v1585
        %v1587 = vpop.f32.mrb[0].mxu0
        %1588 = vdwg.mxu0
        %v1589 = vmax.f32 %v1586, 0.0
        %v1590 = vld [vmem:[%s12] sm:$0xff]
        %v1591 = vld [vmem:[%s12 + $0x8] sm:$0xff]
        %v1592 = vld [vmem:[%s12 + $0x10] sm:$0xff]
        %v1593 = vld [vmem:[%s12 + $0x18] sm:$0xff]
        %v1594 = vld [vmem:[%s12 + $0x20] sm:$0xff]
        %v1595 = vld [vmem:[%s12 + $0x28] sm:$0xff]
        %v1596 = vld [vmem:[%s12 + $0x30] sm:$0xff]
        %v1597 = vld [vmem:[%s12 + $0x38] sm:$0xff]
        %v1598 = vld [vmem:[%s12 + $0x40] sm:$0xff]
        %v1599 = vld [vmem:[%s12 + $0x48] sm:$0xff]
        %v1600 = vld [vmem:[%s12 + $0x50] sm:$0xff]
        %v1601 = vld [vmem:[%s12 + $0x58] sm:$0xff]
        %v1602 = vld [vmem:[%s12 + $0x60] sm:$0xff]
        %v1603 = vld [vmem:[%s12 + $0x68] sm:$0xff]
        %v1604 = vld [vmem:[%s12 + $0x70] sm:$0xff]
        %v1605 = vld [vmem:[%s12 + $0x78] sm:$0xff]
        %1606 = vmatprep.subr.mxu0 0.0
        %1607 = vmatpush1.msra.mxu0 %v1590
        %1608 = vmatprep.subr.mxu0 0.0
        %1609 = vmatpush1.msra.mxu0 %v1591
        %1610 = vmatprep.subr.mxu0 0.0
        %1611 = vmatpush1.msra.mxu0 %v1592
        %1612 = vmatprep.subr.mxu0 0.0
        %1613 = vmatpush1.msra.mxu0 %v1593
        %1614 = vmatprep.subr.mxu0 0.0
        %1615 = vmatpush1.msra.mxu0 %v1594
        %1616 = vmatprep.subr.mxu0 0.0
        %1617 = vmatpush1.msra.mxu0 %v1595
        %1618 = vmatprep.subr.mxu0 0.0
        %1619 = vmatpush1.msra.mxu0 %v1596
        %1620 = vmatprep.subr.mxu0 0.0
        %1621 = vmatpush1.msra.mxu0 %v1597
        %1622 = vmatprep.subr.mxu0 0.0
        %1623 = vmatpush1.msra.mxu0 %v1598
        %1624 = vmatprep.subr.mxu0 0.0
        %1625 = vmatpush1.msra.mxu0 %v1599
        %1626 = vmatprep.subr.mxu0 0.0
        %1627 = vmatpush1.msra.mxu0 %v1600
        %1628 = vmatprep.subr.mxu0 0.0
        %1629 = vmatpush1.msra.mxu0 %v1601
        %1630 = vmatprep.subr.mxu0 0.0
        %1631 = vmatpush1.msra.mxu0 %v1602
        %1632 = vmatprep.subr.mxu0 0.0
        %1633 = vmatpush1.msra.mxu0 %v1603
        %1634 = vmatprep.subr.mxu0 0.0
        %1635 = vmatpush1.msra.mxu0 %v1604
        %1636 = vmatprep.subr.mxu0 0.0
        %1637 = vmatpush1.msra.mxu0 %v1605
        %1638 = vmatprep.subr.mxu0 0.0
        %1639 = vmatpush1.msra.mxu0 0.0
        %1640 = vmatprep.subr.mxu0 0.0
        %1641 = vmatpush1.msra.mxu0 0.0
        %1642 = vmatprep.subr.mxu0 0.0
        %1643 = vmatpush1.msra.mxu0 0.0
        %1644 = vmatprep.subr.mxu0 0.0
        %1645 = vmatpush1.msra.mxu0 0.0
        %1646 = vmatprep.subr.mxu0 0.0
        %1647 = vmatpush1.msra.mxu0 0.0
        %1648 = vmatprep.subr.mxu0 0.0
        %1649 = vmatpush1.msra.mxu0 0.0
        %1650 = vmatprep.subr.mxu0 0.0
        %1651 = vmatpush1.msra.mxu0 0.0
        %1652 = vmatprep.subr.mxu0 0.0
        %1653 = vmatpush1.msra.mxu0 0.0
        %1654 = vmatprep.subr.mxu0 0.0
        %1655 = vmatpush1.msra.mxu0 0.0
        %1656 = vmatprep.subr.mxu0 0.0
        %1657 = vmatpush1.msra.mxu0 0.0
        %1658 = vmatprep.subr.mxu0 0.0
        %1659 = vmatpush1.msra.mxu0 0.0
        %1660 = vmatprep.subr.mxu0 0.0
        %1661 = vmatpush1.msra.mxu0 0.0
        %1662 = vmatprep.subr.mxu0 0.0
        %1663 = vmatpush1.msra.mxu0 0.0
        %1664 = vmatprep.subr.mxu0 0.0
        %1665 = vmatpush1.msra.mxu0 0.0
        %1666 = vmatprep.subr.mxu0 0.0
        %1667 = vmatpush1.msra.mxu0 0.0
        %1668 = vmatprep.subr.mxu0 0.0
        %1669 = vmatpush1.msra.mxu0 0.0
        %1670 = vmatprep.mubr.f32.mxu0 0.0
        %1671 = vmatmul.mubr.f32.gmra.mrb[0].mxu0 %v1589
        %v1672 = vpop.f32.mrb[0].mxu0
        %v1673 = vadd.f32 0.0, %v1672
        %v1674 = vpop.f32.mrb[0].mxu0
        %1675 = vdwg.mxu0
        %v1676 = vadd.f32 %v1475, %v1673
        %v1677 = vld [vmem:[%s13] sm:$0x1]
        %v1679 = vlaneseq
        %v1680 = vshrl.u32 %v1679, 7
        %v1681 = vsub.s32 0, %v1680
        %v1682 = vrot.slane %v1677, %v1681
        %v1684 = vadd.f32 %v1676, %v1682
        %s1685 = scalar_lea.vmem %s5, 1
        %v1686 = vld [vmem:[%s1685] sm:$0x1]
        %s1687 = scalar_lea.vmem %s6, 1
        %v1688 = vld [vmem:[%s1687] sm:$0x1]
        %v1689 = vsel %vm666, %v1684, 0.0
        %1690 = vadd.xlane.f32.xlu0 %v1689
        %v1691 = vpop.xlane.xlu0 %1690
        %v1692 = vmul.f32 %v1691, %v670
        %v1693 = vsub.f32 %v1684, %v1692
        %v1694 = vmul.f32 %v1693, %v1693
        %v1695 = vsel %vm666, %v1694, 0.0
        %1696 = vadd.xlane.f32.xlu0 %v1695
        %v1697 = vpop.xlane.xlu0 %1696
        %v1698 = vmul.f32 %v1697, %v670
        %v1699 = vadd.f32 %v1698, 1e-05
        %v1700 = vrsqrt.pop %v1699
        %v1701 = vmul.f32 %v1693, %v1700
        %v1703 = vlaneseq
        %v1704 = vshrl.u32 %v1703, 7
        %v1705 = vsub.s32 0, %v1704
        %v1706 = vrot.slane %v1686, %v1705
        %v1708 = vmul.f32 %v1701, %v1706
        %v1710 = vlaneseq
        %v1711 = vshrl.u32 %v1710, 7
        %v1712 = vsub.s32 0, %v1711
        %v1713 = vrot.slane %v1688, %v1712
        %v1715 = vadd.f32 %v1708, %v1713
        %s1716 = scalar_lea.vmem %s7, 32
        %v1717 = vld [vmem:[%s1716] sm:$0xff]
        %v1718 = vld [vmem:[%s1716 + $0x8] sm:$0xff]
        %v1719 = vld [vmem:[%s1716 + $0x10] sm:$0xff]
        %v1720 = vld [vmem:[%s1716 + $0x18] sm:$0xff]
        %v1722 = vsel %vm666, %v1715, 0
        %1724 = vmatprep.subr.mxu0 0.0
        %1725 = vmatpush1.msra.mxu0 %v1717
        %1726 = vmatprep.subr.mxu0 0.0
        %1727 = vmatpush1.msra.mxu0 %v1718
        %1728 = vmatprep.subr.mxu0 0.0
        %1729 = vmatpush1.msra.mxu0 %v1719
        %1730 = vmatprep.subr.mxu0 0.0
        %1731 = vmatpush1.msra.mxu0 %v1720
        %1732 = vmatprep.subr.mxu0 0.0
        %1733 = vmatpush1.msra.mxu0 0.0
        %1734 = vmatprep.subr.mxu0 0.0
        %1735 = vmatpush1.msra.mxu0 0.0
        %1736 = vmatprep.subr.mxu0 0.0
        %1737 = vmatpush1.msra.mxu0 0.0
        %1738 = vmatprep.subr.mxu0 0.0
        %1739 = vmatpush1.msra.mxu0 0.0
        %1740 = vmatprep.subr.mxu0 0.0
        %1741 = vmatpush1.msra.mxu0 0.0
        %1742 = vmatprep.subr.mxu0 0.0
        %1743 = vmatpush1.msra.mxu0 0.0
        %1744 = vmatprep.subr.mxu0 0.0
        %1745 = vmatpush1.msra.mxu0 0.0
        %1746 = vmatprep.subr.mxu0 0.0
        %1747 = vmatpush1.msra.mxu0 0.0
        %1748 = vmatprep.subr.mxu0 0.0
        %1749 = vmatpush1.msra.mxu0 0.0
        %1750 = vmatprep.subr.mxu0 0.0
        %1751 = vmatpush1.msra.mxu0 0.0
        %1752 = vmatprep.subr.mxu0 0.0
        %1753 = vmatpush1.msra.mxu0 0.0
        %1754 = vmatprep.subr.mxu0 0.0
        %1755 = vmatpush1.msra.mxu0 0.0
        %1756 = vmatprep.subr.mxu0 0.0
        %1757 = vmatpush1.msra.mxu0 0.0
        %1758 = vmatprep.subr.mxu0 0.0
        %1759 = vmatpush1.msra.mxu0 0.0
        %1760 = vmatprep.subr.mxu0 0.0
        %1761 = vmatpush1.msra.mxu0 0.0
        %1762 = vmatprep.subr.mxu0 0.0
        %1763 = vmatpush1.msra.mxu0 0.0
        %1764 = vmatprep.subr.mxu0 0.0
        %1765 = vmatpush1.msra.mxu0 0.0
        %1766 = vmatprep.subr.mxu0 0.0
        %1767 = vmatpush1.msra.mxu0 0.0
        %1768 = vmatprep.subr.mxu0 0.0
        %1769 = vmatpush1.msra.mxu0 0.0
        %1770 = vmatprep.subr.mxu0 0.0
        %1771 = vmatpush1.msra.mxu0 0.0
        %1772 = vmatprep.subr.mxu0 0.0
        %1773 = vmatpush1.msra.mxu0 0.0
        %1774 = vmatprep.subr.mxu0 0.0
        %1775 = vmatpush1.msra.mxu0 0.0
        %1776 = vmatprep.subr.mxu0 0.0
        %1777 = vmatpush1.msra.mxu0 0.0
        %1778 = vmatprep.subr.mxu0 0.0
        %1779 = vmatpush1.msra.mxu0 0.0
        %1780 = vmatprep.subr.mxu0 0.0
        %1781 = vmatpush1.msra.mxu0 0.0
        %1782 = vmatprep.subr.mxu0 0.0
        %1783 = vmatpush1.msra.mxu0 0.0
        %1784 = vmatprep.subr.mxu0 0.0
        %1785 = vmatpush1.msra.mxu0 0.0
        %1786 = vmatprep.subr.mxu0 0.0
        %1787 = vmatpush1.msra.mxu0 0.0
        %1788 = vmatprep.mubr.f32.mxu0 0.0
        %1789 = vmatmul.mubr.f32.gmra.mrb[0].mxu0 %v1722
        %v1790 = vpop.f32.mrb[0].mxu0
        %v1791 = vadd.f32 0.0, %v1790
        %v1792 = vpop.f32.mrb[0].mxu0
        %1793 = vdwg.mxu0
        %v1794 = vmul.f32 %v1791, %v777
        %1796 = vrot.lane.b32.xlu0 %v1791, 96
        %v1797 = vpop.permute.xlu0 %1796
        %v1799 = vsel %vm666, %v1794, 0
        %v1801 = vsel %vm666, %v1797, 0
        %1803 = vmatprep.subr.mxu0 0.0
        %1804 = vmatpush1.xpose.msra.mxu0 %v1801
        %1805 = vmatprep.subr.mxu0 0.0
        %1806 = vmatpush1.xpose.msra.mxu0 0.0
        %1807 = vmatprep.subr.mxu0 0.0
        %1808 = vmatpush1.xpose.msra.mxu0 0.0
        %1809 = vmatprep.subr.mxu0 0.0
        %1810 = vmatpush1.xpose.msra.mxu0 0.0
        %1811 = vmatprep.subr.mxu0 0.0
        %1812 = vmatpush1.xpose.msra.mxu0 0.0
        %1813 = vmatprep.subr.mxu0 0.0
        %1814 = vmatpush1.xpose.msra.mxu0 0.0
        %1815 = vmatprep.subr.mxu0 0.0
        %1816 = vmatpush1.xpose.msra.mxu0 0.0
        %1817 = vmatprep.subr.mxu0 0.0
        %1818 = vmatpush1.xpose.msra.mxu0 0.0
        %1819 = vmatprep.subr.mxu0 0.0
        %1820 = vmatpush1.xpose.msra.mxu0 0.0
        %1821 = vmatprep.subr.mxu0 0.0
        %1822 = vmatpush1.xpose.msra.mxu0 0.0
        %1823 = vmatprep.subr.mxu0 0.0
        %1824 = vmatpush1.xpose.msra.mxu0 0.0
        %1825 = vmatprep.subr.mxu0 0.0
        %1826 = vmatpush1.xpose.msra.mxu0 0.0
        %1827 = vmatprep.subr.mxu0 0.0
        %1828 = vmatpush1.xpose.msra.mxu0 0.0
        %1829 = vmatprep.subr.mxu0 0.0
        %1830 = vmatpush1.xpose.msra.mxu0 0.0
        %1831 = vmatprep.subr.mxu0 0.0
        %1832 = vmatpush1.xpose.msra.mxu0 0.0
        %1833 = vmatprep.subr.mxu0 0.0
        %1834 = vmatpush1.xpose.msra.mxu0 0.0
        %1835 = vmatprep.subr.mxu0 0.0
        %1836 = vmatpush1.xpose.msra.mxu0 0.0
        %1837 = vmatprep.subr.mxu0 0.0
        %1838 = vmatpush1.xpose.msra.mxu0 0.0
        %1839 = vmatprep.subr.mxu0 0.0
        %1840 = vmatpush1.xpose.msra.mxu0 0.0
        %1841 = vmatprep.subr.mxu0 0.0
        %1842 = vmatpush1.xpose.msra.mxu0 0.0
        %1843 = vmatprep.subr.mxu0 0.0
        %1844 = vmatpush1.xpose.msra.mxu0 0.0
        %1845 = vmatprep.subr.mxu0 0.0
        %1846 = vmatpush1.xpose.msra.mxu0 0.0
        %1847 = vmatprep.subr.mxu0 0.0
        %1848 = vmatpush1.xpose.msra.mxu0 0.0
        %1849 = vmatprep.subr.mxu0 0.0
        %1850 = vmatpush1.xpose.msra.mxu0 0.0
        %1851 = vmatprep.subr.mxu0 0.0
        %1852 = vmatpush1.xpose.msra.mxu0 0.0
        %1853 = vmatprep.subr.mxu0 0.0
        %1854 = vmatpush1.xpose.msra.mxu0 0.0
        %1855 = vmatprep.subr.mxu0 0.0
        %1856 = vmatpush1.xpose.msra.mxu0 0.0
        %1857 = vmatprep.subr.mxu0 0.0
        %1858 = vmatpush1.xpose.msra.mxu0 0.0
        %1859 = vmatprep.subr.mxu0 0.0
        %1860 = vmatpush1.xpose.msra.mxu0 0.0
        %1861 = vmatprep.subr.mxu0 0.0
        %1862 = vmatpush1.xpose.msra.mxu0 0.0
        %1863 = vmatprep.subr.mxu0 0.0
        %1864 = vmatpush1.xpose.msra.mxu0 0.0
        %1865 = vmatprep.subr.mxu0 0.0
        %1866 = vmatpush1.xpose.msra.mxu0 0.0
        %1867 = vmatprep.mubr.f32.mxu0 0.0
        %1868 = vmatmul.mubr.f32.gmra.mrb[0].mxu0 %v1799
        %v1869 = vpop.f32.mrb[0].mxu0
        %v1870 = vadd.f32 %v663, %v1869
        %v1871 = vpop.f32.mrb[0].mxu0
        %1872 = vdwg.mxu0
        %v1873 = vsel %vm858, %v1870, -inf
        %1874 = vmax.xlane.f32.xlu0 %v1873
        %v1875 = vpop.xlane.xlu0 %1874
        %v1876 = vsub.f32 %v1870, %v1875
        %v1877 = vmul.f32 %v1876, 1.442695
        %v1878 = vpow.pop %v1877
        %v1879 = vsel %vm858, %v1878, 0.0
        %1880 = vadd.xlane.f32.xlu0 %v1879
        %v1881 = vpop.xlane.xlu0 %1880
        %v1882 = vrcp.pop %v1881
        %v1883 = vmul.f32 %v1878, %v1882
        %v1884 = vmul.f32 %v1791, %v871
        %v1885 = vmul.f32 %v1791, %v880
        %v1887 = vsel %vm666, %v1885, 0
        %1889 = vmatprep.subr.mxu0 0.0
        %1890 = vmatpush1.xpose.msra.mxu0 %v1801
        %1891 = vmatprep.subr.mxu0 0.0
        %1892 = vmatpush1.xpose.msra.mxu0 0.0
        %1893 = vmatprep.subr.mxu0 0.0
        %1894 = vmatpush1.xpose.msra.mxu0 0.0
        %1895 = vmatprep.subr.mxu0 0.0
        %1896 = vmatpush1.xpose.msra.mxu0 0.0
        %1897 = vmatprep.subr.mxu0 0.0
        %1898 = vmatpush1.xpose.msra.mxu0 0.0
        %1899 = vmatprep.subr.mxu0 0.0
        %1900 = vmatpush1.xpose.msra.mxu0 0.0
        %1901 = vmatprep.subr.mxu0 0.0
        %1902 = vmatpush1.xpose.msra.mxu0 0.0
        %1903 = vmatprep.subr.mxu0 0.0
        %1904 = vmatpush1.xpose.msra.mxu0 0.0
        %1905 = vmatprep.subr.mxu0 0.0
        %1906 = vmatpush1.xpose.msra.mxu0 0.0
        %1907 = vmatprep.subr.mxu0 0.0
        %1908 = vmatpush1.xpose.msra.mxu0 0.0
        %1909 = vmatprep.subr.mxu0 0.0
        %1910 = vmatpush1.xpose.msra.mxu0 0.0
        %1911 = vmatprep.subr.mxu0 0.0
        %1912 = vmatpush1.xpose.msra.mxu0 0.0
        %1913 = vmatprep.subr.mxu0 0.0
        %1914 = vmatpush1.xpose.msra.mxu0 0.0
        %1915 = vmatprep.subr.mxu0 0.0
        %1916 = vmatpush1.xpose.msra.mxu0 0.0
        %1917 = vmatprep.subr.mxu0 0.0
        %1918 = vmatpush1.xpose.msra.mxu0 0.0
        %1919 = vmatprep.subr.mxu0 0.0
        %1920 = vmatpush1.xpose.msra.mxu0 0.0
        %1921 = vmatprep.subr.mxu0 0.0
        %1922 = vmatpush1.xpose.msra.mxu0 0.0
        %1923 = vmatprep.subr.mxu0 0.0
        %1924 = vmatpush1.xpose.msra.mxu0 0.0
        %1925 = vmatprep.subr.mxu0 0.0
        %1926 = vmatpush1.xpose.msra.mxu0 0.0
        %1927 = vmatprep.subr.mxu0 0.0
        %1928 = vmatpush1.xpose.msra.mxu0 0.0
        %1929 = vmatprep.subr.mxu0 0.0
        %1930 = vmatpush1.xpose.msra.mxu0 0.0
        %1931 = vmatprep.subr.mxu0 0.0
        %1932 = vmatpush1.xpose.msra.mxu0 0.0
        %1933 = vmatprep.subr.mxu0 0.0
        %1934 = vmatpush1.xpose.msra.mxu0 0.0
        %1935 = vmatprep.subr.mxu0 0.0
        %1936 = vmatpush1.xpose.msra.mxu0 0.0
        %1937 = vmatprep.subr.mxu0 0.0
        %1938 = vmatpush1.xpose.msra.mxu0 0.0
        %1939 = vmatprep.subr.mxu0 0.0
        %1940 = vmatpush1.xpose.msra.mxu0 0.0
        %1941 = vmatprep.subr.mxu0 0.0
        %1942 = vmatpush1.xpose.msra.mxu0 0.0
        %1943 = vmatprep.subr.mxu0 0.0
        %1944 = vmatpush1.xpose.msra.mxu0 0.0
        %1945 = vmatprep.subr.mxu0 0.0
        %1946 = vmatpush1.xpose.msra.mxu0 0.0
        %1947 = vmatprep.subr.mxu0 0.0
        %1948 = vmatpush1.xpose.msra.mxu0 0.0
        %1949 = vmatprep.subr.mxu0 0.0
        %1950 = vmatpush1.xpose.msra.mxu0 0.0
        %1951 = vmatprep.subr.mxu0 0.0
        %1952 = vmatpush1.xpose.msra.mxu0 0.0
        %1953 = vmatprep.mubr.f32.mxu0 0.0
        %1954 = vmatmul.mubr.f32.gmra.mrb[0].mxu0 %v1887
        %v1955 = vpop.f32.mrb[0].mxu0
        %v1956 = vadd.f32 %v663, %v1955
        %v1957 = vpop.f32.mrb[0].mxu0
        %1958 = vdwg.mxu0
        %v1959 = vsel %vm858, %v1956, -inf
        %1960 = vmax.xlane.f32.xlu0 %v1959
        %v1961 = vpop.xlane.xlu0 %1960
        %v1962 = vsub.f32 %v1956, %v1961
        %v1963 = vmul.f32 %v1962, 1.442695
        %v1964 = vpow.pop %v1963
        %v1965 = vsel %vm858, %v1964, 0.0
        %1966 = vadd.xlane.f32.xlu0 %v1965
        %v1967 = vpop.xlane.xlu0 %1966
        %v1968 = vrcp.pop %v1967
        %v1969 = vmul.f32 %v1964, %v1968
        %v1970 = vmul.f32 %v1791, %v968
        %1972 = vrot.lane.b32.xlu0 %v1970, 64
        %v1973 = vpop.permute.xlu0 %1972
        %v1976 = vsel %vm858, %v1969, 0
        %1978 = vmatprep.subr.mxu0 0.0
        %1979 = vmatpush1.msra.mxu0 %v1973
        %1980 = vmatprep.subr.mxu0 0.0
        %1981 = vmatpush1.msra.mxu0 0.0
        %1982 = vmatprep.subr.mxu0 0.0
        %1983 = vmatpush1.msra.mxu0 0.0
        %1984 = vmatprep.subr.mxu0 0.0
        %1985 = vmatpush1.msra.mxu0 0.0
        %1986 = vmatprep.subr.mxu0 0.0
        %1987 = vmatpush1.msra.mxu0 0.0
        %1988 = vmatprep.subr.mxu0 0.0
        %1989 = vmatpush1.msra.mxu0 0.0
        %1990 = vmatprep.subr.mxu0 0.0
        %1991 = vmatpush1.msra.mxu0 0.0
        %1992 = vmatprep.subr.mxu0 0.0
        %1993 = vmatpush1.msra.mxu0 0.0
        %1994 = vmatprep.subr.mxu0 0.0
        %1995 = vmatpush1.msra.mxu0 0.0
        %1996 = vmatprep.subr.mxu0 0.0
        %1997 = vmatpush1.msra.mxu0 0.0
        %1998 = vmatprep.subr.mxu0 0.0
        %1999 = vmatpush1.msra.mxu0 0.0
        %2000 = vmatprep.subr.mxu0 0.0
        %2001 = vmatpush1.msra.mxu0 0.0
        %2002 = vmatprep.subr.mxu0 0.0
        %2003 = vmatpush1.msra.mxu0 0.0
        %2004 = vmatprep.subr.mxu0 0.0
        %2005 = vmatpush1.msra.mxu0 0.0
        %2006 = vmatprep.subr.mxu0 0.0
        %2007 = vmatpush1.msra.mxu0 0.0
        %2008 = vmatprep.subr.mxu0 0.0
        %2009 = vmatpush1.msra.mxu0 0.0
        %2010 = vmatprep.subr.mxu0 0.0
        %2011 = vmatpush1.msra.mxu0 0.0
        %2012 = vmatprep.subr.mxu0 0.0
        %2013 = vmatpush1.msra.mxu0 0.0
        %2014 = vmatprep.subr.mxu0 0.0
        %2015 = vmatpush1.msra.mxu0 0.0
        %2016 = vmatprep.subr.mxu0 0.0
        %2017 = vmatpush1.msra.mxu0 0.0
        %2018 = vmatprep.subr.mxu0 0.0
        %2019 = vmatpush1.msra.mxu0 0.0
        %2020 = vmatprep.subr.mxu0 0.0
        %2021 = vmatpush1.msra.mxu0 0.0
        %2022 = vmatprep.subr.mxu0 0.0
        %2023 = vmatpush1.msra.mxu0 0.0
        %2024 = vmatprep.subr.mxu0 0.0
        %2025 = vmatpush1.msra.mxu0 0.0
        %2026 = vmatprep.subr.mxu0 0.0
        %2027 = vmatpush1.msra.mxu0 0.0
        %2028 = vmatprep.subr.mxu0 0.0
        %2029 = vmatpush1.msra.mxu0 0.0
        %2030 = vmatprep.subr.mxu0 0.0
        %2031 = vmatpush1.msra.mxu0 0.0
        %2032 = vmatprep.subr.mxu0 0.0
        %2033 = vmatpush1.msra.mxu0 0.0
        %2034 = vmatprep.subr.mxu0 0.0
        %2035 = vmatpush1.msra.mxu0 0.0
        %2036 = vmatprep.subr.mxu0 0.0
        %2037 = vmatpush1.msra.mxu0 0.0
        %2038 = vmatprep.subr.mxu0 0.0
        %2039 = vmatpush1.msra.mxu0 0.0
        %2040 = vmatprep.subr.mxu0 0.0
        %2041 = vmatpush1.msra.mxu0 0.0
        %2042 = vmatprep.mubr.f32.mxu0 0.0
        %2043 = vmatmul.mubr.f32.gmra.mrb[0].mxu0 %v1976
        %v2044 = vpop.f32.mrb[0].mxu0
        %v2045 = vadd.f32 0.0, %v2044
        %v2046 = vpop.f32.mrb[0].mxu0
        %2047 = vdwg.mxu0
        %2049 = vrot.lane.b32.xlu0 %v1884, 64
        %v2050 = vpop.permute.xlu0 %2049
        %v2053 = vsel %vm858, %v1883, 0
        %2055 = vmatprep.subr.mxu0 0.0
        %2056 = vmatpush1.msra.mxu0 %v2050
        %2057 = vmatprep.subr.mxu0 0.0
        %2058 = vmatpush1.msra.mxu0 0.0
        %2059 = vmatprep.subr.mxu0 0.0
        %2060 = vmatpush1.msra.mxu0 0.0
        %2061 = vmatprep.subr.mxu0 0.0
        %2062 = vmatpush1.msra.mxu0 0.0
        %2063 = vmatprep.subr.mxu0 0.0
        %2064 = vmatpush1.msra.mxu0 0.0
        %2065 = vmatprep.subr.mxu0 0.0
        %2066 = vmatpush1.msra.mxu0 0.0
        %2067 = vmatprep.subr.mxu0 0.0
        %2068 = vmatpush1.msra.mxu0 0.0
        %2069 = vmatprep.subr.mxu0 0.0
        %2070 = vmatpush1.msra.mxu0 0.0
        %2071 = vmatprep.subr.mxu0 0.0
        %2072 = vmatpush1.msra.mxu0 0.0
        %2073 = vmatprep.subr.mxu0 0.0
        %2074 = vmatpush1.msra.mxu0 0.0
        %2075 = vmatprep.subr.mxu0 0.0
        %2076 = vmatpush1.msra.mxu0 0.0
        %2077 = vmatprep.subr.mxu0 0.0
        %2078 = vmatpush1.msra.mxu0 0.0
        %2079 = vmatprep.subr.mxu0 0.0
        %2080 = vmatpush1.msra.mxu0 0.0
        %2081 = vmatprep.subr.mxu0 0.0
        %2082 = vmatpush1.msra.mxu0 0.0
        %2083 = vmatprep.subr.mxu0 0.0
        %2084 = vmatpush1.msra.mxu0 0.0
        %2085 = vmatprep.subr.mxu0 0.0
        %2086 = vmatpush1.msra.mxu0 0.0
        %2087 = vmatprep.subr.mxu0 0.0
        %2088 = vmatpush1.msra.mxu0 0.0
        %2089 = vmatprep.subr.mxu0 0.0
        %2090 = vmatpush1.msra.mxu0 0.0
        %2091 = vmatprep.subr.mxu0 0.0
        %2092 = vmatpush1.msra.mxu0 0.0
        %2093 = vmatprep.subr.mxu0 0.0
        %2094 = vmatpush1.msra.mxu0 0.0
        %2095 = vmatprep.subr.mxu0 0.0
        %2096 = vmatpush1.msra.mxu0 0.0
        %2097 = vmatprep.subr.mxu0 0.0
        %2098 = vmatpush1.msra.mxu0 0.0
        %2099 = vmatprep.subr.mxu0 0.0
        %2100 = vmatpush1.msra.mxu0 0.0
        %2101 = vmatprep.subr.mxu0 0.0
        %2102 = vmatpush1.msra.mxu0 0.0
        %2103 = vmatprep.subr.mxu0 0.0
        %2104 = vmatpush1.msra.mxu0 0.0
        %2105 = vmatprep.subr.mxu0 0.0
        %2106 = vmatpush1.msra.mxu0 0.0
        %2107 = vmatprep.subr.mxu0 0.0
        %2108 = vmatpush1.msra.mxu0 0.0
        %2109 = vmatprep.subr.mxu0 0.0
        %2110 = vmatpush1.msra.mxu0 0.0
        %2111 = vmatprep.subr.mxu0 0.0
        %2112 = vmatpush1.msra.mxu0 0.0
        %2113 = vmatprep.subr.mxu0 0.0
        %2114 = vmatpush1.msra.mxu0 0.0
        %2115 = vmatprep.subr.mxu0 0.0
        %2116 = vmatpush1.msra.mxu0 0.0
        %2117 = vmatprep.subr.mxu0 0.0
        %2118 = vmatpush1.msra.mxu0 0.0
        %2119 = vmatprep.mubr.f32.mxu0 0.0
        %2120 = vmatmul.mubr.f32.gmra.mrb[0].mxu0 %v2053
        %v2121 = vpop.f32.mrb[0].mxu0
        %v2122 = vadd.f32 %v2045, %v2121
        %v2123 = vpop.f32.mrb[0].mxu0
        %2124 = vdwg.mxu0
        %v2125 = vmul.f32 %v1791, %v1131
        %v2127 = vsel %vm666, %v2125, 0
        %2129 = vmatprep.subr.mxu0 0.0
        %2130 = vmatpush1.xpose.msra.mxu0 %v1801
        %2131 = vmatprep.subr.mxu0 0.0
        %2132 = vmatpush1.xpose.msra.mxu0 0.0
        %2133 = vmatprep.subr.mxu0 0.0
        %2134 = vmatpush1.xpose.msra.mxu0 0.0
        %2135 = vmatprep.subr.mxu0 0.0
        %2136 = vmatpush1.xpose.msra.mxu0 0.0
        %2137 = vmatprep.subr.mxu0 0.0
        %2138 = vmatpush1.xpose.msra.mxu0 0.0
        %2139 = vmatprep.subr.mxu0 0.0
        %2140 = vmatpush1.xpose.msra.mxu0 0.0
        %2141 = vmatprep.subr.mxu0 0.0
        %2142 = vmatpush1.xpose.msra.mxu0 0.0
        %2143 = vmatprep.subr.mxu0 0.0
        %2144 = vmatpush1.xpose.msra.mxu0 0.0
        %2145 = vmatprep.subr.mxu0 0.0
        %2146 = vmatpush1.xpose.msra.mxu0 0.0
        %2147 = vmatprep.subr.mxu0 0.0
        %2148 = vmatpush1.xpose.msra.mxu0 0.0
        %2149 = vmatprep.subr.mxu0 0.0
        %2150 = vmatpush1.xpose.msra.mxu0 0.0
        %2151 = vmatprep.subr.mxu0 0.0
        %2152 = vmatpush1.xpose.msra.mxu0 0.0
        %2153 = vmatprep.subr.mxu0 0.0
        %2154 = vmatpush1.xpose.msra.mxu0 0.0
        %2155 = vmatprep.subr.mxu0 0.0
        %2156 = vmatpush1.xpose.msra.mxu0 0.0
        %2157 = vmatprep.subr.mxu0 0.0
        %2158 = vmatpush1.xpose.msra.mxu0 0.0
        %2159 = vmatprep.subr.mxu0 0.0
        %2160 = vmatpush1.xpose.msra.mxu0 0.0
        %2161 = vmatprep.subr.mxu0 0.0
        %2162 = vmatpush1.xpose.msra.mxu0 0.0
        %2163 = vmatprep.subr.mxu0 0.0
        %2164 = vmatpush1.xpose.msra.mxu0 0.0
        %2165 = vmatprep.subr.mxu0 0.0
        %2166 = vmatpush1.xpose.msra.mxu0 0.0
        %2167 = vmatprep.subr.mxu0 0.0
        %2168 = vmatpush1.xpose.msra.mxu0 0.0
        %2169 = vmatprep.subr.mxu0 0.0
        %2170 = vmatpush1.xpose.msra.mxu0 0.0
        %2171 = vmatprep.subr.mxu0 0.0
        %2172 = vmatpush1.xpose.msra.mxu0 0.0
        %2173 = vmatprep.subr.mxu0 0.0
        %2174 = vmatpush1.xpose.msra.mxu0 0.0
        %2175 = vmatprep.subr.mxu0 0.0
        %2176 = vmatpush1.xpose.msra.mxu0 0.0
        %2177 = vmatprep.subr.mxu0 0.0
        %2178 = vmatpush1.xpose.msra.mxu0 0.0
        %2179 = vmatprep.subr.mxu0 0.0
        %2180 = vmatpush1.xpose.msra.mxu0 0.0
        %2181 = vmatprep.subr.mxu0 0.0
        %2182 = vmatpush1.xpose.msra.mxu0 0.0
        %2183 = vmatprep.subr.mxu0 0.0
        %2184 = vmatpush1.xpose.msra.mxu0 0.0
        %2185 = vmatprep.subr.mxu0 0.0
        %2186 = vmatpush1.xpose.msra.mxu0 0.0
        %2187 = vmatprep.subr.mxu0 0.0
        %2188 = vmatpush1.xpose.msra.mxu0 0.0
        %2189 = vmatprep.subr.mxu0 0.0
        %2190 = vmatpush1.xpose.msra.mxu0 0.0
        %2191 = vmatprep.subr.mxu0 0.0
        %2192 = vmatpush1.xpose.msra.mxu0 0.0
        %2193 = vmatprep.mubr.f32.mxu0 0.0
        %2194 = vmatmul.mubr.f32.gmra.mrb[0].mxu0 %v2127
        %v2195 = vpop.f32.mrb[0].mxu0
        %v2196 = vadd.f32 %v663, %v2195
        %v2197 = vpop.f32.mrb[0].mxu0
        %2198 = vdwg.mxu0
        %v2199 = vsel %vm858, %v2196, -inf
        %2200 = vmax.xlane.f32.xlu0 %v2199
        %v2201 = vpop.xlane.xlu0 %2200
        %v2202 = vsub.f32 %v2196, %v2201
        %v2203 = vmul.f32 %v2202, 1.442695
        %v2204 = vpow.pop %v2203
        %v2205 = vsel %vm858, %v2204, 0.0
        %2206 = vadd.xlane.f32.xlu0 %v2205
        %v2207 = vpop.xlane.xlu0 %2206
        %v2208 = vrcp.pop %v2207
        %v2209 = vmul.f32 %v2204, %v2208
        %v2210 = vmul.f32 %v1791, %v1219
        %2212 = vrot.lane.b32.xlu0 %v2210, 64
        %v2213 = vpop.permute.xlu0 %2212
        %v2216 = vsel %vm858, %v2209, 0
        %2218 = vmatprep.subr.mxu0 0.0
        %2219 = vmatpush1.msra.mxu0 %v2213
        %2220 = vmatprep.subr.mxu0 0.0
        %2221 = vmatpush1.msra.mxu0 0.0
        %2222 = vmatprep.subr.mxu0 0.0
        %2223 = vmatpush1.msra.mxu0 0.0
        %2224 = vmatprep.subr.mxu0 0.0
        %2225 = vmatpush1.msra.mxu0 0.0
        %2226 = vmatprep.subr.mxu0 0.0
        %2227 = vmatpush1.msra.mxu0 0.0
        %2228 = vmatprep.subr.mxu0 0.0
        %2229 = vmatpush1.msra.mxu0 0.0
        %2230 = vmatprep.subr.mxu0 0.0
        %2231 = vmatpush1.msra.mxu0 0.0
        %2232 = vmatprep.subr.mxu0 0.0
        %2233 = vmatpush1.msra.mxu0 0.0
        %2234 = vmatprep.subr.mxu0 0.0
        %2235 = vmatpush1.msra.mxu0 0.0
        %2236 = vmatprep.subr.mxu0 0.0
        %2237 = vmatpush1.msra.mxu0 0.0
        %2238 = vmatprep.subr.mxu0 0.0
        %2239 = vmatpush1.msra.mxu0 0.0
        %2240 = vmatprep.subr.mxu0 0.0
        %2241 = vmatpush1.msra.mxu0 0.0
        %2242 = vmatprep.subr.mxu0 0.0
        %2243 = vmatpush1.msra.mxu0 0.0
        %2244 = vmatprep.subr.mxu0 0.0
        %2245 = vmatpush1.msra.mxu0 0.0
        %2246 = vmatprep.subr.mxu0 0.0
        %2247 = vmatpush1.msra.mxu0 0.0
        %2248 = vmatprep.subr.mxu0 0.0
        %2249 = vmatpush1.msra.mxu0 0.0
        %2250 = vmatprep.subr.mxu0 0.0
        %2251 = vmatpush1.msra.mxu0 0.0
        %2252 = vmatprep.subr.mxu0 0.0
        %2253 = vmatpush1.msra.mxu0 0.0
        %2254 = vmatprep.subr.mxu0 0.0
        %2255 = vmatpush1.msra.mxu0 0.0
        %2256 = vmatprep.subr.mxu0 0.0
        %2257 = vmatpush1.msra.mxu0 0.0
        %2258 = vmatprep.subr.mxu0 0.0
        %2259 = vmatpush1.msra.mxu0 0.0
        %2260 = vmatprep.subr.mxu0 0.0
        %2261 = vmatpush1.msra.mxu0 0.0
        %2262 = vmatprep.subr.mxu0 0.0
        %2263 = vmatpush1.msra.mxu0 0.0
        %2264 = vmatprep.subr.mxu0 0.0
        %2265 = vmatpush1.msra.mxu0 0.0
        %2266 = vmatprep.subr.mxu0 0.0
        %2267 = vmatpush1.msra.mxu0 0.0
        %2268 = vmatprep.subr.mxu0 0.0
        %2269 = vmatpush1.msra.mxu0 0.0
        %2270 = vmatprep.subr.mxu0 0.0
        %2271 = vmatpush1.msra.mxu0 0.0
        %2272 = vmatprep.subr.mxu0 0.0
        %2273 = vmatpush1.msra.mxu0 0.0
        %2274 = vmatprep.subr.mxu0 0.0
        %2275 = vmatpush1.msra.mxu0 0.0
        %2276 = vmatprep.subr.mxu0 0.0
        %2277 = vmatpush1.msra.mxu0 0.0
        %2278 = vmatprep.subr.mxu0 0.0
        %2279 = vmatpush1.msra.mxu0 0.0
        %2280 = vmatprep.subr.mxu0 0.0
        %2281 = vmatpush1.msra.mxu0 0.0
        %2282 = vmatprep.mubr.f32.mxu0 0.0
        %2283 = vmatmul.mubr.f32.gmra.mrb[0].mxu0 %v2216
        %v2284 = vpop.f32.mrb[0].mxu0
        %v2285 = vadd.f32 0.0, %v2284
        %v2286 = vpop.f32.mrb[0].mxu0
        %2287 = vdwg.mxu0
        %v2288 = vadd.f32 %v2122, %v2285
        %v2289 = vmul.f32 %v1791, %v1306
        %v2291 = vsel %vm666, %v2289, 0
        %2293 = vmatprep.subr.mxu0 0.0
        %2294 = vmatpush1.xpose.msra.mxu0 %v1801
        %2295 = vmatprep.subr.mxu0 0.0
        %2296 = vmatpush1.xpose.msra.mxu0 0.0
        %2297 = vmatprep.subr.mxu0 0.0
        %2298 = vmatpush1.xpose.msra.mxu0 0.0
        %2299 = vmatprep.subr.mxu0 0.0
        %2300 = vmatpush1.xpose.msra.mxu0 0.0
        %2301 = vmatprep.subr.mxu0 0.0
        %2302 = vmatpush1.xpose.msra.mxu0 0.0
        %2303 = vmatprep.subr.mxu0 0.0
        %2304 = vmatpush1.xpose.msra.mxu0 0.0
        %2305 = vmatprep.subr.mxu0 0.0
        %2306 = vmatpush1.xpose.msra.mxu0 0.0
        %2307 = vmatprep.subr.mxu0 0.0
        %2308 = vmatpush1.xpose.msra.mxu0 0.0
        %2309 = vmatprep.subr.mxu0 0.0
        %2310 = vmatpush1.xpose.msra.mxu0 0.0
        %2311 = vmatprep.subr.mxu0 0.0
        %2312 = vmatpush1.xpose.msra.mxu0 0.0
        %2313 = vmatprep.subr.mxu0 0.0
        %2314 = vmatpush1.xpose.msra.mxu0 0.0
        %2315 = vmatprep.subr.mxu0 0.0
        %2316 = vmatpush1.xpose.msra.mxu0 0.0
        %2317 = vmatprep.subr.mxu0 0.0
        %2318 = vmatpush1.xpose.msra.mxu0 0.0
        %2319 = vmatprep.subr.mxu0 0.0
        %2320 = vmatpush1.xpose.msra.mxu0 0.0
        %2321 = vmatprep.subr.mxu0 0.0
        %2322 = vmatpush1.xpose.msra.mxu0 0.0
        %2323 = vmatprep.subr.mxu0 0.0
        %2324 = vmatpush1.xpose.msra.mxu0 0.0
        %2325 = vmatprep.subr.mxu0 0.0
        %2326 = vmatpush1.xpose.msra.mxu0 0.0
        %2327 = vmatprep.subr.mxu0 0.0
        %2328 = vmatpush1.xpose.msra.mxu0 0.0
        %2329 = vmatprep.subr.mxu0 0.0
        %2330 = vmatpush1.xpose.msra.mxu0 0.0
        %2331 = vmatprep.subr.mxu0 0.0
        %2332 = vmatpush1.xpose.msra.mxu0 0.0
        %2333 = vmatprep.subr.mxu0 0.0
        %2334 = vmatpush1.xpose.msra.mxu0 0.0
        %2335 = vmatprep.subr.mxu0 0.0
        %2336 = vmatpush1.xpose.msra.mxu0 0.0
        %2337 = vmatprep.subr.mxu0 0.0
        %2338 = vmatpush1.xpose.msra.mxu0 0.0
        %2339 = vmatprep.subr.mxu0 0.0
        %2340 = vmatpush1.xpose.msra.mxu0 0.0
        %2341 = vmatprep.subr.mxu0 0.0
        %2342 = vmatpush1.xpose.msra.mxu0 0.0
        %2343 = vmatprep.subr.mxu0 0.0
        %2344 = vmatpush1.xpose.msra.mxu0 0.0
        %2345 = vmatprep.subr.mxu0 0.0
        %2346 = vmatpush1.xpose.msra.mxu0 0.0
        %2347 = vmatprep.subr.mxu0 0.0
        %2348 = vmatpush1.xpose.msra.mxu0 0.0
        %2349 = vmatprep.subr.mxu0 0.0
        %2350 = vmatpush1.xpose.msra.mxu0 0.0
        %2351 = vmatprep.subr.mxu0 0.0
        %2352 = vmatpush1.xpose.msra.mxu0 0.0
        %2353 = vmatprep.subr.mxu0 0.0
        %2354 = vmatpush1.xpose.msra.mxu0 0.0
        %2355 = vmatprep.subr.mxu0 0.0
        %2356 = vmatpush1.xpose.msra.mxu0 0.0
        %2357 = vmatprep.mubr.f32.mxu0 0.0
        %2358 = vmatmul.mubr.f32.gmra.mrb[0].mxu0 %v2291
        %v2359 = vpop.f32.mrb[0].mxu0
        %v2360 = vadd.f32 %v663, %v2359
        %v2361 = vpop.f32.mrb[0].mxu0
        %2362 = vdwg.mxu0
        %v2363 = vsel %vm858, %v2360, -inf
        %2364 = vmax.xlane.f32.xlu0 %v2363
        %v2365 = vpop.xlane.xlu0 %2364
        %v2366 = vsub.f32 %v2360, %v2365
        %v2367 = vmul.f32 %v2366, 1.442695
        %v2368 = vpow.pop %v2367
        %v2369 = vsel %vm858, %v2368, 0.0
        %2370 = vadd.xlane.f32.xlu0 %v2369
        %v2371 = vpop.xlane.xlu0 %2370
        %v2372 = vrcp.pop %v2371
        %v2373 = vmul.f32 %v2368, %v2372
        %v2374 = vmul.f32 %v1791, %v1394
        %2376 = vrot.lane.b32.xlu0 %v2374, 64
        %v2377 = vpop.permute.xlu0 %2376
        %v2380 = vsel %vm858, %v2373, 0
        %2382 = vmatprep.subr.mxu0 0.0
        %2383 = vmatpush1.msra.mxu0 %v2377
        %2384 = vmatprep.subr.mxu0 0.0
        %2385 = vmatpush1.msra.mxu0 0.0
        %2386 = vmatprep.subr.mxu0 0.0
        %2387 = vmatpush1.msra.mxu0 0.0
        %2388 = vmatprep.subr.mxu0 0.0
        %2389 = vmatpush1.msra.mxu0 0.0
        %2390 = vmatprep.subr.mxu0 0.0
        %2391 = vmatpush1.msra.mxu0 0.0
        %2392 = vmatprep.subr.mxu0 0.0
        %2393 = vmatpush1.msra.mxu0 0.0
        %2394 = vmatprep.subr.mxu0 0.0
        %2395 = vmatpush1.msra.mxu0 0.0
        %2396 = vmatprep.subr.mxu0 0.0
        %2397 = vmatpush1.msra.mxu0 0.0
        %2398 = vmatprep.subr.mxu0 0.0
        %2399 = vmatpush1.msra.mxu0 0.0
        %2400 = vmatprep.subr.mxu0 0.0
        %2401 = vmatpush1.msra.mxu0 0.0
        %2402 = vmatprep.subr.mxu0 0.0
        %2403 = vmatpush1.msra.mxu0 0.0
        %2404 = vmatprep.subr.mxu0 0.0
        %2405 = vmatpush1.msra.mxu0 0.0
        %2406 = vmatprep.subr.mxu0 0.0
        %2407 = vmatpush1.msra.mxu0 0.0
        %2408 = vmatprep.subr.mxu0 0.0
        %2409 = vmatpush1.msra.mxu0 0.0
        %2410 = vmatprep.subr.mxu0 0.0
        %2411 = vmatpush1.msra.mxu0 0.0
        %2412 = vmatprep.subr.mxu0 0.0
        %2413 = vmatpush1.msra.mxu0 0.0
        %2414 = vmatprep.subr.mxu0 0.0
        %2415 = vmatpush1.msra.mxu0 0.0
        %2416 = vmatprep.subr.mxu0 0.0
        %2417 = vmatpush1.msra.mxu0 0.0
        %2418 = vmatprep.subr.mxu0 0.0
        %2419 = vmatpush1.msra.mxu0 0.0
        %2420 = vmatprep.subr.mxu0 0.0
        %2421 = vmatpush1.msra.mxu0 0.0
        %2422 = vmatprep.subr.mxu0 0.0
        %2423 = vmatpush1.msra.mxu0 0.0
        %2424 = vmatprep.subr.mxu0 0.0
        %2425 = vmatpush1.msra.mxu0 0.0
        %2426 = vmatprep.subr.mxu0 0.0
        %2427 = vmatpush1.msra.mxu0 0.0
        %2428 = vmatprep.subr.mxu0 0.0
        %2429 = vmatpush1.msra.mxu0 0.0
        %2430 = vmatprep.subr.mxu0 0.0
        %2431 = vmatpush1.msra.mxu0 0.0
        %2432 = vmatprep.subr.mxu0 0.0
        %2433 = vmatpush1.msra.mxu0 0.0
        %2434 = vmatprep.subr.mxu0 0.0
        %2435 = vmatpush1.msra.mxu0 0.0
        %2436 = vmatprep.subr.mxu0 0.0
        %2437 = vmatpush1.msra.mxu0 0.0
        %2438 = vmatprep.subr.mxu0 0.0
        %2439 = vmatpush1.msra.mxu0 0.0
        %2440 = vmatprep.subr.mxu0 0.0
        %2441 = vmatpush1.msra.mxu0 0.0
        %2442 = vmatprep.subr.mxu0 0.0
        %2443 = vmatpush1.msra.mxu0 0.0
        %2444 = vmatprep.subr.mxu0 0.0
        %2445 = vmatpush1.msra.mxu0 0.0
        %2446 = vmatprep.mubr.f32.mxu0 0.0
        %2447 = vmatmul.mubr.f32.gmra.mrb[0].mxu0 %v2380
        %v2448 = vpop.f32.mrb[0].mxu0
        %v2449 = vadd.f32 0.0, %v2448
        %v2450 = vpop.f32.mrb[0].mxu0
        %2451 = vdwg.mxu0
        %v2452 = vadd.f32 %v2288, %v2449
        %v2453 = vadd.f32 %v1684, %v2452
        %s2454 = scalar_lea.vmem %s8, 1
        %v2455 = vld [vmem:[%s2454] sm:$0x1]
        %s2456 = scalar_lea.vmem %s9, 1
        %v2457 = vld [vmem:[%s2456] sm:$0x1]
        %v2458 = vsel %vm666, %v2453, 0.0
        %2459 = vadd.xlane.f32.xlu0 %v2458
        %v2460 = vpop.xlane.xlu0 %2459
        %v2461 = vmul.f32 %v2460, %v670
        %v2462 = vsub.f32 %v2453, %v2461
        %v2463 = vmul.f32 %v2462, %v2462
        %v2464 = vsel %vm666, %v2463, 0.0
        %2465 = vadd.xlane.f32.xlu0 %v2464
        %v2466 = vpop.xlane.xlu0 %2465
        %v2467 = vmul.f32 %v2466, %v670
        %v2468 = vadd.f32 %v2467, 1e-05
        %v2469 = vrsqrt.pop %v2468
        %v2470 = vmul.f32 %v2462, %v2469
        %v2472 = vlaneseq
        %v2473 = vshrl.u32 %v2472, 7
        %v2474 = vsub.s32 0, %v2473
        %v2475 = vrot.slane %v2455, %v2474
        %v2477 = vmul.f32 %v2470, %v2475
        %v2479 = vlaneseq
        %v2480 = vshrl.u32 %v2479, 7
        %v2481 = vsub.s32 0, %v2480
        %v2482 = vrot.slane %v2457, %v2481
        %v2484 = vadd.f32 %v2477, %v2482
        %s2485 = scalar_lea.vmem %s10, 32
        %v2486 = vld [vmem:[%s2485] sm:$0xff]
        %v2487 = vld [vmem:[%s2485 + $0x8] sm:$0xff]
        %v2488 = vld [vmem:[%s2485 + $0x10] sm:$0xff]
        %v2489 = vld [vmem:[%s2485 + $0x18] sm:$0xff]
        %s2490 = scalar_lea.vmem %s11, 1
        %v2491 = vld [vmem:[%s2490] sm:$0x1]
        %v2493 = vlaneseq
        %v2494 = vshrl.u32 %v2493, 7
        %v2495 = vsub.s32 0, %v2494
        %v2496 = vrot.slane %v2491, %v2495
        %v2499 = vsel %vm666, %v2484, 0
        %2501 = vmatprep.subr.mxu0 0.0
        %2502 = vmatpush1.msra.mxu0 %v2486
        %2503 = vmatprep.subr.mxu0 0.0
        %2504 = vmatpush1.msra.mxu0 %v2487
        %2505 = vmatprep.subr.mxu0 0.0
        %2506 = vmatpush1.msra.mxu0 %v2488
        %2507 = vmatprep.subr.mxu0 0.0
        %2508 = vmatpush1.msra.mxu0 %v2489
        %2509 = vmatprep.subr.mxu0 0.0
        %2510 = vmatpush1.msra.mxu0 0.0
        %2511 = vmatprep.subr.mxu0 0.0
        %2512 = vmatpush1.msra.mxu0 0.0
        %2513 = vmatprep.subr.mxu0 0.0
        %2514 = vmatpush1.msra.mxu0 0.0
        %2515 = vmatprep.subr.mxu0 0.0
        %2516 = vmatpush1.msra.mxu0 0.0
        %2517 = vmatprep.subr.mxu0 0.0
        %2518 = vmatpush1.msra.mxu0 0.0
        %2519 = vmatprep.subr.mxu0 0.0
        %2520 = vmatpush1.msra.mxu0 0.0
        %2521 = vmatprep.subr.mxu0 0.0
        %2522 = vmatpush1.msra.mxu0 0.0
        %2523 = vmatprep.subr.mxu0 0.0
        %2524 = vmatpush1.msra.mxu0 0.0
        %2525 = vmatprep.subr.mxu0 0.0
        %2526 = vmatpush1.msra.mxu0 0.0
        %2527 = vmatprep.subr.mxu0 0.0
        %2528 = vmatpush1.msra.mxu0 0.0
        %2529 = vmatprep.subr.mxu0 0.0
        %2530 = vmatpush1.msra.mxu0 0.0
        %2531 = vmatprep.subr.mxu0 0.0
        %2532 = vmatpush1.msra.mxu0 0.0
        %2533 = vmatprep.subr.mxu0 0.0
        %2534 = vmatpush1.msra.mxu0 0.0
        %2535 = vmatprep.subr.mxu0 0.0
        %2536 = vmatpush1.msra.mxu0 0.0
        %2537 = vmatprep.subr.mxu0 0.0
        %2538 = vmatpush1.msra.mxu0 0.0
        %2539 = vmatprep.subr.mxu0 0.0
        %2540 = vmatpush1.msra.mxu0 0.0
        %2541 = vmatprep.subr.mxu0 0.0
        %2542 = vmatpush1.msra.mxu0 0.0
        %2543 = vmatprep.subr.mxu0 0.0
        %2544 = vmatpush1.msra.mxu0 0.0
        %2545 = vmatprep.subr.mxu0 0.0
        %2546 = vmatpush1.msra.mxu0 0.0
        %2547 = vmatprep.subr.mxu0 0.0
        %2548 = vmatpush1.msra.mxu0 0.0
        %2549 = vmatprep.subr.mxu0 0.0
        %2550 = vmatpush1.msra.mxu0 0.0
        %2551 = vmatprep.subr.mxu0 0.0
        %2552 = vmatpush1.msra.mxu0 0.0
        %2553 = vmatprep.subr.mxu0 0.0
        %2554 = vmatpush1.msra.mxu0 0.0
        %2555 = vmatprep.subr.mxu0 0.0
        %2556 = vmatpush1.msra.mxu0 0.0
        %2557 = vmatprep.subr.mxu0 0.0
        %2558 = vmatpush1.msra.mxu0 0.0
        %2559 = vmatprep.subr.mxu0 0.0
        %2560 = vmatpush1.msra.mxu0 0.0
        %2561 = vmatprep.subr.mxu0 0.0
        %2562 = vmatpush1.msra.mxu0 0.0
        %2563 = vmatprep.subr.mxu0 0.0
        %2564 = vmatpush1.msra.mxu0 0.0
        %2565 = vmatprep.mubr.f32.mxu0 0.0
        %2566 = vmatmul.mubr.f32.gmra.mrb[0].mxu0 %v2499
        %v2567 = vpop.f32.mrb[0].mxu0
        %v2568 = vadd.f32 %v2496, %v2567
        %v2569 = vpop.f32.mrb[0].mxu0
        %2570 = vdwg.mxu0
        %v2571 = vmax.f32 %v2568, 0.0
        %s2572 = scalar_lea.vmem %s12, 128
        %v2573 = vld [vmem:[%s2572] sm:$0xff]
        %v2574 = vld [vmem:[%s2572 + $0x8] sm:$0xff]
        %v2575 = vld [vmem:[%s2572 + $0x10] sm:$0xff]
        %v2576 = vld [vmem:[%s2572 + $0x18] sm:$0xff]
        %v2577 = vld [vmem:[%s2572 + $0x20] sm:$0xff]
        %v2578 = vld [vmem:[%s2572 + $0x28] sm:$0xff]
        %v2579 = vld [vmem:[%s2572 + $0x30] sm:$0xff]
        %v2580 = vld [vmem:[%s2572 + $0x38] sm:$0xff]
        %v2581 = vld [vmem:[%s2572 + $0x40] sm:$0xff]
        %v2582 = vld [vmem:[%s2572 + $0x48] sm:$0xff]
        %v2583 = vld [vmem:[%s2572 + $0x50] sm:$0xff]
        %v2584 = vld [vmem:[%s2572 + $0x58] sm:$0xff]
        %v2585 = vld [vmem:[%s2572 + $0x60] sm:$0xff]
        %v2586 = vld [vmem:[%s2572 + $0x68] sm:$0xff]
        %v2587 = vld [vmem:[%s2572 + $0x70] sm:$0xff]
        %v2588 = vld [vmem:[%s2572 + $0x78] sm:$0xff]
        %2589 = vmatprep.subr.mxu0 0.0
        %2590 = vmatpush1.msra.mxu0 %v2573
        %2591 = vmatprep.subr.mxu0 0.0
        %2592 = vmatpush1.msra.mxu0 %v2574
        %2593 = vmatprep.subr.mxu0 0.0
        %2594 = vmatpush1.msra.mxu0 %v2575
        %2595 = vmatprep.subr.mxu0 0.0
        %2596 = vmatpush1.msra.mxu0 %v2576
        %2597 = vmatprep.subr.mxu0 0.0
        %2598 = vmatpush1.msra.mxu0 %v2577
        %2599 = vmatprep.subr.mxu0 0.0
        %2600 = vmatpush1.msra.mxu0 %v2578
        %2601 = vmatprep.subr.mxu0 0.0
        %2602 = vmatpush1.msra.mxu0 %v2579
        %2603 = vmatprep.subr.mxu0 0.0
        %2604 = vmatpush1.msra.mxu0 %v2580
        %2605 = vmatprep.subr.mxu0 0.0
        %2606 = vmatpush1.msra.mxu0 %v2581
        %2607 = vmatprep.subr.mxu0 0.0
        %2608 = vmatpush1.msra.mxu0 %v2582
        %2609 = vmatprep.subr.mxu0 0.0
        %2610 = vmatpush1.msra.mxu0 %v2583
        %2611 = vmatprep.subr.mxu0 0.0
        %2612 = vmatpush1.msra.mxu0 %v2584
        %2613 = vmatprep.subr.mxu0 0.0
        %2614 = vmatpush1.msra.mxu0 %v2585
        %2615 = vmatprep.subr.mxu0 0.0
        %2616 = vmatpush1.msra.mxu0 %v2586
        %2617 = vmatprep.subr.mxu0 0.0
        %2618 = vmatpush1.msra.mxu0 %v2587
        %2619 = vmatprep.subr.mxu0 0.0
        %2620 = vmatpush1.msra.mxu0 %v2588
        %2621 = vmatprep.subr.mxu0 0.0
        %2622 = vmatpush1.msra.mxu0 0.0
        %2623 = vmatprep.subr.mxu0 0.0
        %2624 = vmatpush1.msra.mxu0 0.0
        %2625 = vmatprep.subr.mxu0 0.0
        %2626 = vmatpush1.msra.mxu0 0.0
        %2627 = vmatprep.subr.mxu0 0.0
        %2628 = vmatpush1.msra.mxu0 0.0
        %2629 = vmatprep.subr.mxu0 0.0
        %2630 = vmatpush1.msra.mxu0 0.0
        %2631 = vmatprep.subr.mxu0 0.0
        %2632 = vmatpush1.msra.mxu0 0.0
        %2633 = vmatprep.subr.mxu0 0.0
        %2634 = vmatpush1.msra.mxu0 0.0
        %2635 = vmatprep.subr.mxu0 0.0
        %2636 = vmatpush1.msra.mxu0 0.0
        %2637 = vmatprep.subr.mxu0 0.0
        %2638 = vmatpush1.msra.mxu0 0.0
        %2639 = vmatprep.subr.mxu0 0.0
        %2640 = vmatpush1.msra.mxu0 0.0
        %2641 = vmatprep.subr.mxu0 0.0
        %2642 = vmatpush1.msra.mxu0 0.0
        %2643 = vmatprep.subr.mxu0 0.0
        %2644 = vmatpush1.msra.mxu0 0.0
        %2645 = vmatprep.subr.mxu0 0.0
        %2646 = vmatpush1.msra.mxu0 0.0
        %2647 = vmatprep.subr.mxu0 0.0
        %2648 = vmatpush1.msra.mxu0 0.0
        %2649 = vmatprep.subr.mxu0 0.0
        %2650 = vmatpush1.msra.mxu0 0.0
        %2651 = vmatprep.subr.mxu0 0.0
        %2652 = vmatpush1.msra.mxu0 0.0
        %2653 = vmatprep.mubr.f32.mxu0 0.0
        %2654 = vmatmul.mubr.f32.gmra.mrb[0].mxu0 %v2571
        %v2655 = vpop.f32.mrb[0].mxu0
        %v2656 = vadd.f32 0.0, %v2655
        %v2657 = vpop.f32.mrb[0].mxu0
        %2658 = vdwg.mxu0
        %v2659 = vadd.f32 %v2453, %v2656
        %s2660 = scalar_lea.vmem %s13, 1
        %v2661 = vld [vmem:[%s2660] sm:$0x1]
        %v2663 = vlaneseq
        %v2664 = vshrl.u32 %v2663, 7
        %v2665 = vsub.s32 0, %v2664
        %v2666 = vrot.slane %v2661, %v2665
        %v2668 = vadd.f32 %v2659, %v2666
        %s2669 = scalar_lea.vmem %s5, 2
        %v2670 = vld [vmem:[%s2669] sm:$0x1]
        %s2671 = scalar_lea.vmem %s6, 2
        %v2672 = vld [vmem:[%s2671] sm:$0x1]
        %v2673 = vsel %vm666, %v2668, 0.0
        %2674 = vadd.xlane.f32.xlu0 %v2673
        %v2675 = vpop.xlane.xlu0 %2674
        %v2676 = vmul.f32 %v2675, %v670
        %v2677 = vsub.f32 %v2668, %v2676
        %v2678 = vmul.f32 %v2677, %v2677
        %v2679 = vsel %vm666, %v2678, 0.0
        %2680 = vadd.xlane.f32.xlu0 %v2679
        %v2681 = vpop.xlane.xlu0 %2680
        %v2682 = vmul.f32 %v2681, %v670
        %v2683 = vadd.f32 %v2682, 1e-05
        %v2684 = vrsqrt.pop %v2683
        %v2685 = vmul.f32 %v2677, %v2684
        %v2687 = vlaneseq
        %v2688 = vshrl.u32 %v2687, 7
        %v2689 = vsub.s32 0, %v2688
        %v2690 = vrot.slane %v2670, %v2689
        %v2692 = vmul.f32 %v2685, %v2690
        %v2694 = vlaneseq
        %v2695 = vshrl.u32 %v2694, 7
        %v2696 = vsub.s32 0, %v2695
        %v2697 = vrot.slane %v2672, %v2696
        %v2699 = vadd.f32 %v2692, %v2697
        %s2700 = scalar_lea.vmem %s7, 64
        %v2701 = vld [vmem:[%s2700] sm:$0xff]
        %v2702 = vld [vmem:[%s2700 + $0x8] sm:$0xff]
        %v2703 = vld [vmem:[%s2700 + $0x10] sm:$0xff]
        %v2704 = vld [vmem:[%s2700 + $0x18] sm:$0xff]
        %v2706 = vsel %vm666, %v2699, 0
        %2708 = vmatprep.subr.mxu0 0.0
        %2709 = vmatpush1.msra.mxu0 %v2701
        %2710 = vmatprep.subr.mxu0 0.0
        %2711 = vmatpush1.msra.mxu0 %v2702
        %2712 = vmatprep.subr.mxu0 0.0
        %2713 = vmatpush1.msra.mxu0 %v2703
        %2714 = vmatprep.subr.mxu0 0.0
        %2715 = vmatpush1.msra.mxu0 %v2704
        %2716 = vmatprep.subr.mxu0 0.0
        %2717 = vmatpush1.msra.mxu0 0.0
        %2718 = vmatprep.subr.mxu0 0.0
        %2719 = vmatpush1.msra.mxu0 0.0
        %2720 = vmatprep.subr.mxu0 0.0
        %2721 = vmatpush1.msra.mxu0 0.0
        %2722 = vmatprep.subr.mxu0 0.0
        %2723 = vmatpush1.msra.mxu0 0.0
        %2724 = vmatprep.subr.mxu0 0.0
        %2725 = vmatpush1.msra.mxu0 0.0
        %2726 = vmatprep.subr.mxu0 0.0
        %2727 = vmatpush1.msra.mxu0 0.0
        %2728 = vmatprep.subr.mxu0 0.0
        %2729 = vmatpush1.msra.mxu0 0.0
        %2730 = vmatprep.subr.mxu0 0.0
        %2731 = vmatpush1.msra.mxu0 0.0
        %2732 = vmatprep.subr.mxu0 0.0
        %2733 = vmatpush1.msra.mxu0 0.0
        %2734 = vmatprep.subr.mxu0 0.0
        %2735 = vmatpush1.msra.mxu0 0.0
        %2736 = vmatprep.subr.mxu0 0.0
        %2737 = vmatpush1.msra.mxu0 0.0
        %2738 = vmatprep.subr.mxu0 0.0
        %2739 = vmatpush1.msra.mxu0 0.0
        %2740 = vmatprep.subr.mxu0 0.0
        %2741 = vmatpush1.msra.mxu0 0.0
        %2742 = vmatprep.subr.mxu0 0.0
        %2743 = vmatpush1.msra.mxu0 0.0
        %2744 = vmatprep.subr.mxu0 0.0
        %2745 = vmatpush1.msra.mxu0 0.0
        %2746 = vmatprep.subr.mxu0 0.0
        %2747 = vmatpush1.msra.mxu0 0.0
        %2748 = vmatprep.subr.mxu0 0.0
        %2749 = vmatpush1.msra.mxu0 0.0
        %2750 = vmatprep.subr.mxu0 0.0
        %2751 = vmatpush1.msra.mxu0 0.0
        %2752 = vmatprep.subr.mxu0 0.0
        %2753 = vmatpush1.msra.mxu0 0.0
        %2754 = vmatprep.subr.mxu0 0.0
        %2755 = vmatpush1.msra.mxu0 0.0
        %2756 = vmatprep.subr.mxu0 0.0
        %2757 = vmatpush1.msra.mxu0 0.0
        %2758 = vmatprep.subr.mxu0 0.0
        %2759 = vmatpush1.msra.mxu0 0.0
        %2760 = vmatprep.subr.mxu0 0.0
        %2761 = vmatpush1.msra.mxu0 0.0
        %2762 = vmatprep.subr.mxu0 0.0
        %2763 = vmatpush1.msra.mxu0 0.0
        %2764 = vmatprep.subr.mxu0 0.0
        %2765 = vmatpush1.msra.mxu0 0.0
        %2766 = vmatprep.subr.mxu0 0.0
        %2767 = vmatpush1.msra.mxu0 0.0
        %2768 = vmatprep.subr.mxu0 0.0
        %2769 = vmatpush1.msra.mxu0 0.0
        %2770 = vmatprep.subr.mxu0 0.0
        %2771 = vmatpush1.msra.mxu0 0.0
        %2772 = vmatprep.mubr.f32.mxu0 0.0
        %2773 = vmatmul.mubr.f32.gmra.mrb[0].mxu0 %v2706
        %v2774 = vpop.f32.mrb[0].mxu0
        %v2775 = vadd.f32 0.0, %v2774
        %v2776 = vpop.f32.mrb[0].mxu0
        %2777 = vdwg.mxu0
        %v2778 = vmul.f32 %v2775, %v777
        %2780 = vrot.lane.b32.xlu0 %v2775, 96
        %v2781 = vpop.permute.xlu0 %2780
        %v2783 = vsel %vm666, %v2778, 0
        %v2785 = vsel %vm666, %v2781, 0
        %2787 = vmatprep.subr.mxu0 0.0
        %2788 = vmatpush1.xpose.msra.mxu0 %v2785
        %2789 = vmatprep.subr.mxu0 0.0
        %2790 = vmatpush1.xpose.msra.mxu0 0.0
        %2791 = vmatprep.subr.mxu0 0.0
        %2792 = vmatpush1.xpose.msra.mxu0 0.0
        %2793 = vmatprep.subr.mxu0 0.0
        %2794 = vmatpush1.xpose.msra.mxu0 0.0
        %2795 = vmatprep.subr.mxu0 0.0
        %2796 = vmatpush1.xpose.msra.mxu0 0.0
        %2797 = vmatprep.subr.mxu0 0.0
        %2798 = vmatpush1.xpose.msra.mxu0 0.0
        %2799 = vmatprep.subr.mxu0 0.0
        %2800 = vmatpush1.xpose.msra.mxu0 0.0
        %2801 = vmatprep.subr.mxu0 0.0
        %2802 = vmatpush1.xpose.msra.mxu0 0.0
        %2803 = vmatprep.subr.mxu0 0.0
        %2804 = vmatpush1.xpose.msra.mxu0 0.0
        %2805 = vmatprep.subr.mxu0 0.0
        %2806 = vmatpush1.xpose.msra.mxu0 0.0
        %2807 = vmatprep.subr.mxu0 0.0
        %2808 = vmatpush1.xpose.msra.mxu0 0.0
        %2809 = vmatprep.subr.mxu0 0.0
        %2810 = vmatpush1.xpose.msra.mxu0 0.0
        %2811 = vmatprep.subr.mxu0 0.0
        %2812 = vmatpush1.xpose.msra.mxu0 0.0
        %2813 = vmatprep.subr.mxu0 0.0
        %2814 = vmatpush1.xpose.msra.mxu0 0.0
        %2815 = vmatprep.subr.mxu0 0.0
        %2816 = vmatpush1.xpose.msra.mxu0 0.0
        %2817 = vmatprep.subr.mxu0 0.0
        %2818 = vmatpush1.xpose.msra.mxu0 0.0
        %2819 = vmatprep.subr.mxu0 0.0
        %2820 = vmatpush1.xpose.msra.mxu0 0.0
        %2821 = vmatprep.subr.mxu0 0.0
        %2822 = vmatpush1.xpose.msra.mxu0 0.0
        %2823 = vmatprep.subr.mxu0 0.0
        %2824 = vmatpush1.xpose.msra.mxu0 0.0
        %2825 = vmatprep.subr.mxu0 0.0
        %2826 = vmatpush1.xpose.msra.mxu0 0.0
        %2827 = vmatprep.subr.mxu0 0.0
        %2828 = vmatpush1.xpose.msra.mxu0 0.0
        %2829 = vmatprep.subr.mxu0 0.0
        %2830 = vmatpush1.xpose.msra.mxu0 0.0
        %2831 = vmatprep.subr.mxu0 0.0
        %2832 = vmatpush1.xpose.msra.mxu0 0.0
        %2833 = vmatprep.subr.mxu0 0.0
        %2834 = vmatpush1.xpose.msra.mxu0 0.0
        %2835 = vmatprep.subr.mxu0 0.0
        %2836 = vmatpush1.xpose.msra.mxu0 0.0
        %2837 = vmatprep.subr.mxu0 0.0
        %2838 = vmatpush1.xpose.msra.mxu0 0.0
        %2839 = vmatprep.subr.mxu0 0.0
        %2840 = vmatpush1.xpose.msra.mxu0 0.0
        %2841 = vmatprep.subr.mxu0 0.0
        %2842 = vmatpush1.xpose.msra.mxu0 0.0
        %2843 = vmatprep.subr.mxu0 0.0
        %2844 = vmatpush1.xpose.msra.mxu0 0.0
        %2845 = vmatprep.subr.mxu0 0.0
        %2846 = vmatpush1.xpose.msra.mxu0 0.0
        %2847 = vmatprep.subr.mxu0 0.0
        %2848 = vmatpush1.xpose.msra.mxu0 0.0
        %2849 = vmatprep.subr.mxu0 0.0
        %2850 = vmatpush1.xpose.msra.mxu0 0.0
        %2851 = vmatprep.mubr.f32.mxu0 0.0
        %2852 = vmatmul.mubr.f32.gmra.mrb[0].mxu0 %v2783
        %v2853 = vpop.f32.mrb[0].mxu0
        %v2854 = vadd.f32 %v663, %v2853
        %v2855 = vpop.f32.mrb[0].mxu0
        %2856 = vdwg.mxu0
        %v2857 = vsel %vm858, %v2854, -inf
        %2858 = vmax.xlane.f32.xlu0 %v2857
        %v2859 = vpop.xlane.xlu0 %2858
        %v2860 = vsub.f32 %v2854, %v2859
        %v2861 = vmul.f32 %v2860, 1.442695
        %v2862 = vpow.pop %v2861
        %v2863 = vsel %vm858, %v2862, 0.0
        %2864 = vadd.xlane.f32.xlu0 %v2863
        %v2865 = vpop.xlane.xlu0 %2864
        %v2866 = vrcp.pop %v2865
        %v2867 = vmul.f32 %v2862, %v2866
        %v2868 = vmul.f32 %v2775, %v871
        %v2869 = vmul.f32 %v2775, %v880
        %v2871 = vsel %vm666, %v2869, 0
        %2873 = vmatprep.subr.mxu0 0.0
        %2874 = vmatpush1.xpose.msra.mxu0 %v2785
        %2875 = vmatprep.subr.mxu0 0.0
        %2876 = vmatpush1.xpose.msra.mxu0 0.0
        %2877 = vmatprep.subr.mxu0 0.0
        %2878 = vmatpush1.xpose.msra.mxu0 0.0
        %2879 = vmatprep.subr.mxu0 0.0
        %2880 = vmatpush1.xpose.msra.mxu0 0.0
        %2881 = vmatprep.subr.mxu0 0.0
        %2882 = vmatpush1.xpose.msra.mxu0 0.0
        %2883 = vmatprep.subr.mxu0 0.0
        %2884 = vmatpush1.xpose.msra.mxu0 0.0
        %2885 = vmatprep.subr.mxu0 0.0
        %2886 = vmatpush1.xpose.msra.mxu0 0.0
        %2887 = vmatprep.subr.mxu0 0.0
        %2888 = vmatpush1.xpose.msra.mxu0 0.0
        %2889 = vmatprep.subr.mxu0 0.0
        %2890 = vmatpush1.xpose.msra.mxu0 0.0
        %2891 = vmatprep.subr.mxu0 0.0
        %2892 = vmatpush1.xpose.msra.mxu0 0.0
        %2893 = vmatprep.subr.mxu0 0.0
        %2894 = vmatpush1.xpose.msra.mxu0 0.0
        %2895 = vmatprep.subr.mxu0 0.0
        %2896 = vmatpush1.xpose.msra.mxu0 0.0
        %2897 = vmatprep.subr.mxu0 0.0
        %2898 = vmatpush1.xpose.msra.mxu0 0.0
        %2899 = vmatprep.subr.mxu0 0.0
        %2900 = vmatpush1.xpose.msra.mxu0 0.0
        %2901 = vmatprep.subr.mxu0 0.0
        %2902 = vmatpush1.xpose.msra.mxu0 0.0
        %2903 = vmatprep.subr.mxu0 0.0
        %2904 = vmatpush1.xpose.msra.mxu0 0.0
        %2905 = vmatprep.subr.mxu0 0.0
        %2906 = vmatpush1.xpose.msra.mxu0 0.0
        %2907 = vmatprep.subr.mxu0 0.0
        %2908 = vmatpush1.xpose.msra.mxu0 0.0
        %2909 = vmatprep.subr.mxu0 0.0
        %2910 = vmatpush1.xpose.msra.mxu0 0.0
        %2911 = vmatprep.subr.mxu0 0.0
        %2912 = vmatpush1.xpose.msra.mxu0 0.0
        %2913 = vmatprep.subr.mxu0 0.0
        %2914 = vmatpush1.xpose.msra.mxu0 0.0
        %2915 = vmatprep.subr.mxu0 0.0
        %2916 = vmatpush1.xpose.msra.mxu0 0.0
        %2917 = vmatprep.subr.mxu0 0.0
        %2918 = vmatpush1.xpose.msra.mxu0 0.0
        %2919 = vmatprep.subr.mxu0 0.0
        %2920 = vmatpush1.xpose.msra.mxu0 0.0
        %2921 = vmatprep.subr.mxu0 0.0
        %2922 = vmatpush1.xpose.msra.mxu0 0.0
        %2923 = vmatprep.subr.mxu0 0.0
        %2924 = vmatpush1.xpose.msra.mxu0 0.0
        %2925 = vmatprep.subr.mxu0 0.0
        %2926 = vmatpush1.xpose.msra.mxu0 0.0
        %2927 = vmatprep.subr.mxu0 0.0
        %2928 = vmatpush1.xpose.msra.mxu0 0.0
        %2929 = vmatprep.subr.mxu0 0.0
        %2930 = vmatpush1.xpose.msra.mxu0 0.0
        %2931 = vmatprep.subr.mxu0 0.0
        %2932 = vmatpush1.xpose.msra.mxu0 0.0
        %2933 = vmatprep.subr.mxu0 0.0
        %2934 = vmatpush1.xpose.msra.mxu0 0.0
        %2935 = vmatprep.subr.mxu0 0.0
        %2936 = vmatpush1.xpose.msra.mxu0 0.0
        %2937 = vmatprep.mubr.f32.mxu0 0.0
        %2938 = vmatmul.mubr.f32.gmra.mrb[0].mxu0 %v2871
        %v2939 = vpop.f32.mrb[0].mxu0
        %v2940 = vadd.f32 %v663, %v2939
        %v2941 = vpop.f32.mrb[0].mxu0
        %2942 = vdwg.mxu0
        %v2943 = vsel %vm858, %v2940, -inf
        %2944 = vmax.xlane.f32.xlu0 %v2943
        %v2945 = vpop.xlane.xlu0 %2944
        %v2946 = vsub.f32 %v2940, %v2945
        %v2947 = vmul.f32 %v2946, 1.442695
        %v2948 = vpow.pop %v2947
        %v2949 = vsel %vm858, %v2948, 0.0
        %2950 = vadd.xlane.f32.xlu0 %v2949
        %v2951 = vpop.xlane.xlu0 %2950
        %v2952 = vrcp.pop %v2951
        %v2953 = vmul.f32 %v2948, %v2952
        %v2954 = vmul.f32 %v2775, %v968
        %2956 = vrot.lane.b32.xlu0 %v2954, 64
        %v2957 = vpop.permute.xlu0 %2956
        %v2960 = vsel %vm858, %v2953, 0
        %2962 = vmatprep.subr.mxu0 0.0
        %2963 = vmatpush1.msra.mxu0 %v2957
        %2964 = vmatprep.subr.mxu0 0.0
        %2965 = vmatpush1.msra.mxu0 0.0
        %2966 = vmatprep.subr.mxu0 0.0
        %2967 = vmatpush1.msra.mxu0 0.0
        %2968 = vmatprep.subr.mxu0 0.0
        %2969 = vmatpush1.msra.mxu0 0.0
        %2970 = vmatprep.subr.mxu0 0.0
        %2971 = vmatpush1.msra.mxu0 0.0
        %2972 = vmatprep.subr.mxu0 0.0
        %2973 = vmatpush1.msra.mxu0 0.0
        %2974 = vmatprep.subr.mxu0 0.0
        %2975 = vmatpush1.msra.mxu0 0.0
        %2976 = vmatprep.subr.mxu0 0.0
        %2977 = vmatpush1.msra.mxu0 0.0
        %2978 = vmatprep.subr.mxu0 0.0
        %2979 = vmatpush1.msra.mxu0 0.0
        %2980 = vmatprep.subr.mxu0 0.0
        %2981 = vmatpush1.msra.mxu0 0.0
        %2982 = vmatprep.subr.mxu0 0.0
        %2983 = vmatpush1.msra.mxu0 0.0
        %2984 = vmatprep.subr.mxu0 0.0
        %2985 = vmatpush1.msra.mxu0 0.0
        %2986 = vmatprep.subr.mxu0 0.0
        %2987 = vmatpush1.msra.mxu0 0.0
        %2988 = vmatprep.subr.mxu0 0.0
        %2989 = vmatpush1.msra.mxu0 0.0
        %2990 = vmatprep.subr.mxu0 0.0
        %2991 = vmatpush1.msra.mxu0 0.0
        %2992 = vmatprep.subr.mxu0 0.0
        %2993 = vmatpush1.msra.mxu0 0.0
        %2994 = vmatprep.subr.mxu0 0.0
        %2995 = vmatpush1.msra.mxu0 0.0
        %2996 = vmatprep.subr.mxu0 0.0
        %2997 = vmatpush1.msra.mxu0 0.0
        %2998 = vmatprep.subr.mxu0 0.0
        %2999 = vmatpush1.msra.mxu0 0.0
        %3000 = vmatprep.subr.mxu0 0.0
        %3001 = vmatpush1.msra.mxu0 0.0
        %3002 = vmatprep.subr.mxu0 0.0
        %3003 = vmatpush1.msra.mxu0 0.0
        %3004 = vmatprep.subr.mxu0 0.0
        %3005 = vmatpush1.msra.mxu0 0.0
        %3006 = vmatprep.subr.mxu0 0.0
        %3007 = vmatpush1.msra.mxu0 0.0
        %3008 = vmatprep.subr.mxu0 0.0
        %3009 = vmatpush1.msra.mxu0 0.0
        %3010 = vmatprep.subr.mxu0 0.0
        %3011 = vmatpush1.msra.mxu0 0.0
        %3012 = vmatprep.subr.mxu0 0.0
        %3013 = vmatpush1.msra.mxu0 0.0
        %3014 = vmatprep.subr.mxu0 0.0
        %3015 = vmatpush1.msra.mxu0 0.0
        %3016 = vmatprep.subr.mxu0 0.0
        %3017 = vmatpush1.msra.mxu0 0.0
        %3018 = vmatprep.subr.mxu0 0.0
        %3019 = vmatpush1.msra.mxu0 0.0
        %3020 = vmatprep.subr.mxu0 0.0
        %3021 = vmatpush1.msra.mxu0 0.0
        %3022 = vmatprep.subr.mxu0 0.0
        %3023 = vmatpush1.msra.mxu0 0.0
        %3024 = vmatprep.subr.mxu0 0.0
        %3025 = vmatpush1.msra.mxu0 0.0
        %3026 = vmatprep.mubr.f32.mxu0 0.0
        %3027 = vmatmul.mubr.f32.gmra.mrb[0].mxu0 %v2960
        %v3028 = vpop.f32.mrb[0].mxu0
        %v3029 = vadd.f32 0.0, %v3028
        %v3030 = vpop.f32.mrb[0].mxu0
        %3031 = vdwg.mxu0
        %3033 = vrot.lane.b32.xlu0 %v2868, 64
        %v3034 = vpop.permute.xlu0 %3033
        %v3037 = vsel %vm858, %v2867, 0
        %3039 = vmatprep.subr.mxu0 0.0
        %3040 = vmatpush1.msra.mxu0 %v3034
        %3041 = vmatprep.subr.mxu0 0.0
        %3042 = vmatpush1.msra.mxu0 0.0
        %3043 = vmatprep.subr.mxu0 0.0
        %3044 = vmatpush1.msra.mxu0 0.0
        %3045 = vmatprep.subr.mxu0 0.0
        %3046 = vmatpush1.msra.mxu0 0.0
        %3047 = vmatprep.subr.mxu0 0.0
        %3048 = vmatpush1.msra.mxu0 0.0
        %3049 = vmatprep.subr.mxu0 0.0
        %3050 = vmatpush1.msra.mxu0 0.0
        %3051 = vmatprep.subr.mxu0 0.0
        %3052 = vmatpush1.msra.mxu0 0.0
        %3053 = vmatprep.subr.mxu0 0.0
        %3054 = vmatpush1.msra.mxu0 0.0
        %3055 = vmatprep.subr.mxu0 0.0
        %3056 = vmatpush1.msra.mxu0 0.0
        %3057 = vmatprep.subr.mxu0 0.0
        %3058 = vmatpush1.msra.mxu0 0.0
        %3059 = vmatprep.subr.mxu0 0.0
        %3060 = vmatpush1.msra.mxu0 0.0
        %3061 = vmatprep.subr.mxu0 0.0
        %3062 = vmatpush1.msra.mxu0 0.0
        %3063 = vmatprep.subr.mxu0 0.0
        %3064 = vmatpush1.msra.mxu0 0.0
        %3065 = vmatprep.subr.mxu0 0.0
        %3066 = vmatpush1.msra.mxu0 0.0
        %3067 = vmatprep.subr.mxu0 0.0
        %3068 = vmatpush1.msra.mxu0 0.0
        %3069 = vmatprep.subr.mxu0 0.0
        %3070 = vmatpush1.msra.mxu0 0.0
        %3071 = vmatprep.subr.mxu0 0.0
        %3072 = vmatpush1.msra.mxu0 0.0
        %3073 = vmatprep.subr.mxu0 0.0
        %3074 = vmatpush1.msra.mxu0 0.0
        %3075 = vmatprep.subr.mxu0 0.0
        %3076 = vmatpush1.msra.mxu0 0.0
        %3077 = vmatprep.subr.mxu0 0.0
        %3078 = vmatpush1.msra.mxu0 0.0
        %3079 = vmatprep.subr.mxu0 0.0
        %3080 = vmatpush1.msra.mxu0 0.0
        %3081 = vmatprep.subr.mxu0 0.0
        %3082 = vmatpush1.msra.mxu0 0.0
        %3083 = vmatprep.subr.mxu0 0.0
        %3084 = vmatpush1.msra.mxu0 0.0
        %3085 = vmatprep.subr.mxu0 0.0
        %3086 = vmatpush1.msra.mxu0 0.0
        %3087 = vmatprep.subr.mxu0 0.0
        %3088 = vmatpush1.msra.mxu0 0.0
        %3089 = vmatprep.subr.mxu0 0.0
        %3090 = vmatpush1.msra.mxu0 0.0
        %3091 = vmatprep.subr.mxu0 0.0
        %3092 = vmatpush1.msra.mxu0 0.0
        %3093 = vmatprep.subr.mxu0 0.0
        %3094 = vmatpush1.msra.mxu0 0.0
        %3095 = vmatprep.subr.mxu0 0.0
        %3096 = vmatpush1.msra.mxu0 0.0
        %3097 = vmatprep.subr.mxu0 0.0
        %3098 = vmatpush1.msra.mxu0 0.0
        %3099 = vmatprep.subr.mxu0 0.0
        %3100 = vmatpush1.msra.mxu0 0.0
        %3101 = vmatprep.subr.mxu0 0.0
        %3102 = vmatpush1.msra.mxu0 0.0
        %3103 = vmatprep.mubr.f32.mxu0 0.0
        %3104 = vmatmul.mubr.f32.gmra.mrb[0].mxu0 %v3037
        %v3105 = vpop.f32.mrb[0].mxu0
        %v3106 = vadd.f32 %v3029, %v3105
        %v3107 = vpop.f32.mrb[0].mxu0
        %3108 = vdwg.mxu0
        %v3109 = vmul.f32 %v2775, %v1131
        %v3111 = vsel %vm666, %v3109, 0
        %3113 = vmatprep.subr.mxu0 0.0
        %3114 = vmatpush1.xpose.msra.mxu0 %v2785
        %3115 = vmatprep.subr.mxu0 0.0
        %3116 = vmatpush1.xpose.msra.mxu0 0.0
        %3117 = vmatprep.subr.mxu0 0.0
        %3118 = vmatpush1.xpose.msra.mxu0 0.0
        %3119 = vmatprep.subr.mxu0 0.0
        %3120 = vmatpush1.xpose.msra.mxu0 0.0
        %3121 = vmatprep.subr.mxu0 0.0
        %3122 = vmatpush1.xpose.msra.mxu0 0.0
        %3123 = vmatprep.subr.mxu0 0.0
        %3124 = vmatpush1.xpose.msra.mxu0 0.0
        %3125 = vmatprep.subr.mxu0 0.0
        %3126 = vmatpush1.xpose.msra.mxu0 0.0
        %3127 = vmatprep.subr.mxu0 0.0
        %3128 = vmatpush1.xpose.msra.mxu0 0.0
        %3129 = vmatprep.subr.mxu0 0.0
        %3130 = vmatpush1.xpose.msra.mxu0 0.0
        %3131 = vmatprep.subr.mxu0 0.0
        %3132 = vmatpush1.xpose.msra.mxu0 0.0
        %3133 = vmatprep.subr.mxu0 0.0
        %3134 = vmatpush1.xpose.msra.mxu0 0.0
        %3135 = vmatprep.subr.mxu0 0.0
        %3136 = vmatpush1.xpose.msra.mxu0 0.0
        %3137 = vmatprep.subr.mxu0 0.0
        %3138 = vmatpush1.xpose.msra.mxu0 0.0
        %3139 = vmatprep.subr.mxu0 0.0
        %3140 = vmatpush1.xpose.msra.mxu0 0.0
        %3141 = vmatprep.subr.mxu0 0.0
        %3142 = vmatpush1.xpose.msra.mxu0 0.0
        %3143 = vmatprep.subr.mxu0 0.0
        %3144 = vmatpush1.xpose.msra.mxu0 0.0
        %3145 = vmatprep.subr.mxu0 0.0
        %3146 = vmatpush1.xpose.msra.mxu0 0.0
        %3147 = vmatprep.subr.mxu0 0.0
        %3148 = vmatpush1.xpose.msra.mxu0 0.0
        %3149 = vmatprep.subr.mxu0 0.0
        %3150 = vmatpush1.xpose.msra.mxu0 0.0
        %3151 = vmatprep.subr.mxu0 0.0
        %3152 = vmatpush1.xpose.msra.mxu0 0.0
        %3153 = vmatprep.subr.mxu0 0.0
        %3154 = vmatpush1.xpose.msra.mxu0 0.0
        %3155 = vmatprep.subr.mxu0 0.0
        %3156 = vmatpush1.xpose.msra.mxu0 0.0
        %3157 = vmatprep.subr.mxu0 0.0
        %3158 = vmatpush1.xpose.msra.mxu0 0.0
        %3159 = vmatprep.subr.mxu0 0.0
        %3160 = vmatpush1.xpose.msra.mxu0 0.0
        %3161 = vmatprep.subr.mxu0 0.0
        %3162 = vmatpush1.xpose.msra.mxu0 0.0
        %3163 = vmatprep.subr.mxu0 0.0
        %3164 = vmatpush1.xpose.msra.mxu0 0.0
        %3165 = vmatprep.subr.mxu0 0.0
        %3166 = vmatpush1.xpose.msra.mxu0 0.0
        %3167 = vmatprep.subr.mxu0 0.0
        %3168 = vmatpush1.xpose.msra.mxu0 0.0
        %3169 = vmatprep.subr.mxu0 0.0
        %3170 = vmatpush1.xpose.msra.mxu0 0.0
        %3171 = vmatprep.subr.mxu0 0.0
        %3172 = vmatpush1.xpose.msra.mxu0 0.0
        %3173 = vmatprep.subr.mxu0 0.0
        %3174 = vmatpush1.xpose.msra.mxu0 0.0
        %3175 = vmatprep.subr.mxu0 0.0
        %3176 = vmatpush1.xpose.msra.mxu0 0.0
        %3177 = vmatprep.mubr.f32.mxu0 0.0
        %3178 = vmatmul.mubr.f32.gmra.mrb[0].mxu0 %v3111
        %v3179 = vpop.f32.mrb[0].mxu0
        %v3180 = vadd.f32 %v663, %v3179
        %v3181 = vpop.f32.mrb[0].mxu0
        %3182 = vdwg.mxu0
        %v3183 = vsel %vm858, %v3180, -inf
        %3184 = vmax.xlane.f32.xlu0 %v3183
        %v3185 = vpop.xlane.xlu0 %3184
        %v3186 = vsub.f32 %v3180, %v3185
        %v3187 = vmul.f32 %v3186, 1.442695
        %v3188 = vpow.pop %v3187
        %v3189 = vsel %vm858, %v3188, 0.0
        %3190 = vadd.xlane.f32.xlu0 %v3189
        %v3191 = vpop.xlane.xlu0 %3190
        %v3192 = vrcp.pop %v3191
        %v3193 = vmul.f32 %v3188, %v3192
        %v3194 = vmul.f32 %v2775, %v1219
        %3196 = vrot.lane.b32.xlu0 %v3194, 64
        %v3197 = vpop.permute.xlu0 %3196
        %v3200 = vsel %vm858, %v3193, 0
        %3202 = vmatprep.subr.mxu0 0.0
        %3203 = vmatpush1.msra.mxu0 %v3197
        %3204 = vmatprep.subr.mxu0 0.0
        %3205 = vmatpush1.msra.mxu0 0.0
        %3206 = vmatprep.subr.mxu0 0.0
        %3207 = vmatpush1.msra.mxu0 0.0
        %3208 = vmatprep.subr.mxu0 0.0
        %3209 = vmatpush1.msra.mxu0 0.0
        %3210 = vmatprep.subr.mxu0 0.0
        %3211 = vmatpush1.msra.mxu0 0.0
        %3212 = vmatprep.subr.mxu0 0.0
        %3213 = vmatpush1.msra.mxu0 0.0
        %3214 = vmatprep.subr.mxu0 0.0
        %3215 = vmatpush1.msra.mxu0 0.0
        %3216 = vmatprep.subr.mxu0 0.0
        %3217 = vmatpush1.msra.mxu0 0.0
        %3218 = vmatprep.subr.mxu0 0.0
        %3219 = vmatpush1.msra.mxu0 0.0
        %3220 = vmatprep.subr.mxu0 0.0
        %3221 = vmatpush1.msra.mxu0 0.0
        %3222 = vmatprep.subr.mxu0 0.0
        %3223 = vmatpush1.msra.mxu0 0.0
        %3224 = vmatprep.subr.mxu0 0.0
        %3225 = vmatpush1.msra.mxu0 0.0
        %3226 = vmatprep.subr.mxu0 0.0
        %3227 = vmatpush1.msra.mxu0 0.0
        %3228 = vmatprep.subr.mxu0 0.0
        %3229 = vmatpush1.msra.mxu0 0.0
        %3230 = vmatprep.subr.mxu0 0.0
        %3231 = vmatpush1.msra.mxu0 0.0
        %3232 = vmatprep.subr.mxu0 0.0
        %3233 = vmatpush1.msra.mxu0 0.0
        %3234 = vmatprep.subr.mxu0 0.0
        %3235 = vmatpush1.msra.mxu0 0.0
        %3236 = vmatprep.subr.mxu0 0.0
        %3237 = vmatpush1.msra.mxu0 0.0
        %3238 = vmatprep.subr.mxu0 0.0
        %3239 = vmatpush1.msra.mxu0 0.0
        %3240 = vmatprep.subr.mxu0 0.0
        %3241 = vmatpush1.msra.mxu0 0.0
        %3242 = vmatprep.subr.mxu0 0.0
        %3243 = vmatpush1.msra.mxu0 0.0
        %3244 = vmatprep.subr.mxu0 0.0
        %3245 = vmatpush1.msra.mxu0 0.0
        %3246 = vmatprep.subr.mxu0 0.0
        %3247 = vmatpush1.msra.mxu0 0.0
        %3248 = vmatprep.subr.mxu0 0.0
        %3249 = vmatpush1.msra.mxu0 0.0
        %3250 = vmatprep.subr.mxu0 0.0
        %3251 = vmatpush1.msra.mxu0 0.0
        %3252 = vmatprep.subr.mxu0 0.0
        %3253 = vmatpush1.msra.mxu0 0.0
        %3254 = vmatprep.subr.mxu0 0.0
        %3255 = vmatpush1.msra.mxu0 0.0
        %3256 = vmatprep.subr.mxu0 0.0
        %3257 = vmatpush1.msra.mxu0 0.0
        %3258 = vmatprep.subr.mxu0 0.0
        %3259 = vmatpush1.msra.mxu0 0.0
        %3260 = vmatprep.subr.mxu0 0.0
        %3261 = vmatpush1.msra.mxu0 0.0
        %3262 = vmatprep.subr.mxu0 0.0
        %3263 = vmatpush1.msra.mxu0 0.0
        %3264 = vmatprep.subr.mxu0 0.0
        %3265 = vmatpush1.msra.mxu0 0.0
        %3266 = vmatprep.mubr.f32.mxu0 0.0
        %3267 = vmatmul.mubr.f32.gmra.mrb[0].mxu0 %v3200
        %v3268 = vpop.f32.mrb[0].mxu0
        %v3269 = vadd.f32 0.0, %v3268
        %v3270 = vpop.f32.mrb[0].mxu0
        %3271 = vdwg.mxu0
        %v3272 = vadd.f32 %v3106, %v3269
        %v3273 = vmul.f32 %v2775, %v1306
        %v3275 = vsel %vm666, %v3273, 0
        %3277 = vmatprep.subr.mxu0 0.0
        %3278 = vmatpush1.xpose.msra.mxu0 %v2785
        %3279 = vmatprep.subr.mxu0 0.0
        %3280 = vmatpush1.xpose.msra.mxu0 0.0
        %3281 = vmatprep.subr.mxu0 0.0
        %3282 = vmatpush1.xpose.msra.mxu0 0.0
        %3283 = vmatprep.subr.mxu0 0.0
        %3284 = vmatpush1.xpose.msra.mxu0 0.0
        %3285 = vmatprep.subr.mxu0 0.0
        %3286 = vmatpush1.xpose.msra.mxu0 0.0
        %3287 = vmatprep.subr.mxu0 0.0
        %3288 = vmatpush1.xpose.msra.mxu0 0.0
        %3289 = vmatprep.subr.mxu0 0.0
        %3290 = vmatpush1.xpose.msra.mxu0 0.0
        %3291 = vmatprep.subr.mxu0 0.0
        %3292 = vmatpush1.xpose.msra.mxu0 0.0
        %3293 = vmatprep.subr.mxu0 0.0
        %3294 = vmatpush1.xpose.msra.mxu0 0.0
        %3295 = vmatprep.subr.mxu0 0.0
        %3296 = vmatpush1.xpose.msra.mxu0 0.0
        %3297 = vmatprep.subr.mxu0 0.0
        %3298 = vmatpush1.xpose.msra.mxu0 0.0
        %3299 = vmatprep.subr.mxu0 0.0
        %3300 = vmatpush1.xpose.msra.mxu0 0.0
        %3301 = vmatprep.subr.mxu0 0.0
        %3302 = vmatpush1.xpose.msra.mxu0 0.0
        %3303 = vmatprep.subr.mxu0 0.0
        %3304 = vmatpush1.xpose.msra.mxu0 0.0
        %3305 = vmatprep.subr.mxu0 0.0
        %3306 = vmatpush1.xpose.msra.mxu0 0.0
        %3307 = vmatprep.subr.mxu0 0.0
        %3308 = vmatpush1.xpose.msra.mxu0 0.0
        %3309 = vmatprep.subr.mxu0 0.0
        %3310 = vmatpush1.xpose.msra.mxu0 0.0
        %3311 = vmatprep.subr.mxu0 0.0
        %3312 = vmatpush1.xpose.msra.mxu0 0.0
        %3313 = vmatprep.subr.mxu0 0.0
        %3314 = vmatpush1.xpose.msra.mxu0 0.0
        %3315 = vmatprep.subr.mxu0 0.0
        %3316 = vmatpush1.xpose.msra.mxu0 0.0
        %3317 = vmatprep.subr.mxu0 0.0
        %3318 = vmatpush1.xpose.msra.mxu0 0.0
        %3319 = vmatprep.subr.mxu0 0.0
        %3320 = vmatpush1.xpose.msra.mxu0 0.0
        %3321 = vmatprep.subr.mxu0 0.0
        %3322 = vmatpush1.xpose.msra.mxu0 0.0
        %3323 = vmatprep.subr.mxu0 0.0
        %3324 = vmatpush1.xpose.msra.mxu0 0.0
        %3325 = vmatprep.subr.mxu0 0.0
        %3326 = vmatpush1.xpose.msra.mxu0 0.0
        %3327 = vmatprep.subr.mxu0 0.0
        %3328 = vmatpush1.xpose.msra.mxu0 0.0
        %3329 = vmatprep.subr.mxu0 0.0
        %3330 = vmatpush1.xpose.msra.mxu0 0.0
        %3331 = vmatprep.subr.mxu0 0.0
        %3332 = vmatpush1.xpose.msra.mxu0 0.0
        %3333 = vmatprep.subr.mxu0 0.0
        %3334 = vmatpush1.xpose.msra.mxu0 0.0
        %3335 = vmatprep.subr.mxu0 0.0
        %3336 = vmatpush1.xpose.msra.mxu0 0.0
        %3337 = vmatprep.subr.mxu0 0.0
        %3338 = vmatpush1.xpose.msra.mxu0 0.0
        %3339 = vmatprep.subr.mxu0 0.0
        %3340 = vmatpush1.xpose.msra.mxu0 0.0
        %3341 = vmatprep.mubr.f32.mxu0 0.0
        %3342 = vmatmul.mubr.f32.gmra.mrb[0].mxu0 %v3275
        %v3343 = vpop.f32.mrb[0].mxu0
        %v3344 = vadd.f32 %v663, %v3343
        %v3345 = vpop.f32.mrb[0].mxu0
        %3346 = vdwg.mxu0
        %v3347 = vsel %vm858, %v3344, -inf
        %3348 = vmax.xlane.f32.xlu0 %v3347
        %v3349 = vpop.xlane.xlu0 %3348
        %v3350 = vsub.f32 %v3344, %v3349
        %v3351 = vmul.f32 %v3350, 1.442695
        %v3352 = vpow.pop %v3351
        %v3353 = vsel %vm858, %v3352, 0.0
        %3354 = vadd.xlane.f32.xlu0 %v3353
        %v3355 = vpop.xlane.xlu0 %3354
        %v3356 = vrcp.pop %v3355
        %v3357 = vmul.f32 %v3352, %v3356
        %v3358 = vmul.f32 %v2775, %v1394
        %3360 = vrot.lane.b32.xlu0 %v3358, 64
        %v3361 = vpop.permute.xlu0 %3360
        %v3364 = vsel %vm858, %v3357, 0
        %3366 = vmatprep.subr.mxu0 0.0
        %3367 = vmatpush1.msra.mxu0 %v3361
        %3368 = vmatprep.subr.mxu0 0.0
        %3369 = vmatpush1.msra.mxu0 0.0
        %3370 = vmatprep.subr.mxu0 0.0
        %3371 = vmatpush1.msra.mxu0 0.0
        %3372 = vmatprep.subr.mxu0 0.0
        %3373 = vmatpush1.msra.mxu0 0.0
        %3374 = vmatprep.subr.mxu0 0.0
        %3375 = vmatpush1.msra.mxu0 0.0
        %3376 = vmatprep.subr.mxu0 0.0
        %3377 = vmatpush1.msra.mxu0 0.0
        %3378 = vmatprep.subr.mxu0 0.0
        %3379 = vmatpush1.msra.mxu0 0.0
        %3380 = vmatprep.subr.mxu0 0.0
        %3381 = vmatpush1.msra.mxu0 0.0
        %3382 = vmatprep.subr.mxu0 0.0
        %3383 = vmatpush1.msra.mxu0 0.0
        %3384 = vmatprep.subr.mxu0 0.0
        %3385 = vmatpush1.msra.mxu0 0.0
        %3386 = vmatprep.subr.mxu0 0.0
        %3387 = vmatpush1.msra.mxu0 0.0
        %3388 = vmatprep.subr.mxu0 0.0
        %3389 = vmatpush1.msra.mxu0 0.0
        %3390 = vmatprep.subr.mxu0 0.0
        %3391 = vmatpush1.msra.mxu0 0.0
        %3392 = vmatprep.subr.mxu0 0.0
        %3393 = vmatpush1.msra.mxu0 0.0
        %3394 = vmatprep.subr.mxu0 0.0
        %3395 = vmatpush1.msra.mxu0 0.0
        %3396 = vmatprep.subr.mxu0 0.0
        %3397 = vmatpush1.msra.mxu0 0.0
        %3398 = vmatprep.subr.mxu0 0.0
        %3399 = vmatpush1.msra.mxu0 0.0
        %3400 = vmatprep.subr.mxu0 0.0
        %3401 = vmatpush1.msra.mxu0 0.0
        %3402 = vmatprep.subr.mxu0 0.0
        %3403 = vmatpush1.msra.mxu0 0.0
        %3404 = vmatprep.subr.mxu0 0.0
        %3405 = vmatpush1.msra.mxu0 0.0
        %3406 = vmatprep.subr.mxu0 0.0
        %3407 = vmatpush1.msra.mxu0 0.0
        %3408 = vmatprep.subr.mxu0 0.0
        %3409 = vmatpush1.msra.mxu0 0.0
        %3410 = vmatprep.subr.mxu0 0.0
        %3411 = vmatpush1.msra.mxu0 0.0
        %3412 = vmatprep.subr.mxu0 0.0
        %3413 = vmatpush1.msra.mxu0 0.0
        %3414 = vmatprep.subr.mxu0 0.0
        %3415 = vmatpush1.msra.mxu0 0.0
        %3416 = vmatprep.subr.mxu0 0.0
        %3417 = vmatpush1.msra.mxu0 0.0
        %3418 = vmatprep.subr.mxu0 0.0
        %3419 = vmatpush1.msra.mxu0 0.0
        %3420 = vmatprep.subr.mxu0 0.0
        %3421 = vmatpush1.msra.mxu0 0.0
        %3422 = vmatprep.subr.mxu0 0.0
        %3423 = vmatpush1.msra.mxu0 0.0
        %3424 = vmatprep.subr.mxu0 0.0
        %3425 = vmatpush1.msra.mxu0 0.0
        %3426 = vmatprep.subr.mxu0 0.0
        %3427 = vmatpush1.msra.mxu0 0.0
        %3428 = vmatprep.subr.mxu0 0.0
        %3429 = vmatpush1.msra.mxu0 0.0
        %3430 = vmatprep.mubr.f32.mxu0 0.0
        %3431 = vmatmul.mubr.f32.gmra.mrb[0].mxu0 %v3364
        %v3432 = vpop.f32.mrb[0].mxu0
        %v3433 = vadd.f32 0.0, %v3432
        %v3434 = vpop.f32.mrb[0].mxu0
        %3435 = vdwg.mxu0
        %v3436 = vadd.f32 %v3272, %v3433
        %v3437 = vadd.f32 %v2668, %v3436
        %s3438 = scalar_lea.vmem %s8, 2
        %v3439 = vld [vmem:[%s3438] sm:$0x1]
        %s3440 = scalar_lea.vmem %s9, 2
        %v3441 = vld [vmem:[%s3440] sm:$0x1]
        %v3442 = vsel %vm666, %v3437, 0.0
        %3443 = vadd.xlane.f32.xlu0 %v3442
        %v3444 = vpop.xlane.xlu0 %3443
        %v3445 = vmul.f32 %v3444, %v670
        %v3446 = vsub.f32 %v3437, %v3445
        %v3447 = vmul.f32 %v3446, %v3446
        %v3448 = vsel %vm666, %v3447, 0.0
        %3449 = vadd.xlane.f32.xlu0 %v3448
        %v3450 = vpop.xlane.xlu0 %3449
        %v3451 = vmul.f32 %v3450, %v670
        %v3452 = vadd.f32 %v3451, 1e-05
        %v3453 = vrsqrt.pop %v3452
        %v3454 = vmul.f32 %v3446, %v3453
        %v3456 = vlaneseq
        %v3457 = vshrl.u32 %v3456, 7
        %v3458 = vsub.s32 0, %v3457
        %v3459 = vrot.slane %v3439, %v3458
        %v3461 = vmul.f32 %v3454, %v3459
        %v3463 = vlaneseq
        %v3464 = vshrl.u32 %v3463, 7
        %v3465 = vsub.s32 0, %v3464
        %v3466 = vrot.slane %v3441, %v3465
        %v3468 = vadd.f32 %v3461, %v3466
        %s3469 = scalar_lea.vmem %s10, 64
        %v3470 = vld [vmem:[%s3469] sm:$0xff]
        %v3471 = vld [vmem:[%s3469 + $0x8] sm:$0xff]
        %v3472 = vld [vmem:[%s3469 + $0x10] sm:$0xff]
        %v3473 = vld [vmem:[%s3469 + $0x18] sm:$0xff]
        %s3474 = scalar_lea.vmem %s11, 2
        %v3475 = vld [vmem:[%s3474] sm:$0x1]
        %v3477 = vlaneseq
        %v3478 = vshrl.u32 %v3477, 7
        %v3479 = vsub.s32 0, %v3478
        %v3480 = vrot.slane %v3475, %v3479
        %v3483 = vsel %vm666, %v3468, 0
        %3485 = vmatprep.subr.mxu0 0.0
        %3486 = vmatpush1.msra.mxu0 %v3470
        %3487 = vmatprep.subr.mxu0 0.0
        %3488 = vmatpush1.msra.mxu0 %v3471
        %3489 = vmatprep.subr.mxu0 0.0
        %3490 = vmatpush1.msra.mxu0 %v3472
        %3491 = vmatprep.subr.mxu0 0.0
        %3492 = vmatpush1.msra.mxu0 %v3473
        %3493 = vmatprep.subr.mxu0 0.0
        %3494 = vmatpush1.msra.mxu0 0.0
        %3495 = vmatprep.subr.mxu0 0.0
        %3496 = vmatpush1.msra.mxu0 0.0
        %3497 = vmatprep.subr.mxu0 0.0
        %3498 = vmatpush1.msra.mxu0 0.0
        %3499 = vmatprep.subr.mxu0 0.0
        %3500 = vmatpush1.msra.mxu0 0.0
        %3501 = vmatprep.subr.mxu0 0.0
        %3502 = vmatpush1.msra.mxu0 0.0
        %3503 = vmatprep.subr.mxu0 0.0
        %3504 = vmatpush1.msra.mxu0 0.0
        %3505 = vmatprep.subr.mxu0 0.0
        %3506 = vmatpush1.msra.mxu0 0.0
        %3507 = vmatprep.subr.mxu0 0.0
        %3508 = vmatpush1.msra.mxu0 0.0
        %3509 = vmatprep.subr.mxu0 0.0
        %3510 = vmatpush1.msra.mxu0 0.0
        %3511 = vmatprep.subr.mxu0 0.0
        %3512 = vmatpush1.msra.mxu0 0.0
        %3513 = vmatprep.subr.mxu0 0.0
        %3514 = vmatpush1.msra.mxu0 0.0
        %3515 = vmatprep.subr.mxu0 0.0
        %3516 = vmatpush1.msra.mxu0 0.0
        %3517 = vmatprep.subr.mxu0 0.0
        %3518 = vmatpush1.msra.mxu0 0.0
        %3519 = vmatprep.subr.mxu0 0.0
        %3520 = vmatpush1.msra.mxu0 0.0
        %3521 = vmatprep.subr.mxu0 0.0
        %3522 = vmatpush1.msra.mxu0 0.0
        %3523 = vmatprep.subr.mxu0 0.0
        %3524 = vmatpush1.msra.mxu0 0.0
        %3525 = vmatprep.subr.mxu0 0.0
        %3526 = vmatpush1.msra.mxu0 0.0
        %3527 = vmatprep.subr.mxu0 0.0
        %3528 = vmatpush1.msra.mxu0 0.0
        %3529 = vmatprep.subr.mxu0 0.0
        %3530 = vmatpush1.msra.mxu0 0.0
        %3531 = vmatprep.subr.mxu0 0.0
        %3532 = vmatpush1.msra.mxu0 0.0
        %3533 = vmatprep.subr.mxu0 0.0
        %3534 = vmatpush1.msra.mxu0 0.0
        %3535 = vmatprep.subr.mxu0 0.0
        %3536 = vmatpush1.msra.mxu0 0.0
        %3537 = vmatprep.subr.mxu0 0.0
        %3538 = vmatpush1.msra.mxu0 0.0
        %3539 = vmatprep.subr.mxu0 0.0
        %3540 = vmatpush1.msra.mxu0 0.0
        %3541 = vmatprep.subr.mxu0 0.0
        %3542 = vmatpush1.msra.mxu0 0.0
        %3543 = vmatprep.subr.mxu0 0.0
        %3544 = vmatpush1.msra.mxu0 0.0
        %3545 = vmatprep.subr.mxu0 0.0
        %3546 = vmatpush1.msra.mxu0 0.0
        %3547 = vmatprep.subr.mxu0 0.0
        %3548 = vmatpush1.msra.mxu0 0.0
        %3549 = vmatprep.mubr.f32.mxu0 0.0
        %3550 = vmatmul.mubr.f32.gmra.mrb[0].mxu0 %v3483
        %v3551 = vpop.f32.mrb[0].mxu0
        %v3552 = vadd.f32 %v3480, %v3551
        %v3553 = vpop.f32.mrb[0].mxu0
        %3554 = vdwg.mxu0
        %v3555 = vmax.f32 %v3552, 0.0
        %s3556 = scalar_lea.vmem %s12, 256
        %v3557 = vld [vmem:[%s3556] sm:$0xff]
        %v3558 = vld [vmem:[%s3556 + $0x8] sm:$0xff]
        %v3559 = vld [vmem:[%s3556 + $0x10] sm:$0xff]
        %v3560 = vld [vmem:[%s3556 + $0x18] sm:$0xff]
        %v3561 = vld [vmem:[%s3556 + $0x20] sm:$0xff]
        %v3562 = vld [vmem:[%s3556 + $0x28] sm:$0xff]
        %v3563 = vld [vmem:[%s3556 + $0x30] sm:$0xff]
        %v3564 = vld [vmem:[%s3556 + $0x38] sm:$0xff]
        %v3565 = vld [vmem:[%s3556 + $0x40] sm:$0xff]
        %v3566 = vld [vmem:[%s3556 + $0x48] sm:$0xff]
        %v3567 = vld [vmem:[%s3556 + $0x50] sm:$0xff]
        %v3568 = vld [vmem:[%s3556 + $0x58] sm:$0xff]
        %v3569 = vld [vmem:[%s3556 + $0x60] sm:$0xff]
        %v3570 = vld [vmem:[%s3556 + $0x68] sm:$0xff]
        %v3571 = vld [vmem:[%s3556 + $0x70] sm:$0xff]
        %v3572 = vld [vmem:[%s3556 + $0x78] sm:$0xff]
        %3573 = vmatprep.subr.mxu0 0.0
        %3574 = vmatpush1.msra.mxu0 %v3557
        %3575 = vmatprep.subr.mxu0 0.0
        %3576 = vmatpush1.msra.mxu0 %v3558
        %3577 = vmatprep.subr.mxu0 0.0
        %3578 = vmatpush1.msra.mxu0 %v3559
        %3579 = vmatprep.subr.mxu0 0.0
        %3580 = vmatpush1.msra.mxu0 %v3560
        %3581 = vmatprep.subr.mxu0 0.0
        %3582 = vmatpush1.msra.mxu0 %v3561
        %3583 = vmatprep.subr.mxu0 0.0
        %3584 = vmatpush1.msra.mxu0 %v3562
        %3585 = vmatprep.subr.mxu0 0.0
        %3586 = vmatpush1.msra.mxu0 %v3563
        %3587 = vmatprep.subr.mxu0 0.0
        %3588 = vmatpush1.msra.mxu0 %v3564
        %3589 = vmatprep.subr.mxu0 0.0
        %3590 = vmatpush1.msra.mxu0 %v3565
        %3591 = vmatprep.subr.mxu0 0.0
        %3592 = vmatpush1.msra.mxu0 %v3566
        %3593 = vmatprep.subr.mxu0 0.0
        %3594 = vmatpush1.msra.mxu0 %v3567
        %3595 = vmatprep.subr.mxu0 0.0
        %3596 = vmatpush1.msra.mxu0 %v3568
        %3597 = vmatprep.subr.mxu0 0.0
        %3598 = vmatpush1.msra.mxu0 %v3569
        %3599 = vmatprep.subr.mxu0 0.0
        %3600 = vmatpush1.msra.mxu0 %v3570
        %3601 = vmatprep.subr.mxu0 0.0
        %3602 = vmatpush1.msra.mxu0 %v3571
        %3603 = vmatprep.subr.mxu0 0.0
        %3604 = vmatpush1.msra.mxu0 %v3572
        %3605 = vmatprep.subr.mxu0 0.0
        %3606 = vmatpush1.msra.mxu0 0.0
        %3607 = vmatprep.subr.mxu0 0.0
        %3608 = vmatpush1.msra.mxu0 0.0
        %3609 = vmatprep.subr.mxu0 0.0
        %3610 = vmatpush1.msra.mxu0 0.0
        %3611 = vmatprep.subr.mxu0 0.0
        %3612 = vmatpush1.msra.mxu0 0.0
        %3613 = vmatprep.subr.mxu0 0.0
        %3614 = vmatpush1.msra.mxu0 0.0
        %3615 = vmatprep.subr.mxu0 0.0
        %3616 = vmatpush1.msra.mxu0 0.0
        %3617 = vmatprep.subr.mxu0 0.0
        %3618 = vmatpush1.msra.mxu0 0.0
        %3619 = vmatprep.subr.mxu0 0.0
        %3620 = vmatpush1.msra.mxu0 0.0
        %3621 = vmatprep.subr.mxu0 0.0
        %3622 = vmatpush1.msra.mxu0 0.0
        %3623 = vmatprep.subr.mxu0 0.0
        %3624 = vmatpush1.msra.mxu0 0.0
        %3625 = vmatprep.subr.mxu0 0.0
        %3626 = vmatpush1.msra.mxu0 0.0
        %3627 = vmatprep.subr.mxu0 0.0
        %3628 = vmatpush1.msra.mxu0 0.0
        %3629 = vmatprep.subr.mxu0 0.0
        %3630 = vmatpush1.msra.mxu0 0.0
        %3631 = vmatprep.subr.mxu0 0.0
        %3632 = vmatpush1.msra.mxu0 0.0
        %3633 = vmatprep.subr.mxu0 0.0
        %3634 = vmatpush1.msra.mxu0 0.0
        %3635 = vmatprep.subr.mxu0 0.0
        %3636 = vmatpush1.msra.mxu0 0.0
        %3637 = vmatprep.mubr.f32.mxu0 0.0
        %3638 = vmatmul.mubr.f32.gmra.mrb[0].mxu0 %v3555
        %v3639 = vpop.f32.mrb[0].mxu0
        %v3640 = vadd.f32 0.0, %v3639
        %v3641 = vpop.f32.mrb[0].mxu0
        %3642 = vdwg.mxu0
        %v3643 = vadd.f32 %v3437, %v3640
        %s3644 = scalar_lea.vmem %s13, 2
        %v3645 = vld [vmem:[%s3644] sm:$0x1]
        %v3647 = vlaneseq
        %v3648 = vshrl.u32 %v3647, 7
        %v3649 = vsub.s32 0, %v3648
        %v3650 = vrot.slane %v3645, %v3649
        %v3652 = vadd.f32 %v3643, %v3650
        %s3653 = scalar_lea.vmem %s5, 3
        %v3654 = vld [vmem:[%s3653] sm:$0x1]
        %s3655 = scalar_lea.vmem %s6, 3
        %v3656 = vld [vmem:[%s3655] sm:$0x1]
        %v3657 = vsel %vm666, %v3652, 0.0
        %3658 = vadd.xlane.f32.xlu0 %v3657
        %v3659 = vpop.xlane.xlu0 %3658
        %v3660 = vmul.f32 %v3659, %v670
        %v3661 = vsub.f32 %v3652, %v3660
        %v3662 = vmul.f32 %v3661, %v3661
        %v3663 = vsel %vm666, %v3662, 0.0
        %3664 = vadd.xlane.f32.xlu0 %v3663
        %v3665 = vpop.xlane.xlu0 %3664
        %v3666 = vmul.f32 %v3665, %v670
        %v3667 = vadd.f32 %v3666, 1e-05
        %v3668 = vrsqrt.pop %v3667
        %v3669 = vmul.f32 %v3661, %v3668
        %v3671 = vlaneseq
        %v3672 = vshrl.u32 %v3671, 7
        %v3673 = vsub.s32 0, %v3672
        %v3674 = vrot.slane %v3654, %v3673
        %v3676 = vmul.f32 %v3669, %v3674
        %v3678 = vlaneseq
        %v3679 = vshrl.u32 %v3678, 7
        %v3680 = vsub.s32 0, %v3679
        %v3681 = vrot.slane %v3656, %v3680
        %v3683 = vadd.f32 %v3676, %v3681
        %s3684 = scalar_lea.vmem %s7, 96
        %v3685 = vld [vmem:[%s3684] sm:$0xff]
        %v3686 = vld [vmem:[%s3684 + $0x8] sm:$0xff]
        %v3687 = vld [vmem:[%s3684 + $0x10] sm:$0xff]
        %v3688 = vld [vmem:[%s3684 + $0x18] sm:$0xff]
        %v3690 = vsel %vm666, %v3683, 0
        %3692 = vmatprep.subr.mxu0 0.0
        %3693 = vmatpush1.msra.mxu0 %v3685
        %3694 = vmatprep.subr.mxu0 0.0
        %3695 = vmatpush1.msra.mxu0 %v3686
        %3696 = vmatprep.subr.mxu0 0.0
        %3697 = vmatpush1.msra.mxu0 %v3687
        %3698 = vmatprep.subr.mxu0 0.0
        %3699 = vmatpush1.msra.mxu0 %v3688
        %3700 = vmatprep.subr.mxu0 0.0
        %3701 = vmatpush1.msra.mxu0 0.0
        %3702 = vmatprep.subr.mxu0 0.0
        %3703 = vmatpush1.msra.mxu0 0.0
        %3704 = vmatprep.subr.mxu0 0.0
        %3705 = vmatpush1.msra.mxu0 0.0
        %3706 = vmatprep.subr.mxu0 0.0
        %3707 = vmatpush1.msra.mxu0 0.0
        %3708 = vmatprep.subr.mxu0 0.0
        %3709 = vmatpush1.msra.mxu0 0.0
        %3710 = vmatprep.subr.mxu0 0.0
        %3711 = vmatpush1.msra.mxu0 0.0
        %3712 = vmatprep.subr.mxu0 0.0
        %3713 = vmatpush1.msra.mxu0 0.0
        %3714 = vmatprep.subr.mxu0 0.0
        %3715 = vmatpush1.msra.mxu0 0.0
        %3716 = vmatprep.subr.mxu0 0.0
        %3717 = vmatpush1.msra.mxu0 0.0
        %3718 = vmatprep.subr.mxu0 0.0
        %3719 = vmatpush1.msra.mxu0 0.0
        %3720 = vmatprep.subr.mxu0 0.0
        %3721 = vmatpush1.msra.mxu0 0.0
        %3722 = vmatprep.subr.mxu0 0.0
        %3723 = vmatpush1.msra.mxu0 0.0
        %3724 = vmatprep.subr.mxu0 0.0
        %3725 = vmatpush1.msra.mxu0 0.0
        %3726 = vmatprep.subr.mxu0 0.0
        %3727 = vmatpush1.msra.mxu0 0.0
        %3728 = vmatprep.subr.mxu0 0.0
        %3729 = vmatpush1.msra.mxu0 0.0
        %3730 = vmatprep.subr.mxu0 0.0
        %3731 = vmatpush1.msra.mxu0 0.0
        %3732 = vmatprep.subr.mxu0 0.0
        %3733 = vmatpush1.msra.mxu0 0.0
        %3734 = vmatprep.subr.mxu0 0.0
        %3735 = vmatpush1.msra.mxu0 0.0
        %3736 = vmatprep.subr.mxu0 0.0
        %3737 = vmatpush1.msra.mxu0 0.0
        %3738 = vmatprep.subr.mxu0 0.0
        %3739 = vmatpush1.msra.mxu0 0.0
        %3740 = vmatprep.subr.mxu0 0.0
        %3741 = vmatpush1.msra.mxu0 0.0
        %3742 = vmatprep.subr.mxu0 0.0
        %3743 = vmatpush1.msra.mxu0 0.0
        %3744 = vmatprep.subr.mxu0 0.0
        %3745 = vmatpush1.msra.mxu0 0.0
        %3746 = vmatprep.subr.mxu0 0.0
        %3747 = vmatpush1.msra.mxu0 0.0
        %3748 = vmatprep.subr.mxu0 0.0
        %3749 = vmatpush1.msra.mxu0 0.0
        %3750 = vmatprep.subr.mxu0 0.0
        %3751 = vmatpush1.msra.mxu0 0.0
        %3752 = vmatprep.subr.mxu0 0.0
        %3753 = vmatpush1.msra.mxu0 0.0
        %3754 = vmatprep.subr.mxu0 0.0
        %3755 = vmatpush1.msra.mxu0 0.0
        %3756 = vmatprep.mubr.f32.mxu0 0.0
        %3757 = vmatmul.mubr.f32.gmra.mrb[0].mxu0 %v3690
        %v3758 = vpop.f32.mrb[0].mxu0
        %v3759 = vadd.f32 0.0, %v3758
        %v3760 = vpop.f32.mrb[0].mxu0
        %3761 = vdwg.mxu0
        %v3762 = vmul.f32 %v3759, %v777
        %3764 = vrot.lane.b32.xlu0 %v3759, 96
        %v3765 = vpop.permute.xlu0 %3764
        %v3767 = vsel %vm666, %v3762, 0
        %v3769 = vsel %vm666, %v3765, 0
        %3771 = vmatprep.subr.mxu0 0.0
        %3772 = vmatpush1.xpose.msra.mxu0 %v3769
        %3773 = vmatprep.subr.mxu0 0.0
        %3774 = vmatpush1.xpose.msra.mxu0 0.0
        %3775 = vmatprep.subr.mxu0 0.0
        %3776 = vmatpush1.xpose.msra.mxu0 0.0
        %3777 = vmatprep.subr.mxu0 0.0
        %3778 = vmatpush1.xpose.msra.mxu0 0.0
        %3779 = vmatprep.subr.mxu0 0.0
        %3780 = vmatpush1.xpose.msra.mxu0 0.0
        %3781 = vmatprep.subr.mxu0 0.0
        %3782 = vmatpush1.xpose.msra.mxu0 0.0
        %3783 = vmatprep.subr.mxu0 0.0
        %3784 = vmatpush1.xpose.msra.mxu0 0.0
        %3785 = vmatprep.subr.mxu0 0.0
        %3786 = vmatpush1.xpose.msra.mxu0 0.0
        %3787 = vmatprep.subr.mxu0 0.0
        %3788 = vmatpush1.xpose.msra.mxu0 0.0
        %3789 = vmatprep.subr.mxu0 0.0
        %3790 = vmatpush1.xpose.msra.mxu0 0.0
        %3791 = vmatprep.subr.mxu0 0.0
        %3792 = vmatpush1.xpose.msra.mxu0 0.0
        %3793 = vmatprep.subr.mxu0 0.0
        %3794 = vmatpush1.xpose.msra.mxu0 0.0
        %3795 = vmatprep.subr.mxu0 0.0
        %3796 = vmatpush1.xpose.msra.mxu0 0.0
        %3797 = vmatprep.subr.mxu0 0.0
        %3798 = vmatpush1.xpose.msra.mxu0 0.0
        %3799 = vmatprep.subr.mxu0 0.0
        %3800 = vmatpush1.xpose.msra.mxu0 0.0
        %3801 = vmatprep.subr.mxu0 0.0
        %3802 = vmatpush1.xpose.msra.mxu0 0.0
        %3803 = vmatprep.subr.mxu0 0.0
        %3804 = vmatpush1.xpose.msra.mxu0 0.0
        %3805 = vmatprep.subr.mxu0 0.0
        %3806 = vmatpush1.xpose.msra.mxu0 0.0
        %3807 = vmatprep.subr.mxu0 0.0
        %3808 = vmatpush1.xpose.msra.mxu0 0.0
        %3809 = vmatprep.subr.mxu0 0.0
        %3810 = vmatpush1.xpose.msra.mxu0 0.0
        %3811 = vmatprep.subr.mxu0 0.0
        %3812 = vmatpush1.xpose.msra.mxu0 0.0
        %3813 = vmatprep.subr.mxu0 0.0
        %3814 = vmatpush1.xpose.msra.mxu0 0.0
        %3815 = vmatprep.subr.mxu0 0.0
        %3816 = vmatpush1.xpose.msra.mxu0 0.0
        %3817 = vmatprep.subr.mxu0 0.0
        %3818 = vmatpush1.xpose.msra.mxu0 0.0
        %3819 = vmatprep.subr.mxu0 0.0
        %3820 = vmatpush1.xpose.msra.mxu0 0.0
        %3821 = vmatprep.subr.mxu0 0.0
        %3822 = vmatpush1.xpose.msra.mxu0 0.0
        %3823 = vmatprep.subr.mxu0 0.0
        %3824 = vmatpush1.xpose.msra.mxu0 0.0
        %3825 = vmatprep.subr.mxu0 0.0
        %3826 = vmatpush1.xpose.msra.mxu0 0.0
        %3827 = vmatprep.subr.mxu0 0.0
        %3828 = vmatpush1.xpose.msra.mxu0 0.0
        %3829 = vmatprep.subr.mxu0 0.0
        %3830 = vmatpush1.xpose.msra.mxu0 0.0
        %3831 = vmatprep.subr.mxu0 0.0
        %3832 = vmatpush1.xpose.msra.mxu0 0.0
        %3833 = vmatprep.subr.mxu0 0.0
        %3834 = vmatpush1.xpose.msra.mxu0 0.0
        %3835 = vmatprep.mubr.f32.mxu0 0.0
        %3836 = vmatmul.mubr.f32.gmra.mrb[0].mxu0 %v3767
        %v3837 = vpop.f32.mrb[0].mxu0
        %v3838 = vadd.f32 %v663, %v3837
        %v3839 = vpop.f32.mrb[0].mxu0
        %3840 = vdwg.mxu0
        %v3841 = vsel %vm858, %v3838, -inf
        %3842 = vmax.xlane.f32.xlu0 %v3841
        %v3843 = vpop.xlane.xlu0 %3842
        %v3844 = vsub.f32 %v3838, %v3843
        %v3845 = vmul.f32 %v3844, 1.442695
        %v3846 = vpow.pop %v3845
        %v3847 = vsel %vm858, %v3846, 0.0
        %3848 = vadd.xlane.f32.xlu0 %v3847
        %v3849 = vpop.xlane.xlu0 %3848
        %v3850 = vrcp.pop %v3849
        %v3851 = vmul.f32 %v3846, %v3850
        %v3852 = vmul.f32 %v3759, %v871
        %v3853 = vmul.f32 %v3759, %v880
        %v3855 = vsel %vm666, %v3853, 0
        %3857 = vmatprep.subr.mxu0 0.0
        %3858 = vmatpush1.xpose.msra.mxu0 %v3769
        %3859 = vmatprep.subr.mxu0 0.0
        %3860 = vmatpush1.xpose.msra.mxu0 0.0
        %3861 = vmatprep.subr.mxu0 0.0
        %3862 = vmatpush1.xpose.msra.mxu0 0.0
        %3863 = vmatprep.subr.mxu0 0.0
        %3864 = vmatpush1.xpose.msra.mxu0 0.0
        %3865 = vmatprep.subr.mxu0 0.0
        %3866 = vmatpush1.xpose.msra.mxu0 0.0
        %3867 = vmatprep.subr.mxu0 0.0
        %3868 = vmatpush1.xpose.msra.mxu0 0.0
        %3869 = vmatprep.subr.mxu0 0.0
        %3870 = vmatpush1.xpose.msra.mxu0 0.0
        %3871 = vmatprep.subr.mxu0 0.0
        %3872 = vmatpush1.xpose.msra.mxu0 0.0
        %3873 = vmatprep.subr.mxu0 0.0
        %3874 = vmatpush1.xpose.msra.mxu0 0.0
        %3875 = vmatprep.subr.mxu0 0.0
        %3876 = vmatpush1.xpose.msra.mxu0 0.0
        %3877 = vmatprep.subr.mxu0 0.0
        %3878 = vmatpush1.xpose.msra.mxu0 0.0
        %3879 = vmatprep.subr.mxu0 0.0
        %3880 = vmatpush1.xpose.msra.mxu0 0.0
        %3881 = vmatprep.subr.mxu0 0.0
        %3882 = vmatpush1.xpose.msra.mxu0 0.0
        %3883 = vmatprep.subr.mxu0 0.0
        %3884 = vmatpush1.xpose.msra.mxu0 0.0
        %3885 = vmatprep.subr.mxu0 0.0
        %3886 = vmatpush1.xpose.msra.mxu0 0.0
        %3887 = vmatprep.subr.mxu0 0.0
        %3888 = vmatpush1.xpose.msra.mxu0 0.0
        %3889 = vmatprep.subr.mxu0 0.0
        %3890 = vmatpush1.xpose.msra.mxu0 0.0
        %3891 = vmatprep.subr.mxu0 0.0
        %3892 = vmatpush1.xpose.msra.mxu0 0.0
        %3893 = vmatprep.subr.mxu0 0.0
        %3894 = vmatpush1.xpose.msra.mxu0 0.0
        %3895 = vmatprep.subr.mxu0 0.0
        %3896 = vmatpush1.xpose.msra.mxu0 0.0
        %3897 = vmatprep.subr.mxu0 0.0
        %3898 = vmatpush1.xpose.msra.mxu0 0.0
        %3899 = vmatprep.subr.mxu0 0.0
        %3900 = vmatpush1.xpose.msra.mxu0 0.0
        %3901 = vmatprep.subr.mxu0 0.0
        %3902 = vmatpush1.xpose.msra.mxu0 0.0
        %3903 = vmatprep.subr.mxu0 0.0
        %3904 = vmatpush1.xpose.msra.mxu0 0.0
        %3905 = vmatprep.subr.mxu0 0.0
        %3906 = vmatpush1.xpose.msra.mxu0 0.0
        %3907 = vmatprep.subr.mxu0 0.0
        %3908 = vmatpush1.xpose.msra.mxu0 0.0
        %3909 = vmatprep.subr.mxu0 0.0
        %3910 = vmatpush1.xpose.msra.mxu0 0.0
        %3911 = vmatprep.subr.mxu0 0.0
        %3912 = vmatpush1.xpose.msra.mxu0 0.0
        %3913 = vmatprep.subr.mxu0 0.0
        %3914 = vmatpush1.xpose.msra.mxu0 0.0
        %3915 = vmatprep.subr.mxu0 0.0
        %3916 = vmatpush1.xpose.msra.mxu0 0.0
        %3917 = vmatprep.subr.mxu0 0.0
        %3918 = vmatpush1.xpose.msra.mxu0 0.0
        %3919 = vmatprep.subr.mxu0 0.0
        %3920 = vmatpush1.xpose.msra.mxu0 0.0
        %3921 = vmatprep.mubr.f32.mxu0 0.0
        %3922 = vmatmul.mubr.f32.gmra.mrb[0].mxu0 %v3855
        %v3923 = vpop.f32.mrb[0].mxu0
        %v3924 = vadd.f32 %v663, %v3923
        %v3925 = vpop.f32.mrb[0].mxu0
        %3926 = vdwg.mxu0
        %v3927 = vsel %vm858, %v3924, -inf
        %3928 = vmax.xlane.f32.xlu0 %v3927
        %v3929 = vpop.xlane.xlu0 %3928
        %v3930 = vsub.f32 %v3924, %v3929
        %v3931 = vmul.f32 %v3930, 1.442695
        %v3932 = vpow.pop %v3931
        %v3933 = vsel %vm858, %v3932, 0.0
        %3934 = vadd.xlane.f32.xlu0 %v3933
        %v3935 = vpop.xlane.xlu0 %3934
        %v3936 = vrcp.pop %v3935
        %v3937 = vmul.f32 %v3932, %v3936
        %v3938 = vmul.f32 %v3759, %v968
        %3940 = vrot.lane.b32.xlu0 %v3938, 64
        %v3941 = vpop.permute.xlu0 %3940
        %v3944 = vsel %vm858, %v3937, 0
        %3946 = vmatprep.subr.mxu0 0.0
        %3947 = vmatpush1.msra.mxu0 %v3941
        %3948 = vmatprep.subr.mxu0 0.0
        %3949 = vmatpush1.msra.mxu0 0.0
        %3950 = vmatprep.subr.mxu0 0.0
        %3951 = vmatpush1.msra.mxu0 0.0
        %3952 = vmatprep.subr.mxu0 0.0
        %3953 = vmatpush1.msra.mxu0 0.0
        %3954 = vmatprep.subr.mxu0 0.0
        %3955 = vmatpush1.msra.mxu0 0.0
        %3956 = vmatprep.subr.mxu0 0.0
        %3957 = vmatpush1.msra.mxu0 0.0
        %3958 = vmatprep.subr.mxu0 0.0
        %3959 = vmatpush1.msra.mxu0 0.0
        %3960 = vmatprep.subr.mxu0 0.0
        %3961 = vmatpush1.msra.mxu0 0.0
        %3962 = vmatprep.subr.mxu0 0.0
        %3963 = vmatpush1.msra.mxu0 0.0
        %3964 = vmatprep.subr.mxu0 0.0
        %3965 = vmatpush1.msra.mxu0 0.0
        %3966 = vmatprep.subr.mxu0 0.0
        %3967 = vmatpush1.msra.mxu0 0.0
        %3968 = vmatprep.subr.mxu0 0.0
        %3969 = vmatpush1.msra.mxu0 0.0
        %3970 = vmatprep.subr.mxu0 0.0
        %3971 = vmatpush1.msra.mxu0 0.0
        %3972 = vmatprep.subr.mxu0 0.0
        %3973 = vmatpush1.msra.mxu0 0.0
        %3974 = vmatprep.subr.mxu0 0.0
        %3975 = vmatpush1.msra.mxu0 0.0
        %3976 = vmatprep.subr.mxu0 0.0
        %3977 = vmatpush1.msra.mxu0 0.0
        %3978 = vmatprep.subr.mxu0 0.0
        %3979 = vmatpush1.msra.mxu0 0.0
        %3980 = vmatprep.subr.mxu0 0.0
        %3981 = vmatpush1.msra.mxu0 0.0
        %3982 = vmatprep.subr.mxu0 0.0
        %3983 = vmatpush1.msra.mxu0 0.0
        %3984 = vmatprep.subr.mxu0 0.0
        %3985 = vmatpush1.msra.mxu0 0.0
        %3986 = vmatprep.subr.mxu0 0.0
        %3987 = vmatpush1.msra.mxu0 0.0
        %3988 = vmatprep.subr.mxu0 0.0
        %3989 = vmatpush1.msra.mxu0 0.0
        %3990 = vmatprep.subr.mxu0 0.0
        %3991 = vmatpush1.msra.mxu0 0.0
        %3992 = vmatprep.subr.mxu0 0.0
        %3993 = vmatpush1.msra.mxu0 0.0
        %3994 = vmatprep.subr.mxu0 0.0
        %3995 = vmatpush1.msra.mxu0 0.0
        %3996 = vmatprep.subr.mxu0 0.0
        %3997 = vmatpush1.msra.mxu0 0.0
        %3998 = vmatprep.subr.mxu0 0.0
        %3999 = vmatpush1.msra.mxu0 0.0
        %4000 = vmatprep.subr.mxu0 0.0
        %4001 = vmatpush1.msra.mxu0 0.0
        %4002 = vmatprep.subr.mxu0 0.0
        %4003 = vmatpush1.msra.mxu0 0.0
        %4004 = vmatprep.subr.mxu0 0.0
        %4005 = vmatpush1.msra.mxu0 0.0
        %4006 = vmatprep.subr.mxu0 0.0
        %4007 = vmatpush1.msra.mxu0 0.0
        %4008 = vmatprep.subr.mxu0 0.0
        %4009 = vmatpush1.msra.mxu0 0.0
        %4010 = vmatprep.mubr.f32.mxu0 0.0
        %4011 = vmatmul.mubr.f32.gmra.mrb[0].mxu0 %v3944
        %v4012 = vpop.f32.mrb[0].mxu0
        %v4013 = vadd.f32 0.0, %v4012
        %v4014 = vpop.f32.mrb[0].mxu0
        %4015 = vdwg.mxu0
        %4017 = vrot.lane.b32.xlu0 %v3852, 64
        %v4018 = vpop.permute.xlu0 %4017
        %v4021 = vsel %vm858, %v3851, 0
        %4023 = vmatprep.subr.mxu0 0.0
        %4024 = vmatpush1.msra.mxu0 %v4018
        %4025 = vmatprep.subr.mxu0 0.0
        %4026 = vmatpush1.msra.mxu0 0.0
        %4027 = vmatprep.subr.mxu0 0.0
        %4028 = vmatpush1.msra.mxu0 0.0
        %4029 = vmatprep.subr.mxu0 0.0
        %4030 = vmatpush1.msra.mxu0 0.0
        %4031 = vmatprep.subr.mxu0 0.0
        %4032 = vmatpush1.msra.mxu0 0.0
        %4033 = vmatprep.subr.mxu0 0.0
        %4034 = vmatpush1.msra.mxu0 0.0
        %4035 = vmatprep.subr.mxu0 0.0
        %4036 = vmatpush1.msra.mxu0 0.0
        %4037 = vmatprep.subr.mxu0 0.0
        %4038 = vmatpush1.msra.mxu0 0.0
        %4039 = vmatprep.subr.mxu0 0.0
        %4040 = vmatpush1.msra.mxu0 0.0
        %4041 = vmatprep.subr.mxu0 0.0
        %4042 = vmatpush1.msra.mxu0 0.0
        %4043 = vmatprep.subr.mxu0 0.0
        %4044 = vmatpush1.msra.mxu0 0.0
        %4045 = vmatprep.subr.mxu0 0.0
        %4046 = vmatpush1.msra.mxu0 0.0
        %4047 = vmatprep.subr.mxu0 0.0
        %4048 = vmatpush1.msra.mxu0 0.0
        %4049 = vmatprep.subr.mxu0 0.0
        %4050 = vmatpush1.msra.mxu0 0.0
        %4051 = vmatprep.subr.mxu0 0.0
        %4052 = vmatpush1.msra.mxu0 0.0
        %4053 = vmatprep.subr.mxu0 0.0
        %4054 = vmatpush1.msra.mxu0 0.0
        %4055 = vmatprep.subr.mxu0 0.0
        %4056 = vmatpush1.msra.mxu0 0.0
        %4057 = vmatprep.subr.mxu0 0.0
        %4058 = vmatpush1.msra.mxu0 0.0
        %4059 = vmatprep.subr.mxu0 0.0
        %4060 = vmatpush1.msra.mxu0 0.0
        %4061 = vmatprep.subr.mxu0 0.0
        %4062 = vmatpush1.msra.mxu0 0.0
        %4063 = vmatprep.subr.mxu0 0.0
        %4064 = vmatpush1.msra.mxu0 0.0
        %4065 = vmatprep.subr.mxu0 0.0
        %4066 = vmatpush1.msra.mxu0 0.0
        %4067 = vmatprep.subr.mxu0 0.0
        %4068 = vmatpush1.msra.mxu0 0.0
        %4069 = vmatprep.subr.mxu0 0.0
        %4070 = vmatpush1.msra.mxu0 0.0
        %4071 = vmatprep.subr.mxu0 0.0
        %4072 = vmatpush1.msra.mxu0 0.0
        %4073 = vmatprep.subr.mxu0 0.0
        %4074 = vmatpush1.msra.mxu0 0.0
        %4075 = vmatprep.subr.mxu0 0.0
        %4076 = vmatpush1.msra.mxu0 0.0
        %4077 = vmatprep.subr.mxu0 0.0
        %4078 = vmatpush1.msra.mxu0 0.0
        %4079 = vmatprep.subr.mxu0 0.0
        %4080 = vmatpush1.msra.mxu0 0.0
        %4081 = vmatprep.subr.mxu0 0.0
        %4082 = vmatpush1.msra.mxu0 0.0
        %4083 = vmatprep.subr.mxu0 0.0
        %4084 = vmatpush1.msra.mxu0 0.0
        %4085 = vmatprep.subr.mxu0 0.0
        %4086 = vmatpush1.msra.mxu0 0.0
        %4087 = vmatprep.mubr.f32.mxu0 0.0
        %4088 = vmatmul.mubr.f32.gmra.mrb[0].mxu0 %v4021
        %v4089 = vpop.f32.mrb[0].mxu0
        %v4090 = vadd.f32 %v4013, %v4089
        %v4091 = vpop.f32.mrb[0].mxu0
        %4092 = vdwg.mxu0
        %v4093 = vmul.f32 %v3759, %v1131
        %v4095 = vsel %vm666, %v4093, 0
        %4097 = vmatprep.subr.mxu0 0.0
        %4098 = vmatpush1.xpose.msra.mxu0 %v3769
        %4099 = vmatprep.subr.mxu0 0.0
        %4100 = vmatpush1.xpose.msra.mxu0 0.0
        %4101 = vmatprep.subr.mxu0 0.0
        %4102 = vmatpush1.xpose.msra.mxu0 0.0
        %4103 = vmatprep.subr.mxu0 0.0
        %4104 = vmatpush1.xpose.msra.mxu0 0.0
        %4105 = vmatprep.subr.mxu0 0.0
        %4106 = vmatpush1.xpose.msra.mxu0 0.0
        %4107 = vmatprep.subr.mxu0 0.0
        %4108 = vmatpush1.xpose.msra.mxu0 0.0
        %4109 = vmatprep.subr.mxu0 0.0
        %4110 = vmatpush1.xpose.msra.mxu0 0.0
        %4111 = vmatprep.subr.mxu0 0.0
        %4112 = vmatpush1.xpose.msra.mxu0 0.0
        %4113 = vmatprep.subr.mxu0 0.0
        %4114 = vmatpush1.xpose.msra.mxu0 0.0
        %4115 = vmatprep.subr.mxu0 0.0
        %4116 = vmatpush1.xpose.msra.mxu0 0.0
        %4117 = vmatprep.subr.mxu0 0.0
        %4118 = vmatpush1.xpose.msra.mxu0 0.0
        %4119 = vmatprep.subr.mxu0 0.0
        %4120 = vmatpush1.xpose.msra.mxu0 0.0
        %4121 = vmatprep.subr.mxu0 0.0
        %4122 = vmatpush1.xpose.msra.mxu0 0.0
        %4123 = vmatprep.subr.mxu0 0.0
        %4124 = vmatpush1.xpose.msra.mxu0 0.0
        %4125 = vmatprep.subr.mxu0 0.0
        %4126 = vmatpush1.xpose.msra.mxu0 0.0
        %4127 = vmatprep.subr.mxu0 0.0
        %4128 = vmatpush1.xpose.msra.mxu0 0.0
        %4129 = vmatprep.subr.mxu0 0.0
        %4130 = vmatpush1.xpose.msra.mxu0 0.0
        %4131 = vmatprep.subr.mxu0 0.0
        %4132 = vmatpush1.xpose.msra.mxu0 0.0
        %4133 = vmatprep.subr.mxu0 0.0
        %4134 = vmatpush1.xpose.msra.mxu0 0.0
        %4135 = vmatprep.subr.mxu0 0.0
        %4136 = vmatpush1.xpose.msra.mxu0 0.0
        %4137 = vmatprep.subr.mxu0 0.0
        %4138 = vmatpush1.xpose.msra.mxu0 0.0
        %4139 = vmatprep.subr.mxu0 0.0
        %4140 = vmatpush1.xpose.msra.mxu0 0.0
        %4141 = vmatprep.subr.mxu0 0.0
        %4142 = vmatpush1.xpose.msra.mxu0 0.0
        %4143 = vmatprep.subr.mxu0 0.0
        %4144 = vmatpush1.xpose.msra.mxu0 0.0
        %4145 = vmatprep.subr.mxu0 0.0
        %4146 = vmatpush1.xpose.msra.mxu0 0.0
        %4147 = vmatprep.subr.mxu0 0.0
        %4148 = vmatpush1.xpose.msra.mxu0 0.0
        %4149 = vmatprep.subr.mxu0 0.0
        %4150 = vmatpush1.xpose.msra.mxu0 0.0
        %4151 = vmatprep.subr.mxu0 0.0
        %4152 = vmatpush1.xpose.msra.mxu0 0.0
        %4153 = vmatprep.subr.mxu0 0.0
        %4154 = vmatpush1.xpose.msra.mxu0 0.0
        %4155 = vmatprep.subr.mxu0 0.0
        %4156 = vmatpush1.xpose.msra.mxu0 0.0
        %4157 = vmatprep.subr.mxu0 0.0
        %4158 = vmatpush1.xpose.msra.mxu0 0.0
        %4159 = vmatprep.subr.mxu0 0.0
        %4160 = vmatpush1.xpose.msra.mxu0 0.0
        %4161 = vmatprep.mubr.f32.mxu0 0.0
        %4162 = vmatmul.mubr.f32.gmra.mrb[0].mxu0 %v4095
        %v4163 = vpop.f32.mrb[0].mxu0
        %v4164 = vadd.f32 %v663, %v4163
        %v4165 = vpop.f32.mrb[0].mxu0
        %4166 = vdwg.mxu0
        %v4167 = vsel %vm858, %v4164, -inf
        %4168 = vmax.xlane.f32.xlu0 %v4167
        %v4169 = vpop.xlane.xlu0 %4168
        %v4170 = vsub.f32 %v4164, %v4169
        %v4171 = vmul.f32 %v4170, 1.442695
        %v4172 = vpow.pop %v4171
        %v4173 = vsel %vm858, %v4172, 0.0
        %4174 = vadd.xlane.f32.xlu0 %v4173
        %v4175 = vpop.xlane.xlu0 %4174
        %v4176 = vrcp.pop %v4175
        %v4177 = vmul.f32 %v4172, %v4176
        %v4178 = vmul.f32 %v3759, %v1219
        %4180 = vrot.lane.b32.xlu0 %v4178, 64
        %v4181 = vpop.permute.xlu0 %4180
        %v4184 = vsel %vm858, %v4177, 0
        %4186 = vmatprep.subr.mxu0 0.0
        %4187 = vmatpush1.msra.mxu0 %v4181
        %4188 = vmatprep.subr.mxu0 0.0
        %4189 = vmatpush1.msra.mxu0 0.0
        %4190 = vmatprep.subr.mxu0 0.0
        %4191 = vmatpush1.msra.mxu0 0.0
        %4192 = vmatprep.subr.mxu0 0.0
        %4193 = vmatpush1.msra.mxu0 0.0
        %4194 = vmatprep.subr.mxu0 0.0
        %4195 = vmatpush1.msra.mxu0 0.0
        %4196 = vmatprep.subr.mxu0 0.0
        %4197 = vmatpush1.msra.mxu0 0.0
        %4198 = vmatprep.subr.mxu0 0.0
        %4199 = vmatpush1.msra.mxu0 0.0
        %4200 = vmatprep.subr.mxu0 0.0
        %4201 = vmatpush1.msra.mxu0 0.0
        %4202 = vmatprep.subr.mxu0 0.0
        %4203 = vmatpush1.msra.mxu0 0.0
        %4204 = vmatprep.subr.mxu0 0.0
        %4205 = vmatpush1.msra.mxu0 0.0
        %4206 = vmatprep.subr.mxu0 0.0
        %4207 = vmatpush1.msra.mxu0 0.0
        %4208 = vmatprep.subr.mxu0 0.0
        %4209 = vmatpush1.msra.mxu0 0.0
        %4210 = vmatprep.subr.mxu0 0.0
        %4211 = vmatpush1.msra.mxu0 0.0
        %4212 = vmatprep.subr.mxu0 0.0
        %4213 = vmatpush1.msra.mxu0 0.0
        %4214 = vmatprep.subr.mxu0 0.0
        %4215 = vmatpush1.msra.mxu0 0.0
        %4216 = vmatprep.subr.mxu0 0.0
        %4217 = vmatpush1.msra.mxu0 0.0
        %4218 = vmatprep.subr.mxu0 0.0
        %4219 = vmatpush1.msra.mxu0 0.0
        %4220 = vmatprep.subr.mxu0 0.0
        %4221 = vmatpush1.msra.mxu0 0.0
        %4222 = vmatprep.subr.mxu0 0.0
        %4223 = vmatpush1.msra.mxu0 0.0
        %4224 = vmatprep.subr.mxu0 0.0
        %4225 = vmatpush1.msra.mxu0 0.0
        %4226 = vmatprep.subr.mxu0 0.0
        %4227 = vmatpush1.msra.mxu0 0.0
        %4228 = vmatprep.subr.mxu0 0.0
        %4229 = vmatpush1.msra.mxu0 0.0
        %4230 = vmatprep.subr.mxu0 0.0
        %4231 = vmatpush1.msra.mxu0 0.0
        %4232 = vmatprep.subr.mxu0 0.0
        %4233 = vmatpush1.msra.mxu0 0.0
        %4234 = vmatprep.subr.mxu0 0.0
        %4235 = vmatpush1.msra.mxu0 0.0
        %4236 = vmatprep.subr.mxu0 0.0
        %4237 = vmatpush1.msra.mxu0 0.0
        %4238 = vmatprep.subr.mxu0 0.0
        %4239 = vmatpush1.msra.mxu0 0.0
        %4240 = vmatprep.subr.mxu0 0.0
        %4241 = vmatpush1.msra.mxu0 0.0
        %4242 = vmatprep.subr.mxu0 0.0
        %4243 = vmatpush1.msra.mxu0 0.0
        %4244 = vmatprep.subr.mxu0 0.0
        %4245 = vmatpush1.msra.mxu0 0.0
        %4246 = vmatprep.subr.mxu0 0.0
        %4247 = vmatpush1.msra.mxu0 0.0
        %4248 = vmatprep.subr.mxu0 0.0
        %4249 = vmatpush1.msra.mxu0 0.0
        %4250 = vmatprep.mubr.f32.mxu0 0.0
        %4251 = vmatmul.mubr.f32.gmra.mrb[0].mxu0 %v4184
        %v4252 = vpop.f32.mrb[0].mxu0
        %v4253 = vadd.f32 0.0, %v4252
        %v4254 = vpop.f32.mrb[0].mxu0
        %4255 = vdwg.mxu0
        %v4256 = vadd.f32 %v4090, %v4253
        %v4257 = vmul.f32 %v3759, %v1306
        %v4259 = vsel %vm666, %v4257, 0
        %4261 = vmatprep.subr.mxu0 0.0
        %4262 = vmatpush1.xpose.msra.mxu0 %v3769
        %4263 = vmatprep.subr.mxu0 0.0
        %4264 = vmatpush1.xpose.msra.mxu0 0.0
        %4265 = vmatprep.subr.mxu0 0.0
        %4266 = vmatpush1.xpose.msra.mxu0 0.0
        %4267 = vmatprep.subr.mxu0 0.0
        %4268 = vmatpush1.xpose.msra.mxu0 0.0
        %4269 = vmatprep.subr.mxu0 0.0
        %4270 = vmatpush1.xpose.msra.mxu0 0.0
        %4271 = vmatprep.subr.mxu0 0.0
        %4272 = vmatpush1.xpose.msra.mxu0 0.0
        %4273 = vmatprep.subr.mxu0 0.0
        %4274 = vmatpush1.xpose.msra.mxu0 0.0
        %4275 = vmatprep.subr.mxu0 0.0
        %4276 = vmatpush1.xpose.msra.mxu0 0.0
        %4277 = vmatprep.subr.mxu0 0.0
        %4278 = vmatpush1.xpose.msra.mxu0 0.0
        %4279 = vmatprep.subr.mxu0 0.0
        %4280 = vmatpush1.xpose.msra.mxu0 0.0
        %4281 = vmatprep.subr.mxu0 0.0
        %4282 = vmatpush1.xpose.msra.mxu0 0.0
        %4283 = vmatprep.subr.mxu0 0.0
        %4284 = vmatpush1.xpose.msra.mxu0 0.0
        %4285 = vmatprep.subr.mxu0 0.0
        %4286 = vmatpush1.xpose.msra.mxu0 0.0
        %4287 = vmatprep.subr.mxu0 0.0
        %4288 = vmatpush1.xpose.msra.mxu0 0.0
        %4289 = vmatprep.subr.mxu0 0.0
        %4290 = vmatpush1.xpose.msra.mxu0 0.0
        %4291 = vmatprep.subr.mxu0 0.0
        %4292 = vmatpush1.xpose.msra.mxu0 0.0
        %4293 = vmatprep.subr.mxu0 0.0
        %4294 = vmatpush1.xpose.msra.mxu0 0.0
        %4295 = vmatprep.subr.mxu0 0.0
        %4296 = vmatpush1.xpose.msra.mxu0 0.0
        %4297 = vmatprep.subr.mxu0 0.0
        %4298 = vmatpush1.xpose.msra.mxu0 0.0
        %4299 = vmatprep.subr.mxu0 0.0
        %4300 = vmatpush1.xpose.msra.mxu0 0.0
        %4301 = vmatprep.subr.mxu0 0.0
        %4302 = vmatpush1.xpose.msra.mxu0 0.0
        %4303 = vmatprep.subr.mxu0 0.0
        %4304 = vmatpush1.xpose.msra.mxu0 0.0
        %4305 = vmatprep.subr.mxu0 0.0
        %4306 = vmatpush1.xpose.msra.mxu0 0.0
        %4307 = vmatprep.subr.mxu0 0.0
        %4308 = vmatpush1.xpose.msra.mxu0 0.0
        %4309 = vmatprep.subr.mxu0 0.0
        %4310 = vmatpush1.xpose.msra.mxu0 0.0
        %4311 = vmatprep.subr.mxu0 0.0
        %4312 = vmatpush1.xpose.msra.mxu0 0.0
        %4313 = vmatprep.subr.mxu0 0.0
        %4314 = vmatpush1.xpose.msra.mxu0 0.0
        %4315 = vmatprep.subr.mxu0 0.0
        %4316 = vmatpush1.xpose.msra.mxu0 0.0
        %4317 = vmatprep.subr.mxu0 0.0
        %4318 = vmatpush1.xpose.msra.mxu0 0.0
        %4319 = vmatprep.subr.mxu0 0.0
        %4320 = vmatpush1.xpose.msra.mxu0 0.0
        %4321 = vmatprep.subr.mxu0 0.0
        %4322 = vmatpush1.xpose.msra.mxu0 0.0
        %4323 = vmatprep.subr.mxu0 0.0
        %4324 = vmatpush1.xpose.msra.mxu0 0.0
        %4325 = vmatprep.mubr.f32.mxu0 0.0
        %4326 = vmatmul.mubr.f32.gmra.mrb[0].mxu0 %v4259
        %v4327 = vpop.f32.mrb[0].mxu0
        %v4328 = vadd.f32 %v663, %v4327
        %v4329 = vpop.f32.mrb[0].mxu0
        %4330 = vdwg.mxu0
        %v4331 = vsel %vm858, %v4328, -inf
        %4332 = vmax.xlane.f32.xlu0 %v4331
        %v4333 = vpop.xlane.xlu0 %4332
        %v4334 = vsub.f32 %v4328, %v4333
        %v4335 = vmul.f32 %v4334, 1.442695
        %v4336 = vpow.pop %v4335
        %v4337 = vsel %vm858, %v4336, 0.0
        %4338 = vadd.xlane.f32.xlu0 %v4337
        %v4339 = vpop.xlane.xlu0 %4338
        %v4340 = vrcp.pop %v4339
        %v4341 = vmul.f32 %v4336, %v4340
        %v4342 = vmul.f32 %v3759, %v1394
        %4344 = vrot.lane.b32.xlu0 %v4342, 64
        %v4345 = vpop.permute.xlu0 %4344
        %v4348 = vsel %vm858, %v4341, 0
        %4350 = vmatprep.subr.mxu0 0.0
        %4351 = vmatpush1.msra.mxu0 %v4345
        %4352 = vmatprep.subr.mxu0 0.0
        %4353 = vmatpush1.msra.mxu0 0.0
        %4354 = vmatprep.subr.mxu0 0.0
        %4355 = vmatpush1.msra.mxu0 0.0
        %4356 = vmatprep.subr.mxu0 0.0
        %4357 = vmatpush1.msra.mxu0 0.0
        %4358 = vmatprep.subr.mxu0 0.0
        %4359 = vmatpush1.msra.mxu0 0.0
        %4360 = vmatprep.subr.mxu0 0.0
        %4361 = vmatpush1.msra.mxu0 0.0
        %4362 = vmatprep.subr.mxu0 0.0
        %4363 = vmatpush1.msra.mxu0 0.0
        %4364 = vmatprep.subr.mxu0 0.0
        %4365 = vmatpush1.msra.mxu0 0.0
        %4366 = vmatprep.subr.mxu0 0.0
        %4367 = vmatpush1.msra.mxu0 0.0
        %4368 = vmatprep.subr.mxu0 0.0
        %4369 = vmatpush1.msra.mxu0 0.0
        %4370 = vmatprep.subr.mxu0 0.0
        %4371 = vmatpush1.msra.mxu0 0.0
        %4372 = vmatprep.subr.mxu0 0.0
        %4373 = vmatpush1.msra.mxu0 0.0
        %4374 = vmatprep.subr.mxu0 0.0
        %4375 = vmatpush1.msra.mxu0 0.0
        %4376 = vmatprep.subr.mxu0 0.0
        %4377 = vmatpush1.msra.mxu0 0.0
        %4378 = vmatprep.subr.mxu0 0.0
        %4379 = vmatpush1.msra.mxu0 0.0
        %4380 = vmatprep.subr.mxu0 0.0
        %4381 = vmatpush1.msra.mxu0 0.0
        %4382 = vmatprep.subr.mxu0 0.0
        %4383 = vmatpush1.msra.mxu0 0.0
        %4384 = vmatprep.subr.mxu0 0.0
        %4385 = vmatpush1.msra.mxu0 0.0
        %4386 = vmatprep.subr.mxu0 0.0
        %4387 = vmatpush1.msra.mxu0 0.0
        %4388 = vmatprep.subr.mxu0 0.0
        %4389 = vmatpush1.msra.mxu0 0.0
        %4390 = vmatprep.subr.mxu0 0.0
        %4391 = vmatpush1.msra.mxu0 0.0
        %4392 = vmatprep.subr.mxu0 0.0
        %4393 = vmatpush1.msra.mxu0 0.0
        %4394 = vmatprep.subr.mxu0 0.0
        %4395 = vmatpush1.msra.mxu0 0.0
        %4396 = vmatprep.subr.mxu0 0.0
        %4397 = vmatpush1.msra.mxu0 0.0
        %4398 = vmatprep.subr.mxu0 0.0
        %4399 = vmatpush1.msra.mxu0 0.0
        %4400 = vmatprep.subr.mxu0 0.0
        %4401 = vmatpush1.msra.mxu0 0.0
        %4402 = vmatprep.subr.mxu0 0.0
        %4403 = vmatpush1.msra.mxu0 0.0
        %4404 = vmatprep.subr.mxu0 0.0
        %4405 = vmatpush1.msra.mxu0 0.0
        %4406 = vmatprep.subr.mxu0 0.0
        %4407 = vmatpush1.msra.mxu0 0.0
        %4408 = vmatprep.subr.mxu0 0.0
        %4409 = vmatpush1.msra.mxu0 0.0
        %4410 = vmatprep.subr.mxu0 0.0
        %4411 = vmatpush1.msra.mxu0 0.0
        %4412 = vmatprep.subr.mxu0 0.0
        %4413 = vmatpush1.msra.mxu0 0.0
        %4414 = vmatprep.mubr.f32.mxu0 0.0
        %4415 = vmatmul.mubr.f32.gmra.mrb[0].mxu0 %v4348
        %v4416 = vpop.f32.mrb[0].mxu0
        %v4417 = vadd.f32 0.0, %v4416
        %v4418 = vpop.f32.mrb[0].mxu0
        %4419 = vdwg.mxu0
        %v4420 = vadd.f32 %v4256, %v4417
        %v4421 = vadd.f32 %v3652, %v4420
        %s4422 = scalar_lea.vmem %s8, 3
        %v4423 = vld [vmem:[%s4422] sm:$0x1]
        %s4424 = scalar_lea.vmem %s9, 3
        %v4425 = vld [vmem:[%s4424] sm:$0x1]
        %v4426 = vsel %vm666, %v4421, 0.0
        %4427 = vadd.xlane.f32.xlu0 %v4426
        %v4428 = vpop.xlane.xlu0 %4427
        %v4429 = vmul.f32 %v4428, %v670
        %v4430 = vsub.f32 %v4421, %v4429
        %v4431 = vmul.f32 %v4430, %v4430
        %v4432 = vsel %vm666, %v4431, 0.0
        %4433 = vadd.xlane.f32.xlu0 %v4432
        %v4434 = vpop.xlane.xlu0 %4433
        %v4435 = vmul.f32 %v4434, %v670
        %v4436 = vadd.f32 %v4435, 1e-05
        %v4437 = vrsqrt.pop %v4436
        %v4438 = vmul.f32 %v4430, %v4437
        %v4440 = vlaneseq
        %v4441 = vshrl.u32 %v4440, 7
        %v4442 = vsub.s32 0, %v4441
        %v4443 = vrot.slane %v4423, %v4442
        %v4445 = vmul.f32 %v4438, %v4443
        %v4447 = vlaneseq
        %v4448 = vshrl.u32 %v4447, 7
        %v4449 = vsub.s32 0, %v4448
        %v4450 = vrot.slane %v4425, %v4449
        %v4452 = vadd.f32 %v4445, %v4450
        %s4453 = scalar_lea.vmem %s10, 96
        %v4454 = vld [vmem:[%s4453] sm:$0xff]
        %v4455 = vld [vmem:[%s4453 + $0x8] sm:$0xff]
        %v4456 = vld [vmem:[%s4453 + $0x10] sm:$0xff]
        %v4457 = vld [vmem:[%s4453 + $0x18] sm:$0xff]
        %s4458 = scalar_lea.vmem %s11, 3
        %v4459 = vld [vmem:[%s4458] sm:$0x1]
        %v4461 = vlaneseq
        %v4462 = vshrl.u32 %v4461, 7
        %v4463 = vsub.s32 0, %v4462
        %v4464 = vrot.slane %v4459, %v4463
        %v4467 = vsel %vm666, %v4452, 0
        %4469 = vmatprep.subr.mxu0 0.0
        %4470 = vmatpush1.msra.mxu0 %v4454
        %4471 = vmatprep.subr.mxu0 0.0
        %4472 = vmatpush1.msra.mxu0 %v4455
        %4473 = vmatprep.subr.mxu0 0.0
        %4474 = vmatpush1.msra.mxu0 %v4456
        %4475 = vmatprep.subr.mxu0 0.0
        %4476 = vmatpush1.msra.mxu0 %v4457
        %4477 = vmatprep.subr.mxu0 0.0
        %4478 = vmatpush1.msra.mxu0 0.0
        %4479 = vmatprep.subr.mxu0 0.0
        %4480 = vmatpush1.msra.mxu0 0.0
        %4481 = vmatprep.subr.mxu0 0.0
        %4482 = vmatpush1.msra.mxu0 0.0
        %4483 = vmatprep.subr.mxu0 0.0
        %4484 = vmatpush1.msra.mxu0 0.0
        %4485 = vmatprep.subr.mxu0 0.0
        %4486 = vmatpush1.msra.mxu0 0.0
        %4487 = vmatprep.subr.mxu0 0.0
        %4488 = vmatpush1.msra.mxu0 0.0
        %4489 = vmatprep.subr.mxu0 0.0
        %4490 = vmatpush1.msra.mxu0 0.0
        %4491 = vmatprep.subr.mxu0 0.0
        %4492 = vmatpush1.msra.mxu0 0.0
        %4493 = vmatprep.subr.mxu0 0.0
        %4494 = vmatpush1.msra.mxu0 0.0
        %4495 = vmatprep.subr.mxu0 0.0
        %4496 = vmatpush1.msra.mxu0 0.0
        %4497 = vmatprep.subr.mxu0 0.0
        %4498 = vmatpush1.msra.mxu0 0.0
        %4499 = vmatprep.subr.mxu0 0.0
        %4500 = vmatpush1.msra.mxu0 0.0
        %4501 = vmatprep.subr.mxu0 0.0
        %4502 = vmatpush1.msra.mxu0 0.0
        %4503 = vmatprep.subr.mxu0 0.0
        %4504 = vmatpush1.msra.mxu0 0.0
        %4505 = vmatprep.subr.mxu0 0.0
        %4506 = vmatpush1.msra.mxu0 0.0
        %4507 = vmatprep.subr.mxu0 0.0
        %4508 = vmatpush1.msra.mxu0 0.0
        %4509 = vmatprep.subr.mxu0 0.0
        %4510 = vmatpush1.msra.mxu0 0.0
        %4511 = vmatprep.subr.mxu0 0.0
        %4512 = vmatpush1.msra.mxu0 0.0
        %4513 = vmatprep.subr.mxu0 0.0
        %4514 = vmatpush1.msra.mxu0 0.0
        %4515 = vmatprep.subr.mxu0 0.0
        %4516 = vmatpush1.msra.mxu0 0.0
        %4517 = vmatprep.subr.mxu0 0.0
        %4518 = vmatpush1.msra.mxu0 0.0
        %4519 = vmatprep.subr.mxu0 0.0
        %4520 = vmatpush1.msra.mxu0 0.0
        %4521 = vmatprep.subr.mxu0 0.0
        %4522 = vmatpush1.msra.mxu0 0.0
        %4523 = vmatprep.subr.mxu0 0.0
        %4524 = vmatpush1.msra.mxu0 0.0
        %4525 = vmatprep.subr.mxu0 0.0
        %4526 = vmatpush1.msra.mxu0 0.0
        %4527 = vmatprep.subr.mxu0 0.0
        %4528 = vmatpush1.msra.mxu0 0.0
        %4529 = vmatprep.subr.mxu0 0.0
        %4530 = vmatpush1.msra.mxu0 0.0
        %4531 = vmatprep.subr.mxu0 0.0
        %4532 = vmatpush1.msra.mxu0 0.0
        %4533 = vmatprep.mubr.f32.mxu0 0.0
        %4534 = vmatmul.mubr.f32.gmra.mrb[0].mxu0 %v4467
        %v4535 = vpop.f32.mrb[0].mxu0
        %v4536 = vadd.f32 %v4464, %v4535
        %v4537 = vpop.f32.mrb[0].mxu0
        %4538 = vdwg.mxu0
        %v4539 = vmax.f32 %v4536, 0.0
        %s4540 = scalar_lea.vmem %s12, 384
        %v4541 = vld [vmem:[%s4540] sm:$0xff]
        %v4542 = vld [vmem:[%s4540 + $0x8] sm:$0xff]
        %v4543 = vld [vmem:[%s4540 + $0x10] sm:$0xff]
        %v4544 = vld [vmem:[%s4540 + $0x18] sm:$0xff]
        %v4545 = vld [vmem:[%s4540 + $0x20] sm:$0xff]
        %v4546 = vld [vmem:[%s4540 + $0x28] sm:$0xff]
        %v4547 = vld [vmem:[%s4540 + $0x30] sm:$0xff]
        %v4548 = vld [vmem:[%s4540 + $0x38] sm:$0xff]
        %v4549 = vld [vmem:[%s4540 + $0x40] sm:$0xff]
        %v4550 = vld [vmem:[%s4540 + $0x48] sm:$0xff]
        %v4551 = vld [vmem:[%s4540 + $0x50] sm:$0xff]
        %v4552 = vld [vmem:[%s4540 + $0x58] sm:$0xff]
        %v4553 = vld [vmem:[%s4540 + $0x60] sm:$0xff]
        %v4554 = vld [vmem:[%s4540 + $0x68] sm:$0xff]
        %v4555 = vld [vmem:[%s4540 + $0x70] sm:$0xff]
        %v4556 = vld [vmem:[%s4540 + $0x78] sm:$0xff]
        %4557 = vmatprep.subr.mxu0 0.0
        %4558 = vmatpush1.msra.mxu0 %v4541
        %4559 = vmatprep.subr.mxu0 0.0
        %4560 = vmatpush1.msra.mxu0 %v4542
        %4561 = vmatprep.subr.mxu0 0.0
        %4562 = vmatpush1.msra.mxu0 %v4543
        %4563 = vmatprep.subr.mxu0 0.0
        %4564 = vmatpush1.msra.mxu0 %v4544
        %4565 = vmatprep.subr.mxu0 0.0
        %4566 = vmatpush1.msra.mxu0 %v4545
        %4567 = vmatprep.subr.mxu0 0.0
        %4568 = vmatpush1.msra.mxu0 %v4546
        %4569 = vmatprep.subr.mxu0 0.0
        %4570 = vmatpush1.msra.mxu0 %v4547
        %4571 = vmatprep.subr.mxu0 0.0
        %4572 = vmatpush1.msra.mxu0 %v4548
        %4573 = vmatprep.subr.mxu0 0.0
        %4574 = vmatpush1.msra.mxu0 %v4549
        %4575 = vmatprep.subr.mxu0 0.0
        %4576 = vmatpush1.msra.mxu0 %v4550
        %4577 = vmatprep.subr.mxu0 0.0
        %4578 = vmatpush1.msra.mxu0 %v4551
        %4579 = vmatprep.subr.mxu0 0.0
        %4580 = vmatpush1.msra.mxu0 %v4552
        %4581 = vmatprep.subr.mxu0 0.0
        %4582 = vmatpush1.msra.mxu0 %v4553
        %4583 = vmatprep.subr.mxu0 0.0
        %4584 = vmatpush1.msra.mxu0 %v4554
        %4585 = vmatprep.subr.mxu0 0.0
        %4586 = vmatpush1.msra.mxu0 %v4555
        %4587 = vmatprep.subr.mxu0 0.0
        %4588 = vmatpush1.msra.mxu0 %v4556
        %4589 = vmatprep.subr.mxu0 0.0
        %4590 = vmatpush1.msra.mxu0 0.0
        %4591 = vmatprep.subr.mxu0 0.0
        %4592 = vmatpush1.msra.mxu0 0.0
        %4593 = vmatprep.subr.mxu0 0.0
        %4594 = vmatpush1.msra.mxu0 0.0
        %4595 = vmatprep.subr.mxu0 0.0
        %4596 = vmatpush1.msra.mxu0 0.0
        %4597 = vmatprep.subr.mxu0 0.0
        %4598 = vmatpush1.msra.mxu0 0.0
        %4599 = vmatprep.subr.mxu0 0.0
        %4600 = vmatpush1.msra.mxu0 0.0
        %4601 = vmatprep.subr.mxu0 0.0
        %4602 = vmatpush1.msra.mxu0 0.0
        %4603 = vmatprep.subr.mxu0 0.0
        %4604 = vmatpush1.msra.mxu0 0.0
        %4605 = vmatprep.subr.mxu0 0.0
        %4606 = vmatpush1.msra.mxu0 0.0
        %4607 = vmatprep.subr.mxu0 0.0
        %4608 = vmatpush1.msra.mxu0 0.0
        %4609 = vmatprep.subr.mxu0 0.0
        %4610 = vmatpush1.msra.mxu0 0.0
        %4611 = vmatprep.subr.mxu0 0.0
        %4612 = vmatpush1.msra.mxu0 0.0
        %4613 = vmatprep.subr.mxu0 0.0
        %4614 = vmatpush1.msra.mxu0 0.0
        %4615 = vmatprep.subr.mxu0 0.0
        %4616 = vmatpush1.msra.mxu0 0.0
        %4617 = vmatprep.subr.mxu0 0.0
        %4618 = vmatpush1.msra.mxu0 0.0
        %4619 = vmatprep.subr.mxu0 0.0
        %4620 = vmatpush1.msra.mxu0 0.0
        %4621 = vmatprep.mubr.f32.mxu0 0.0
        %4622 = vmatmul.mubr.f32.gmra.mrb[0].mxu0 %v4539
        %v4623 = vpop.f32.mrb[0].mxu0
        %v4624 = vadd.f32 0.0, %v4623
        %v4625 = vpop.f32.mrb[0].mxu0
        %4626 = vdwg.mxu0
        %v4627 = vadd.f32 %v4421, %v4624
        %s4628 = scalar_lea.vmem %s13, 3
        %v4629 = vld [vmem:[%s4628] sm:$0x1]
        %v4631 = vlaneseq
        %v4632 = vshrl.u32 %v4631, 7
        %v4633 = vsub.s32 0, %v4632
        %v4634 = vrot.slane %v4629, %v4633
        %v4636 = vadd.f32 %v4627, %v4634
        %v4637 = vld [vmem:[%s14] sm:$0x1]
        %v4638 = vld [vmem:[%s15] sm:$0x1]
        %v4639 = vsel %vm666, %v4636, 0.0
        %4640 = vadd.xlane.f32.xlu0 %v4639
        %v4641 = vpop.xlane.xlu0 %4640
        %v4642 = vmul.f32 %v4641, %v670
        %v4643 = vsub.f32 %v4636, %v4642
        %v4644 = vmul.f32 %v4643, %v4643
        %v4645 = vsel %vm666, %v4644, 0.0
        %4646 = vadd.xlane.f32.xlu0 %v4645
        %v4647 = vpop.xlane.xlu0 %4646
        %v4648 = vmul.f32 %v4647, %v670
        %v4649 = vadd.f32 %v4648, 1e-05
        %v4650 = vrsqrt.pop %v4649
        %v4651 = vmul.f32 %v4643, %v4650
        %v4653 = vlaneseq
        %v4654 = vshrl.u32 %v4653, 7
        %v4655 = vsub.s32 0, %v4654
        %v4656 = vrot.slane %v4637, %v4655
        %v4658 = vmul.f32 %v4651, %v4656
        %v4660 = vlaneseq
        %v4661 = vshrl.u32 %v4660, 7
        %v4662 = vsub.s32 0, %v4661
        %v4663 = vrot.slane %v4638, %v4662
        %v4665 = vadd.f32 %v4658, %v4663
        %v4666 = vld [vmem:[%s16] sm:$0xff]
        %v4667 = vld [vmem:[%s16 + $0x8] sm:$0xff]
        %v4668 = vld [vmem:[%s16 + $0x10] sm:$0xff]
        %v4669 = vld [vmem:[%s16 + $0x18] sm:$0xff]
        %v4670 = vld [vmem:[%s17] sm:$0x1]
        %v4672 = vlaneseq
        %v4673 = vshrl.u32 %v4672, 7
        %v4674 = vsub.s32 0, %v4673
        %v4675 = vrot.slane %v4670, %v4674
        %v4678 = vsel %vm666, %v4665, 0
        %4680 = vmatprep.subr.mxu0 0.0
        %4681 = vmatpush1.msra.mxu0 %v4666
        %4682 = vmatprep.subr.mxu0 0.0
        %4683 = vmatpush1.msra.mxu0 %v4667
        %4684 = vmatprep.subr.mxu0 0.0
        %4685 = vmatpush1.msra.mxu0 %v4668
        %4686 = vmatprep.subr.mxu0 0.0
        %4687 = vmatpush1.msra.mxu0 %v4669
        %4688 = vmatprep.subr.mxu0 0.0
        %4689 = vmatpush1.msra.mxu0 0.0
        %4690 = vmatprep.subr.mxu0 0.0
        %4691 = vmatpush1.msra.mxu0 0.0
        %4692 = vmatprep.subr.mxu0 0.0
        %4693 = vmatpush1.msra.mxu0 0.0
        %4694 = vmatprep.subr.mxu0 0.0
        %4695 = vmatpush1.msra.mxu0 0.0
        %4696 = vmatprep.subr.mxu0 0.0
        %4697 = vmatpush1.msra.mxu0 0.0
        %4698 = vmatprep.subr.mxu0 0.0
        %4699 = vmatpush1.msra.mxu0 0.0
        %4700 = vmatprep.subr.mxu0 0.0
        %4701 = vmatpush1.msra.mxu0 0.0
        %4702 = vmatprep.subr.mxu0 0.0
        %4703 = vmatpush1.msra.mxu0 0.0
        %4704 = vmatprep.subr.mxu0 0.0
        %4705 = vmatpush1.msra.mxu0 0.0
        %4706 = vmatprep.subr.mxu0 0.0
        %4707 = vmatpush1.msra.mxu0 0.0
        %4708 = vmatprep.subr.mxu0 0.0
        %4709 = vmatpush1.msra.mxu0 0.0
        %4710 = vmatprep.subr.mxu0 0.0
        %4711 = vmatpush1.msra.mxu0 0.0
        %4712 = vmatprep.subr.mxu0 0.0
        %4713 = vmatpush1.msra.mxu0 0.0
        %4714 = vmatprep.subr.mxu0 0.0
        %4715 = vmatpush1.msra.mxu0 0.0
        %4716 = vmatprep.subr.mxu0 0.0
        %4717 = vmatpush1.msra.mxu0 0.0
        %4718 = vmatprep.subr.mxu0 0.0
        %4719 = vmatpush1.msra.mxu0 0.0
        %4720 = vmatprep.subr.mxu0 0.0
        %4721 = vmatpush1.msra.mxu0 0.0
        %4722 = vmatprep.subr.mxu0 0.0
        %4723 = vmatpush1.msra.mxu0 0.0
        %4724 = vmatprep.subr.mxu0 0.0
        %4725 = vmatpush1.msra.mxu0 0.0
        %4726 = vmatprep.subr.mxu0 0.0
        %4727 = vmatpush1.msra.mxu0 0.0
        %4728 = vmatprep.subr.mxu0 0.0
        %4729 = vmatpush1.msra.mxu0 0.0
        %4730 = vmatprep.subr.mxu0 0.0
        %4731 = vmatpush1.msra.mxu0 0.0
        %4732 = vmatprep.subr.mxu0 0.0
        %4733 = vmatpush1.msra.mxu0 0.0
        %4734 = vmatprep.subr.mxu0 0.0
        %4735 = vmatpush1.msra.mxu0 0.0
        %4736 = vmatprep.subr.mxu0 0.0
        %4737 = vmatpush1.msra.mxu0 0.0
        %4738 = vmatprep.subr.mxu0 0.0
        %4739 = vmatpush1.msra.mxu0 0.0
        %4740 = vmatprep.subr.mxu0 0.0
        %4741 = vmatpush1.msra.mxu0 0.0
        %4742 = vmatprep.subr.mxu0 0.0
        %4743 = vmatpush1.msra.mxu0 0.0
        %4744 = vmatprep.mubr.f32.mxu0 0.0
        %4745 = vmatmul.mubr.f32.gmra.mrb[0].mxu0 %v4678
        %v4746 = vpop.f32.mrb[0].mxu0
        %v4747 = vadd.f32 %v4675, %v4746
        %v4748 = vpop.f32.mrb[0].mxu0
        %4749 = vdwg.mxu0
        %4750 = vst [vmem:[%s566] sm:$0xff] %v4747
        %s4751 = sand.u32 %s423, 1
        %s4752 = scalar_lea.sflag [#allocation3], %s4751
        %s4753 = sand.u32 %s423, 1
        %s4754 = smul.addr %s4753, 8
        %s4755 = scalar_lea.vmem [#allocation2], %s4754
        // Predicated region
        $region93: #{small_gpt_forward.1} parent=91 // pred_check
          %p4756 = pneg %p433
        $region94: #{small_gpt_forward.1} parent=91 // pred_check_branch
          %4758 = sbr.rel (%p4756) target = $region96
        $region95: #{small_gpt_forward.1} parent=91 // pred_region
          %s4760 = ssub.s32 128, 128
          %4761 = vsyncadd %s4752, %s4760
          %s4762 = smul.addr %s32, 128
          %s4763 = scalar_lea.hbm %s18, %s4762
          %s4765 = sshll.u32 %s4755, 4
          %s4766 = int_to_ptr.vmem [resolvable:$true] %s4765
          %4768 = dma.vmem_to_hbm [thread:$0]  %s4766, 128, %s4763, %s4752
        $region96: #{small_gpt_forward.1} parent=91 // pred_fallthru
          _
      $region92: #{small_gpt_forward.1} parent=5 // pred_fallthru
        _
      %p4769 = scmp.le.s32.totalorder 2, %s27
      // Predicated region
      $region97: #{small_gpt_forward.1} parent=5 // pred_check
        %p4770 = pneg %p4769
      $region98: #{small_gpt_forward.1} parent=5 // pred_check_branch
        %4772 = sbr.rel (%p4770) target = $region100
      $region99: #{small_gpt_forward.1} parent=5 // pred_region
        %s4773 = ssub.s32 %s27, 2
        // Predicated region
        $region101: #{small_gpt_forward.1} parent=99 // pred_check
          %p4774 = pneg %p439
        $region102: #{small_gpt_forward.1} parent=99 // pred_check_branch
          %4776 = sbr.rel (%p4774) target = $region104
        $region103: #{small_gpt_forward.1} parent=99 // pred_region
          %s4777 = sand.u32 %s424, 1
          %s4778 = scalar_lea.sflag [#allocation3], %s4777
          %s4779 = sand.u32 %s424, 1
          %s4780 = smul.addr %s4779, 8
          %s4781 = scalar_lea.vmem [#allocation2], %s4780
          %4782 = dma.done %s4778, 128
        $region104: #{small_gpt_forward.1} parent=99 // pred_fallthru
          _
      $region100: #{small_gpt_forward.1} parent=5 // pred_fallthru
        _
    $region6: #{small_gpt_forward.1} parent=1 // loop_footer
      %s31 = sadd.s32 1, %s27
    $region7: #{small_gpt_forward.1} parent=1 // loop_footer_branch
      %26 = sbr.rel target = $region3
    $region8: #{small_gpt_forward.1} parent=1 // loop_exit
      _
    %4783 = vsyncpa [#allocation3], 1
    %s4784 = scalar_lea.sflag [#allocation3], 1
    %4785 = vsyncpa %s4784, 1

</llo_original>
